<compile_context>
chip_gen: v7x
topology: tpu7x:2x2x1
jax: 0.10.0
libtpu: 0.0.40
codegen_flags: <defaults>
</compile_context>

<pallas_src>
import functools

import jax
import jax.numpy as jnp
from jax.experimental import pallas as pl
from jax.experimental.pallas import tpu as pltpu

LEAKY_SLOPE = 0.2   # TODO(synk): verify ResidualBlock internals use slope 0.2 like forward()
BN_EPS = 1e-5
ACT_DTYPE = jnp.bfloat16   # inter-layer activations / matmul operands (f32 accumulation)


# ------------------------- generation-aware VMEM sizing -----------------------

@functools.lru_cache(maxsize=1)
def _vmem_budget():
    """(scoped vmem limit, per-grid-step operand budget), sized per generation:
    ~96 MiB / 24 MiB on v5e & v6e (128 MiB VMEM), ~48 MiB / 12 MiB on v7x."""
    cap = 64 * 1024 * 1024
    try:
        info = pltpu.get_tpu_info()
        cap = int(getattr(info, "vmem_capacity_bytes", cap)) or cap
    except Exception:
        pass
    limit = int(min(cap * 3 // 4, 100 * 1024 * 1024))
    return limit, limit // 4


def _pick_tb(n, per_item_bytes, budget_bytes):
    """Largest divisor of n fitting the per-step budget, preferring >= 2 grid
    steps so the DMA pipeline overlaps and v7x's two TensorCores both work."""
    per = max(int(per_item_bytes), 1)
    divs = [d for d in range(1, n + 1) if n % d == 0]
    fit = [d for d in divs if d * per <= budget_bytes] or [1]
    if n >= 2:
        pipelined = [d for d in fit if d <= n // 2]
        if pipelined:
            return max(pipelined)
    return max(fit)


# ------------------------------ shared epilogue -------------------------------

def _epilogue(y, act, attn_split, feat_c):
    """y: (M, Cout) float32 pre-activation.  attn_split packs
    [leaky(feat)*sigmoid(att) | sigmoid(att)] into ONE lane-contiguous output
    (matches forward(): sigmoid / leaky / multiply applied post-block)."""
    if attn_split:
        att = jax.nn.sigmoid(y[:, feat_c:feat_c + 1])
        feat = jnp.where(y > 0, y, LEAKY_SLOPE * y) * att
        col = jax.lax.broadcasted_iota(jnp.int32, y.shape, 1)
        return jnp.where(col < feat_c, feat, att)
    if act == "leaky":
        y = jnp.where(y > 0, y, LEAKY_SLOPE * y)
    return y


# ------------------------------ fused matmul kernel ---------------------------

def _fused_matmul_kernel(a_ref, w_ref, b_ref, *rest, has_residual, act,
                         attn_split, feat_c):
    y = jnp.dot(a_ref[...], w_ref[...], preferred_element_type=jnp.float32)
    y = y + b_ref[...]
    idx = 0
    if has_residual:
        y = y + rest[idx][...].astype(jnp.float32)
        idx += 1
    out_ref = rest[idx]
    out_ref[...] = _epilogue(y, act, attn_split, feat_c).astype(out_ref.dtype)


def fused_matmul(a, w, b, *, residual=None, act="none", attn_split=False,
                 feat_c=0, out_dtype=ACT_DTYPE):
    """out = epilogue(a @ w + b [+ residual]).  Single dot over concatenated K
    (used by the tiny-layer im2col path and the merged linear heads)."""
    M, K = a.shape
    N = w.shape[1]
    a = a.astype(ACT_DTYPE)
    w = w.astype(ACT_DTYPE)
    b = b.reshape(1, N).astype(jnp.float32)

    limit, step_budget = _vmem_budget()
    if M <= 1024:
        tm = M
    else:
        row_bytes = 2 * (K + N) + 8 * N
        tm = min(M // 2, max(512, step_budget // (2 * row_bytes)))
        tm = max(8, (tm // 8) * 8)
    grid = (pl.cdiv(M, tm),)

    operands = [a, w, b]
    in_specs = [pl.BlockSpec((tm, K), lambda i: (i, 0)),
                pl.BlockSpec((K, N), lambda i: (0, 0)),
                pl.BlockSpec((1, N), lambda i: (0, 0))]
    if residual is not None:          # only streamed when it actually exists
        operands.append(residual.astype(ACT_DTYPE))
        in_specs.append(pl.BlockSpec((tm, N), lambda i: (i, 0)))

    kernel = functools.partial(_fused_matmul_kernel,
                               has_residual=residual is not None,
                               act=act, attn_split=attn_split, feat_c=feat_c)
    return pl.pallas_call(
        kernel,
        out_shape=jax.ShapeDtypeStruct((M, N), out_dtype),
        grid=grid,
        in_specs=in_specs,
        out_specs=pl.BlockSpec((tm, N), lambda i: (i, 0)),
        compiler_params=pltpu.CompilerParams(
            dimension_semantics=("parallel",),
            vmem_limit_bytes=limit),
    )(*operands)


# ------------------------------ direct conv kernel ----------------------------

def _direct_conv_kernel(*args, n_phase, kh, stride, m, ho,
                        has_skip, has_residual, act, attn_split, feat_c):
    """kh dots of K = kw*Cin.  Input taps were dx-concatenated on the channel
    axis (and stride-2 row-phase split) in the wrapper, so in-kernel indexing
    only varies along H (untiled -> free address offset); W slices are full
    width, offset 0.  Optionally fuses a 1x1 skip conv, a residual add, the
    leaky activation and the sigmoid-attention split."""
    phases = args[:n_phase]
    w_ref = args[n_phase]          # (kh, kw*Cin, Cout), BN scale pre-folded
    b_ref = args[n_phase + 1]      # (1, Cout) f32, BN (+skip BN) bias folded
    idx = n_phase + 2
    skip_x_ref = skip_w_ref = res_ref = None
    if has_skip:
        skip_x_ref, skip_w_ref = args[idx], args[idx + 1]
        idx += 2
    if has_residual:
        res_ref = args[idx]
        idx += 1
    out_ref = args[idx]

    kw_cin = w_ref.shape[1]
    acc = None
    for dy in range(kh):
        p = dy % stride
        r = dy // stride
        tap = phases[p][:, pl.ds(r, ho), :, :]          # (tb, ho, wo, kw*Cin)
        a2 = tap.reshape(m, kw_cin)
        part = jnp.dot(a2, w_ref[dy], preferred_element_type=jnp.float32)
        acc = part if acc is None else acc + part
    if has_skip:
        acc = acc + jnp.dot(skip_x_ref[...], skip_w_ref[...],
                            preferred_element_type=jnp.float32)
    y = acc + b_ref[...]
    if has_residual:
        y = y + res_ref[...].astype(jnp.float32)
    out_ref[...] = _epilogue(y, act, attn_split, feat_c).astype(out_ref.dtype)


def _conv_direct(x, w_k, b, *, kh, kw, stride, skip_x, skip_w, residual, act,
                 attn_split, feat_c, out_dtype):
    N, H, W, Cin = x.shape
    Cout = w_k.shape[-1]
    pad = 1
    Hp = H + 2 * pad
    Ho = (Hp - kh) // stride + 1
    Wo = (W + 2 * pad - kw) // stride + 1
    Kw = kw * Cin

    xp = jnp.pad(x.astype(ACT_DTYPE), ((0, 0), (pad, pad), (pad, pad), (0, 0)))
    # dx-concat: channel layout [dx=0 | dx=1 | ...], each Cin wide, already
    # subsampled to the stride grid along W.
    cols = [jax.lax.slice(xp, (0, 0, dx, 0),
                          (N, Hp, dx + stride * (Wo - 1) + 1, Cin),
                          (1, 1, stride, 1)) for dx in range(kw)]
    xcat = jnp.concatenate(cols, axis=-1)               # (N, Hp, Wo, Kw)
    if stride == 1:
        phases = [xcat]
    else:
        phases = [xcat[:, p::stride] for p in range(stride)]
    n_phase = len(phases)

    w_r = w_k.reshape(kh, Kw, Cout).astype(ACT_DTYPE)   # tap dy -> (Kw, Cout)
    b2 = b.reshape(1, Cout).astype(jnp.float32)

    M = N * Ho * Wo
    Cs = 0 if skip_x is None else skip_x.shape[-1]
    per_frame = (2 * sum(p.shape[1] for p in phases) * Wo * Kw    # inputs (bf16)
                 + 2 * Ho * Wo * Cs                               # skip input
                 + (0 if residual is None else 2 * Ho * Wo * Cout)
                 + 4 * Ho * Wo * Cout                             # output
                 + 16 * Ho * Wo * Cout)                           # f32 acc/temps
    limit, step_budget = _vmem_budget()
    tb = _pick_tb(N, per_frame, step_budget // 2)       # /2: double buffering
    grid = (N // tb,)
    MB = tb * Ho * Wo                                   # Wo % 8 == 0 -> MB % 8 == 0

    operands = list(phases) + [w_r, b2]
    in_specs = ([pl.BlockSpec((tb, p.shape[1], Wo, Kw), lambda i: (i, 0, 0, 0))
                 for p in phases]
                + [pl.BlockSpec((kh, Kw, Cout), lambda i: (0, 0, 0)),
                   pl.BlockSpec((1, Cout), lambda i: (0, 0))])
    if skip_x is not None:
        operands += [skip_x.reshape(M, Cs).astype(ACT_DTYPE),
                     skip_w.astype(ACT_DTYPE)]
        in_specs += [pl.BlockSpec((MB, Cs), lambda i: (i, 0)),
                     pl.BlockSpec((Cs, Cout), lambda i: (0, 0))]
    if residual is not None:
        operands.append(residual.reshape(M, Cout).astype(ACT_DTYPE))
        in_specs.append(pl.BlockSpec((MB, Cout), lambda i: (i, 0)))

    kernel = functools.partial(
        _direct_conv_kernel, n_phase=n_phase, kh=kh, stride=stride,
        m=MB, ho=Ho, has_skip=skip_x is not None,
        has_residual=residual is not None, act=act,
        attn_split=attn_split, feat_c=feat_c)
    out2d = pl.pallas_call(
        kernel,
        out_shape=jax.ShapeDtypeStruct((M, Cout), out_dtype),
        grid=grid,
        in_specs=in_specs,
        out_specs=pl.BlockSpec((MB, Cout), lambda i: (i, 0)),
        compiler_params=pltpu.CompilerParams(
            dimension_semantics=("parallel",),
            vmem_limit_bytes=limit),
    )(*operands)
    return out2d.reshape(N, Ho, Wo, Cout)


# ------------------------------ im2col path (tiny layers) ---------------------

def _im2col(x, kh, kw, stride):
    N, H, W, C = x.shape
    pad = 1
    Hp, Wp = H + 2 * pad, W + 2 * pad
    Ho = (Hp - kh) // stride + 1
    Wo = (Wp - kw) // stride + 1
    xp = jnp.pad(x, ((0, 0), (pad, pad), (pad, pad), (0, 0)))
    cols = []
    for dy in range(kh):
        for dx in range(kw):
            patch = jax.lax.slice(
                xp, (0, dy, dx, 0),
                (N, dy + stride * (Ho - 1) + 1, dx + stride * (Wo - 1) + 1, C),
                (1, stride, stride, 1))
            cols.append(patch)
    cols = jnp.concatenate(cols, axis=-1)               # (N, Ho, Wo, kh*kw*C)
    return cols.reshape(N * Ho * Wo, kh * kw * C), (N, Ho, Wo)


def _conv_im2col(x, w_k, b, *, kh, kw, stride, skip_x, skip_w, residual, act,
                 attn_split, feat_c, out_dtype):
    Cin = x.shape[-1]
    Cout = w_k.shape[-1]
    a, (N, Ho, Wo) = _im2col(x.astype(ACT_DTYPE), kh, kw, stride)
    wflat = w_k.reshape(kh * kw * Cin, Cout).astype(ACT_DTYPE)
    if skip_x is not None:       # fuse the 1x1 skip conv along K
        a = jnp.concatenate(
            [a, skip_x.reshape(N * Ho * Wo, -1).astype(ACT_DTYPE)], axis=1)
        wflat = jnp.concatenate([wflat, skip_w.astype(ACT_DTYPE)], axis=0)
    res = None if residual is None else residual.reshape(N * Ho * Wo, Cout)
    out2d = fused_matmul(a, wflat, b, residual=res, act=act,
                         attn_split=attn_split, feat_c=feat_c,
                         out_dtype=out_dtype)
    return out2d.reshape(N, Ho, Wo, Cout)


# ------------------------------ conv wrapper ----------------------------------

def conv_bn(x, w_hwio, bn_scale, bn_bias, *, stride=1, act="none",
            skip_x=None, skip_w=None, skip_scale=None, skip_bias=None,
            residual=None, attn_split=False, out_dtype=ACT_DTYPE):
    """k x k conv (pad=1), eval-mode BN folded into weights/bias, optional
    fused 1x1 skip conv (own folded BN), optional residual add, leaky /
    attention-split epilogue.  x is NHWC."""
    kh, kw, _, Cout = w_hwio.shape
    W = x.shape[2]
    Wo = (W + 2 - kw) // stride + 1
    feat_c = Cout - 1 if attn_split else 0
    if attn_split:
        out_dtype = jnp.float32     # keep attention map in f32

    wf = w_hwio * bn_scale[None, None, None, :]
    b = bn_bias.astype(jnp.float32)
    skip_wf = None
    if skip_x is not None:
        skip_wf = skip_w * skip_scale[None, :]
        b = b + skip_bias.astype(jnp.float32)

    # Direct path whenever the output width retiles cleanly (all big early
    # layers); tiny tail layers use the single-big-K im2col matmul.
    direct_ok = (Wo % 8 == 0) and stride in (1, 2)
    fn = _conv_direct if direct_ok else _conv_im2col
    out = fn(x, wf, b, kh=kh, kw=kw, stride=stride, skip_x=skip_x,
             skip_w=skip_wf, residual=residual, act=act,
             attn_split=attn_split, feat_c=feat_c, out_dtype=out_dtype)
    if attn_split:
        return out[..., :feat_c], out[..., feat_c:]
    return out


def _pool_fused_conv1_weight(w3):
    """conv3x3/s1 followed by 2x2 avg-pool == conv4x4/s2 with averaged
    shifted kernels; build that 4x4 weight."""
    kh, kw, cin, cout = w3.shape
    w4 = jnp.zeros((kh + 1, kw + 1, cin, cout), w3.dtype)
    for a in (0, 1):
        for c in (0, 1):
            w4 = w4.at[a:a + kh, c:c + kw].add(w3)
    return w4 * 0.25


def residual_block(x, p, *, stride, drop_final_activation=False, attn_split=False):
    h = conv_bn(x, p["c1_w"], p["bn1_scale"], p["bn1_bias"],
                stride=stride, act="leaky")
    if "skip_w" in p:
        skip_x = x if stride == 1 else x[:, ::stride, ::stride, :]
        kwargs = dict(skip_x=skip_x, skip_w=p["skip_w"],
                      skip_scale=p["skip_bn_scale"], skip_bias=p["skip_bn_bias"])
    else:
        kwargs = dict(residual=x)
    act = "none" if drop_final_activation else "leaky"
    return conv_bn(h, p["c2_w"], p["bn2_scale"], p["bn2_bias"],
                   stride=1, act=act, attn_split=attn_split, **kwargs)


# ------------------------------ roi_pool (plain JAX) --------------------------
# TODO(synk): for production-size images move this into a Pallas
# PrefetchScalarGridSpec kernel (boxes as scalar prefetch, per-ROI DMA); the
# bin boundaries are data-dependent gathers so it stays in JAX here, but the
# masked max now loops over the (small, static) pooled dims instead of
# materializing an (N,C,H,PW,W) tensor.

def roi_pool_nchw(x, boxes, output_size):
    """torchvision.ops.roi_pool semantics, spatial_scale=1, box i <- image i."""
    N, C, H, W = x.shape
    PH, PW = output_size
    x1, y1, x2, y2 = (boxes[:, i] for i in range(4))
    rnd = lambda v: jnp.floor(v + 0.5)   # round half away from zero (coords >= 0)
    rsw, rsh, rew, reh = rnd(x1), rnd(y1), rnd(x2), rnd(y2)
    roi_w = jnp.maximum(rew - rsw + 1.0, 1.0)
    roi_h = jnp.maximum(reh - rsh + 1.0, 1.0)
    bin_h = roi_h / PH
    bin_w = roi_w / PW
    phi = jnp.arange(PH, dtype=jnp.float32)
    pwi = jnp.arange(PW, dtype=jnp.float32)
    hstart = jnp.clip(jnp.floor(phi[None, :] * bin_h[:, None]) + rsh[:, None], 0, H)
    hend = jnp.clip(jnp.ceil((phi[None, :] + 1.0) * bin_h[:, None]) + rsh[:, None], 0, H)
    wstart = jnp.clip(jnp.floor(pwi[None, :] * bin_w[:, None]) + rsw[:, None], 0, W)
    wend = jnp.clip(jnp.ceil((pwi[None, :] + 1.0) * bin_w[:, None]) + rsw[:, None], 0, W)
    hh = jnp.arange(H, dtype=jnp.float32)
    ww = jnp.arange(W, dtype=jnp.float32)
    neg_inf = jnp.float32(-jnp.inf)

    col_maxes = []
    for pw in range(PW):
        m = (ww[None, :] >= wstart[:, pw:pw + 1]) & (ww[None, :] < wend[:, pw:pw + 1])
        v = jnp.where(m[:, None, None, :], x, neg_inf)          # (N,C,H,W)
        col_maxes.append(v.max(axis=-1))                        # (N,C,H)
    colmax = jnp.stack(col_maxes, axis=-1)                      # (N,C,H,PW)

    row_outs = []
    for ph in range(PH):
        m = (hh[None, :] >= hstart[:, ph:ph + 1]) & (hh[None, :] < hend[:, ph:ph + 1])
        v = jnp.where(m[:, None, :, None], colmax, neg_inf)     # (N,C,H,PW)
        row_outs.append(v.max(axis=2))                          # (N,C,PW)
    pooled = jnp.stack(row_outs, axis=2)                        # (N,C,PH,PW)

    empty = (hend <= hstart)[:, :, None] | (wend <= wstart)[:, None, :]
    return jnp.where(empty[:, None], 0.0, pooled)


# ------------------------------ parameters ------------------------------------

def make_params(key, style_features, deformation_features):
    keys = iter(jax.random.split(key, 256))

    def conv_w(cin, cout):
        return jax.random.normal(next(keys), (3, 3, cin, cout), jnp.float32) * 0.1

    def bn(c):
        gamma = jax.random.uniform(next(keys), (c,), minval=0.5, maxval=1.5)
        beta = jax.random.normal(next(keys), (c,)) * 0.1
        mean = jax.random.normal(next(keys), (c,)) * 0.1
        var = jax.random.uniform(next(keys), (c,), minval=0.5, maxval=1.5)
        scale = gamma / jnp.sqrt(var + BN_EPS)
        bias = beta - mean * scale
        return scale, bias

    def res_block(cin, cout, downsample):
        p = {"c1_w": conv_w(cin, cout)}
        p["bn1_scale"], p["bn1_bias"] = bn(cout)
        p["c2_w"] = conv_w(cout, cout)
        p["bn2_scale"], p["bn2_bias"] = bn(cout)
        if downsample != 1 or cin != cout:
            p["skip_w"] = jax.random.normal(next(keys), (cin, cout), jnp.float32) * 0.1
            p["skip_bn_scale"], p["skip_bn_bias"] = bn(cout)
        return p

    params = {"conv1_w": conv_w(3 + 6, 16)}
    params["bn1_scale"], params["bn1_bias"] = bn(16)
    params["init_block"] = res_block(16, 16 + 1, 1)
    params["fb0"] = res_block(16, 32, 2)
    params["fb1"] = res_block(32, 32, 1)
    params["fb2"] = res_block(32, 64, 2)
    params["fb3"] = res_block(64, 64, 1)
    params["style_w"] = jax.random.normal(next(keys), (64, style_features)) * 0.1
    params["style_b"] = jax.random.normal(next(keys), (style_features,)) * 0.1
    params["deform_w"] = jax.random.normal(next(keys), (64, deformation_features)) * 0.1
    params["deform_b"] = jax.random.normal(next(keys), (deformation_features,)) * 0.1
    return params


# ------------------------------ forward pass ----------------------------------

def object_encoder_v4_forward(params, observations, bounding_boxes,
                              camera_rotations, camera_translations,
                              global_frame_indexes, video_frame_indexes,
                              video_indexes, *, input_size, expansion_rows,
                              expansion_cols, style_features,
                              deformation_features):
    del global_frame_indexes, video_frame_indexes, video_indexes  # unused (as in torch)

    # Only the first camera.
    observations = observations[..., :1, :, :, :]
    bounding_boxes = bounding_boxes[..., :1, :]
    camera_rotations = camera_rotations[..., :1, :]
    camera_translations = camera_translations[..., :1, :]

    # expand_bounding_boxes (reproduces the original asymmetric row expansion).
    dims = bounding_boxes[..., 2:] - bounding_boxes[..., :2]
    bb = bounding_boxes
    bb = bb.at[..., 0].add(-dims[..., 0] * expansion_cols)
    bb = bb.at[..., 2].add(dims[..., 0] * expansion_cols)
    bb = bb.at[..., 1].add(-dims[..., 1] * expansion_rows)
    bb = jnp.clip(bb, 0.0, 1.0)

    H = observations.shape[-2]
    W = observations.shape[-1]
    bb = bb * jnp.array([W, H, W, H], jnp.float32)

    lead_dims = observations.shape[:-3]           # (..., cameras_count)
    cameras_count = lead_dims[-1]
    flat_obs = observations.reshape((-1,) + observations.shape[-3:])   # (F,3,H,W)
    flat_bb = bb.reshape(-1, 4)
    flat_rot = camera_rotations.reshape(-1, 3)
    flat_tr = camera_translations.reshape(-1, 3)
    F_ = flat_obs.shape[0]
    ph, pw = input_size

    crops = roi_pool_nchw(flat_obs, flat_bb, input_size)               # (F,3,ph,pw)
    cropped_observations = crops.reshape(lead_dims + (3, ph, pw))

    rot_maps = jnp.broadcast_to(flat_rot[:, :, None, None], (F_, 3, ph, pw))
    tr_maps = jnp.broadcast_to(flat_tr[:, :, None, None], (F_, 3, ph, pw))
    flat_inputs = jnp.concatenate([crops, rot_maps, tr_maps], axis=1)  # (F,9,ph,pw)

    x = jnp.transpose(flat_inputs, (0, 2, 3, 1))                       # NHWC

    # conv1 + 2x2 avg-pool + BN + leaky fused into ONE Pallas call
    # (conv3x3/s1 then avgpool2 == conv4x4/s2 with averaged shifted weights;
    #  BN scale folded into weights, bias + leaky in the epilogue).
    w4 = _pool_fused_conv1_weight(params["conv1_w"])
    x = conv_bn(x, w4, params["bn1_scale"], params["bn1_bias"],
                stride=2, act="leaky")                                 # (F,ph/2,pw/2,16)
    H2, W2 = x.shape[1], x.shape[2]

    # initial backbone: ResidualBlock(16 -> 17, drop_final_activation=True),
    # sigmoid-attention split fused into its second conv's epilogue
    # (single combined lane-contiguous output, split outside).
    feat, att = residual_block(x, params["init_block"], stride=1,
                               drop_final_activation=True, attn_split=True)

    folded_attention = jnp.transpose(att, (0, 3, 1, 2)).reshape(
        lead_dims + (1, H2, W2)).astype(jnp.float32)

    batch_prod = 1
    for d in lead_dims[:-1]:
        batch_prod *= d
    common = feat.astype(jnp.float32).reshape(batch_prod, cameras_count, H2, W2, 16)
    common = (common.sum(axis=1) / cameras_count).astype(ACT_DTYPE)    # (B,H2,W2,16)

    x = residual_block(common, params["fb0"], stride=2)
    x = residual_block(x, params["fb1"], stride=1)
    x = residual_block(x, params["fb2"], stride=2)
    x = residual_block(x, params["fb3"], stride=1)

    pooled = x.astype(jnp.float32).mean(axis=(1, 2))                   # (B, 64)

    # merged style + deformation heads: a single matmul, sliced afterwards.
    head_w = jnp.concatenate([params["style_w"], params["deform_w"]], axis=1)
    head_b = jnp.concatenate([params["style_b"], params["deform_b"]], axis=0)
    heads = fused_matmul(pooled, head_w, head_b, act="none", out_dtype=jnp.float32)
    style = heads[:, :style_features].reshape(lead_dims[:-1] + (style_features,))
    deformation = heads[:, style_features:].reshape(
        lead_dims[:-1] + (deformation_features,))

    return style, deformation, folded_attention, cropped_observations


# ------------------------------ main -------------------------------------------

if __name__ == "__main__":
    key = jax.random.PRNGKey(0)
    kp, ko, kb, kb2, kr, kt = jax.random.split(key, 6)

    style_features = 8
    deformation_features = 4
    input_size = (16, 16)
    batch, cameras = 2, 2
    H = W = 16

    params = make_params(kp, style_features, deformation_features)

    observations = jax.random.uniform(ko, (batch, cameras, 3, H, W), jnp.float32)
    tl = jax.random.uniform(kb, (batch, cameras, 2), minval=0.05, maxval=0.35)
    br = tl + jax.random.uniform(kb2, (batch, cameras, 2), minval=0.3, maxval=0.55)
    bounding_boxes = jnp.concatenate([tl, br], axis=-1)     # left, top, right, bottom
    camera_rotations = jax.random.normal(kr, (batch, cameras, 3), jnp.float32)
    camera_translations = jax.random.normal(kt, (batch, cameras, 3), jnp.float32)
    global_frame_indexes = jnp.arange(batch, dtype=jnp.int32)
    video_frame_indexes = jnp.arange(batch, dtype=jnp.int32)
    video_indexes = jnp.zeros((batch,), jnp.int32)

    fwd = jax.jit(functools.partial(
        object_encoder_v4_forward,
        input_size=input_size, expansion_rows=0.1, expansion_cols=0.1,
        style_features=style_features, deformation_features=deformation_features))

    style, deformation, folded_attention, cropped = fwd(
        params, observations, bounding_boxes, camera_rotations,
        camera_translations, global_frame_indexes, video_frame_indexes,
        video_indexes)
    jax.block_until_ready((style, deformation, folded_attention, cropped))

    assert style.shape == (batch, style_features), style.shape
    assert deformation.shape == (batch, deformation_features), deformation.shape
    assert folded_attention.shape == (batch, 1, 1, input_size[0] // 2, input_size[1] // 2), \
        folded_attention.shape
    assert cropped.shape == (batch, 1, 3, input_size[0], input_size[1]), cropped.shape
    print("KERNEL_OK")
</pallas_src>

<mosaic_0001>
module attributes {stable_mosaic.version = 11 : i64} {
  func.func @_direct_conv_kernel(%arg0: i32, %arg1: memref<1x9x8x36xbf16, #tpu.memory_space<vmem>>, %arg2: memref<1x9x8x36xbf16, #tpu.memory_space<vmem>>, %arg3: memref<4x36x16xbf16, #tpu.memory_space<vmem>>, %arg4: memref<1x16xf32, #tpu.memory_space<vmem>>, %arg5: memref<64x16xbf16, #tpu.memory_space<vmem>>) attributes {dimension_semantics = [#tpu.dimension_semantics<parallel>], iteration_bounds = array<i64: 2>, scalar_prefetch = 0 : i64, scratch_operands = 0 : i64, tpu.core_type = #tpu.core_type<tc>, window_params = [{transform_indices = @transform_0, window_bounds = array<i64: 1, 9, 8, 36>}, {transform_indices = @transform_1, window_bounds = array<i64: 1, 9, 8, 36>}, {pipeline_mode = #tpu.pipeline_mode<synchronous>, transform_indices = @transform_2, window_bounds = array<i64: 4, 36, 16>}, {pipeline_mode = #tpu.pipeline_mode<synchronous>, transform_indices = @transform_3, window_bounds = array<i64: 1, 16>}, {transform_indices = @transform_4, window_bounds = array<i64: 64, 16>}]} {
    %c0 = arith.constant 0 : index
    %c0_0 = arith.constant 0 : index
    %c0_1 = arith.constant 0 : index
    %c0_2 = arith.constant 0 : index
    %0 = vector.load %arg1[%c0, %c0_0, %c0_1, %c0_2] : memref<1x9x8x36xbf16, #tpu.memory_space<vmem>>, vector<1x8x8x36xbf16>
    %1 = vector.shape_cast %0 : vector<1x8x8x36xbf16> to vector<64x36xbf16>
    %c0_3 = arith.constant 0 : index
    %c0_4 = arith.constant 0 : index
    %c0_5 = arith.constant 0 : index
    %2 = vector.load %arg3[%c0_3, %c0_4, %c0_5] : memref<4x36x16xbf16, #tpu.memory_space<vmem>>, vector<1x36x16xbf16>
    %3 = vector.shape_cast %2 : vector<1x36x16xbf16> to vector<36x16xbf16>
    %cst = arith.constant dense<0.000000e+00> : vector<64x16xf32>
    %4 = tpu.matmul %1, %3, %cst {dimension_numbers = #tpu.dot_dimension_numbers<[1], [0], [0], [1], [0, 0, 1, 1], [], []>} : vector<64x36xbf16>, vector<36x16xbf16>, vector<64x16xf32> -> vector<64x16xf32>
    %c0_6 = arith.constant 0 : index
    %c0_7 = arith.constant 0 : index
    %c0_8 = arith.constant 0 : index
    %c0_9 = arith.constant 0 : index
    %5 = vector.load %arg2[%c0_6, %c0_7, %c0_8, %c0_9] : memref<1x9x8x36xbf16, #tpu.memory_space<vmem>>, vector<1x8x8x36xbf16>
    %6 = vector.shape_cast %5 : vector<1x8x8x36xbf16> to vector<64x36xbf16>
    %c1 = arith.constant 1 : index
    %c0_10 = arith.constant 0 : index
    %c0_11 = arith.constant 0 : index
    %7 = vector.load %arg3[%c1, %c0_10, %c0_11] : memref<4x36x16xbf16, #tpu.memory_space<vmem>>, vector<1x36x16xbf16>
    %8 = vector.shape_cast %7 : vector<1x36x16xbf16> to vector<36x16xbf16>
    %cst_12 = arith.constant dense<0.000000e+00> : vector<64x16xf32>
    %9 = tpu.matmul %6, %8, %cst_12 {dimension_numbers = #tpu.dot_dimension_numbers<[1], [0], [0], [1], [0, 0, 1, 1], [], []>} : vector<64x36xbf16>, vector<36x16xbf16>, vector<64x16xf32> -> vector<64x16xf32>
    %10 = arith.addf %4, %9 : vector<64x16xf32>
    %c0_13 = arith.constant 0 : index
    %c1_14 = arith.constant 1 : index
    %c0_15 = arith.constant 0 : index
    %c0_16 = arith.constant 0 : index
    %11 = vector.load %arg1[%c0_13, %c1_14, %c0_15, %c0_16] : memref<1x9x8x36xbf16, #tpu.memory_space<vmem>>, vector<1x8x8x36xbf16>
    %12 = vector.shape_cast %11 : vector<1x8x8x36xbf16> to vector<64x36xbf16>
    %c2 = arith.constant 2 : index
    %c0_17 = arith.constant 0 : index
    %c0_18 = arith.constant 0 : index
    %13 = vector.load %arg3[%c2, %c0_17, %c0_18] : memref<4x36x16xbf16, #tpu.memory_space<vmem>>, vector<1x36x16xbf16>
    %14 = vector.shape_cast %13 : vector<1x36x16xbf16> to vector<36x16xbf16>
    %cst_19 = arith.constant dense<0.000000e+00> : vector<64x16xf32>
    %15 = tpu.matmul %12, %14, %cst_19 {dimension_numbers = #tpu.dot_dimension_numbers<[1], [0], [0], [1], [0, 0, 1, 1], [], []>} : vector<64x36xbf16>, vector<36x16xbf16>, vector<64x16xf32> -> vector<64x16xf32>
    %16 = arith.addf %10, %15 : vector<64x16xf32>
    %c0_20 = arith.constant 0 : index
    %c1_21 = arith.constant 1 : index
    %c0_22 = arith.constant 0 : index
    %c0_23 = arith.constant 0 : index
    %17 = vector.load %arg2[%c0_20, %c1_21, %c0_22, %c0_23] : memref<1x9x8x36xbf16, #tpu.memory_space<vmem>>, vector<1x8x8x36xbf16>
    %18 = vector.shape_cast %17 : vector<1x8x8x36xbf16> to vector<64x36xbf16>
    %c3 = arith.constant 3 : index
    %c0_24 = arith.constant 0 : index
    %c0_25 = arith.constant 0 : index
    %19 = vector.load %arg3[%c3, %c0_24, %c0_25] : memref<4x36x16xbf16, #tpu.memory_space<vmem>>, vector<1x36x16xbf16>
    %20 = vector.shape_cast %19 : vector<1x36x16xbf16> to vector<36x16xbf16>
    %cst_26 = arith.constant dense<0.000000e+00> : vector<64x16xf32>
    %21 = tpu.matmul %18, %20, %cst_26 {dimension_numbers = #tpu.dot_dimension_numbers<[1], [0], [0], [1], [0, 0, 1, 1], [], []>} : vector<64x36xbf16>, vector<36x16xbf16>, vector<64x16xf32> -> vector<64x16xf32>
    %22 = arith.addf %16, %21 : vector<64x16xf32>
    %c0_27 = arith.constant 0 : index
    %c0_28 = arith.constant 0 : index
    %23 = vector.load %arg4[%c0_27, %c0_28] : memref<1x16xf32, #tpu.memory_space<vmem>>, vector<1x16xf32>
    %24 = vector.broadcast %23 : vector<1x16xf32> to vector<64x16xf32>
    %25 = arith.addf %22, %24 : vector<64x16xf32>
    %cst_29 = arith.constant 0.000000e+00 : f32
    %26 = vector.broadcast %cst_29 : f32 to vector<64x16xf32>
    %27 = arith.cmpf ogt, %25, %26 : vector<64x16xf32>
    %cst_30 = arith.constant 2.000000e-01 : f32
    %28 = vector.broadcast %cst_30 : f32 to vector<64x16xf32>
    %29 = arith.mulf %28, %25 : vector<64x16xf32>
    %30 = arith.select %27, %25, %29 : vector<64x16xi1>, vector<64x16xf32>
    %31 = arith.truncf %30 : vector<64x16xf32> to vector<64x16xbf16>
    %c0_31 = arith.constant 0 : index
    %c0_32 = arith.constant 0 : index
    %32 = vector.load %arg5[%c0_31, %c0_32] : memref<64x16xbf16, #tpu.memory_space<vmem>>, vector<64x16xbf16>
    tpu.vector_store %arg5[%c0_31, %c0_32], %31 {strides = array<i32>} : memref<64x16xbf16, #tpu.memory_space<vmem>>, vector<64x16xbf16>,
    return
  }
  func.func @transform_0(%arg0: i32) -> (i32, i32, i32, i32) {
    %c0_i32 = arith.constant 0 : i32
    %c0_i32_0 = arith.constant 0 : i32
    %c0_i32_1 = arith.constant 0 : i32
    %c0_i32_2 = arith.constant 0 : i32
    return %arg0, %c0_i32, %c0_i32_0, %c0_i32_1 : i32, i32, i32, i32
  }
  func.func @transform_1(%arg0: i32) -> (i32, i32, i32, i32) {
    %c0_i32 = arith.constant 0 : i32
    %c0_i32_0 = arith.constant 0 : i32
    %c0_i32_1 = arith.constant 0 : i32
    %c0_i32_2 = arith.constant 0 : i32
    return %arg0, %c0_i32, %c0_i32_0, %c0_i32_1 : i32, i32, i32, i32
  }
  func.func @transform_2(%arg0: i32) -> (i32, i32, i32) {
    %c0_i32 = arith.constant 0 : i32
    %c0_i32_0 = arith.constant 0 : i32
    %c0_i32_1 = arith.constant 0 : i32
    %c0_i32_2 = arith.constant 0 : i32
    return %c0_i32, %c0_i32_0, %c0_i32_1 : i32, i32, i32
  }
  func.func @transform_3(%arg0: i32) -> (i32, i32) {
    %c0_i32 = arith.constant 0 : i32
    %c0_i32_0 = arith.constant 0 : i32
    %c0_i32_1 = arith.constant 0 : i32
    return %c0_i32, %c0_i32_0 : i32, i32
  }
  func.func @transform_4(%arg0: i32) -> (i32, i32) {
    %c0_i32 = arith.constant 0 : i32
    %c0_i32_0 = arith.constant 0 : i32
    return %arg0, %c0_i32 : i32, i32
  }
}

module attributes {stable_mosaic.version = 11 : i64} {
  func.func @_direct_conv_kernel(%arg0: i32, %arg1: memref<1x10x8x48xbf16, #tpu.memory_space<vmem>>, %arg2: memref<3x48x17xbf16, #tpu.memory_space<vmem>>, %arg3: memref<1x17xf32, #tpu.memory_space<vmem>>, %arg4: memref<64x17xbf16, #tpu.memory_space<vmem>>) attributes {dimension_semantics = [#tpu.dimension_semantics<parallel>], iteration_bounds = array<i64: 2>, scalar_prefetch = 0 : i64, scratch_operands = 0 : i64, tpu.core_type = #tpu.core_type<tc>, window_params = [{transform_indices = @transform_0, window_bounds = array<i64: 1, 10, 8, 48>}, {pipeline_mode = #tpu.pipeline_mode<synchronous>, transform_indices = @transform_1, window_bounds = array<i64: 3, 48, 17>}, {pipeline_mode = #tpu.pipeline_mode<synchronous>, transform_indices = @transform_2, window_bounds = array<i64: 1, 17>}, {transform_indices = @transform_3, window_bounds = array<i64: 64, 17>}]} {
    %c0 = arith.constant 0 : index
    %c0_0 = arith.constant 0 : index
    %c0_1 = arith.constant 0 : index
    %c0_2 = arith.constant 0 : index
    %0 = vector.load %arg1[%c0, %c0_0, %c0_1, %c0_2] : memref<1x10x8x48xbf16, #tpu.memory_space<vmem>>, vector<1x8x8x48xbf16>
    %1 = vector.shape_cast %0 : vector<1x8x8x48xbf16> to vector<64x48xbf16>
    %c0_3 = arith.constant 0 : index
    %c0_4 = arith.constant 0 : index
    %c0_5 = arith.constant 0 : index
    %2 = vector.load %arg2[%c0_3, %c0_4, %c0_5] : memref<3x48x17xbf16, #tpu.memory_space<vmem>>, vector<1x48x17xbf16>
    %3 = vector.shape_cast %2 : vector<1x48x17xbf16> to vector<48x17xbf16>
    %cst = arith.constant dense<0.000000e+00> : vector<64x17xf32>
    %4 = tpu.matmul %1, %3, %cst {dimension_numbers = #tpu.dot_dimension_numbers<[1], [0], [0], [1], [0, 0, 1, 1], [], []>} : vector<64x48xbf16>, vector<48x17xbf16>, vector<64x17xf32> -> vector<64x17xf32>
    %c0_6 = arith.constant 0 : index
    %c1 = arith.constant 1 : index
    %c0_7 = arith.constant 0 : index
    %c0_8 = arith.constant 0 : index
    %5 = vector.load %arg1[%c0_6, %c1, %c0_7, %c0_8] : memref<1x10x8x48xbf16, #tpu.memory_space<vmem>>, vector<1x8x8x48xbf16>
    %6 = vector.shape_cast %5 : vector<1x8x8x48xbf16> to vector<64x48xbf16>
    %c1_9 = arith.constant 1 : index
    %c0_10 = arith.constant 0 : index
    %c0_11 = arith.constant 0 : index
    %7 = vector.load %arg2[%c1_9, %c0_10, %c0_11] : memref<3x48x17xbf16, #tpu.memory_space<vmem>>, vector<1x48x17xbf16>
    %8 = vector.shape_cast %7 : vector<1x48x17xbf16> to vector<48x17xbf16>
    %cst_12 = arith.constant dense<0.000000e+00> : vector<64x17xf32>
    %9 = tpu.matmul %6, %8, %cst_12 {dimension_numbers = #tpu.dot_dimension_numbers<[1], [0], [0], [1], [0, 0, 1, 1], [], []>} : vector<64x48xbf16>, vector<48x17xbf16>, vector<64x17xf32> -> vector<64x17xf32>
    %10 = arith.addf %4, %9 : vector<64x17xf32>
    %c0_13 = arith.constant 0 : index
    %c2 = arith.constant 2 : index
    %c0_14 = arith.constant 0 : index
    %c0_15 = arith.constant 0 : index
    %11 = vector.load %arg1[%c0_13, %c2, %c0_14, %c0_15] : memref<1x10x8x48xbf16, #tpu.memory_space<vmem>>, vector<1x8x8x48xbf16>
    %12 = vector.shape_cast %11 : vector<1x8x8x48xbf16> to vector<64x48xbf16>
    %c2_16 = arith.constant 2 : index
    %c0_17 = arith.constant 0 : index
    %c0_18 = arith.constant 0 : index
    %13 = vector.load %arg2[%c2_16, %c0_17, %c0_18] : memref<3x48x17xbf16, #tpu.memory_space<vmem>>, vector<1x48x17xbf16>
    %14 = vector.shape_cast %13 : vector<1x48x17xbf16> to vector<48x17xbf16>
    %cst_19 = arith.constant dense<0.000000e+00> : vector<64x17xf32>
    %15 = tpu.matmul %12, %14, %cst_19 {dimension_numbers = #tpu.dot_dimension_numbers<[1], [0], [0], [1], [0, 0, 1, 1], [], []>} : vector<64x48xbf16>, vector<48x17xbf16>, vector<64x17xf32> -> vector<64x17xf32>
    %16 = arith.addf %10, %15 : vector<64x17xf32>
    %c0_20 = arith.constant 0 : index
    %c0_21 = arith.constant 0 : index
    %17 = vector.load %arg3[%c0_20, %c0_21] : memref<1x17xf32, #tpu.memory_space<vmem>>, vector<1x17xf32>
    %18 = vector.broadcast %17 : vector<1x17xf32> to vector<64x17xf32>
    %19 = arith.addf %16, %18 : vector<64x17xf32>
    %cst_22 = arith.constant 0.000000e+00 : f32
    %20 = vector.broadcast %cst_22 : f32 to vector<64x17xf32>
    %21 = arith.cmpf ogt, %19, %20 : vector<64x17xf32>
    %cst_23 = arith.constant 2.000000e-01 : f32
    %22 = vector.broadcast %cst_23 : f32 to vector<64x17xf32>
    %23 = arith.mulf %22, %19 : vector<64x17xf32>
    %24 = arith.select %21, %19, %23 : vector<64x17xi1>, vector<64x17xf32>
    %25 = arith.truncf %24 : vector<64x17xf32> to vector<64x17xbf16>
    %c0_24 = arith.constant 0 : index
    %c0_25 = arith.constant 0 : index
    %26 = vector.load %arg4[%c0_24, %c0_25] : memref<64x17xbf16, #tpu.memory_space<vmem>>, vector<64x17xbf16>
    tpu.vector_store %arg4[%c0_24, %c0_25], %25 {strides = array<i32>} : memref<64x17xbf16, #tpu.memory_space<vmem>>, vector<64x17xbf16>,
    return
  }
  func.func @transform_0(%arg0: i32) -> (i32, i32, i32, i32) {
    %c0_i32 = arith.constant 0 : i32
    %c0_i32_0 = arith.constant 0 : i32
    %c0_i32_1 = arith.constant 0 : i32
    %c0_i32_2 = arith.constant 0 : i32
    return %arg0, %c0_i32, %c0_i32_0, %c0_i32_1 : i32, i32, i32, i32
  }
  func.func @transform_1(%arg0: i32) -> (i32, i32, i32) {
    %c0_i32 = arith.constant 0 : i32
    %c0_i32_0 = arith.constant 0 : i32
    %c0_i32_1 = arith.constant 0 : i32
    %c0_i32_2 = arith.constant 0 : i32
    return %c0_i32, %c0_i32_0, %c0_i32_1 : i32, i32, i32
  }
  func.func @transform_2(%arg0: i32) -> (i32, i32) {
    %c0_i32 = arith.constant 0 : i32
    %c0_i32_0 = arith.constant 0 : i32
    %c0_i32_1 = arith.constant 0 : i32
    return %c0_i32, %c0_i32_0 : i32, i32
  }
  func.func @transform_3(%arg0: i32) -> (i32, i32) {
    %c0_i32 = arith.constant 0 : i32
    %c0_i32_0 = arith.constant 0 : i32
    return %arg0, %c0_i32 : i32, i32
  }
}

module attributes {stable_mosaic.version = 11 : i64} {
  func.func @_direct_conv_kernel(%arg0: i32, %arg1: memref<1x10x8x51xbf16, #tpu.memory_space<vmem>>, %arg2: memref<3x51x17xbf16, #tpu.memory_space<vmem>>, %arg3: memref<1x17xf32, #tpu.memory_space<vmem>>, %arg4: memref<64x16xbf16, #tpu.memory_space<vmem>>, %arg5: memref<16x17xbf16, #tpu.memory_space<vmem>>, %arg6: memref<64x17xf32, #tpu.memory_space<vmem>>) attributes {dimension_semantics = [#tpu.dimension_semantics<parallel>], iteration_bounds = array<i64: 2>, scalar_prefetch = 0 : i64, scratch_operands = 0 : i64, tpu.core_type = #tpu.core_type<tc>, window_params = [{transform_indices = @transform_0, window_bounds = array<i64: 1, 10, 8, 51>}, {pipeline_mode = #tpu.pipeline_mode<synchronous>, transform_indices = @transform_1, window_bounds = array<i64: 3, 51, 17>}, {pipeline_mode = #tpu.pipeline_mode<synchronous>, transform_indices = @transform_2, window_bounds = array<i64: 1, 17>}, {transform_indices = @transform_3, window_bounds = array<i64: 64, 16>}, {pipeline_mode = #tpu.pipeline_mode<synchronous>, transform_indices = @transform_4, window_bounds = array<i64: 16, 17>}, {transform_indices = @transform_5, window_bounds = array<i64: 64, 17>}]} {
    %c0 = arith.constant 0 : index
    %c0_0 = arith.constant 0 : index
    %c0_1 = arith.constant 0 : index
    %c0_2 = arith.constant 0 : index
    %0 = vector.load %arg1[%c0, %c0_0, %c0_1, %c0_2] : memref<1x10x8x51xbf16, #tpu.memory_space<vmem>>, vector<1x8x8x51xbf16>
    %1 = vector.shape_cast %0 : vector<1x8x8x51xbf16> to vector<64x51xbf16>
    %c0_3 = arith.constant 0 : index
    %c0_4 = arith.constant 0 : index
    %c0_5 = arith.constant 0 : index
    %2 = vector.load %arg2[%c0_3, %c0_4, %c0_5] : memref<3x51x17xbf16, #tpu.memory_space<vmem>>, vector<1x51x17xbf16>
    %3 = vector.shape_cast %2 : vector<1x51x17xbf16> to vector<51x17xbf16>
    %cst = arith.constant dense<0.000000e+00> : vector<64x17xf32>
    %4 = tpu.matmul %1, %3, %cst {dimension_numbers = #tpu.dot_dimension_numbers<[1], [0], [0], [1], [0, 0, 1, 1], [], []>} : vector<64x51xbf16>, vector<51x17xbf16>, vector<64x17xf32> -> vector<64x17xf32>
    %c0_6 = arith.constant 0 : index
    %c1 = arith.constant 1 : index
    %c0_7 = arith.constant 0 : index
    %c0_8 = arith.constant 0 : index
    %5 = vector.load %arg1[%c0_6, %c1, %c0_7, %c0_8] : memref<1x10x8x51xbf16, #tpu.memory_space<vmem>>, vector<1x8x8x51xbf16>
    %6 = vector.shape_cast %5 : vector<1x8x8x51xbf16> to vector<64x51xbf16>
    %c1_9 = arith.constant 1 : index
    %c0_10 = arith.constant 0 : index
    %c0_11 = arith.constant 0 : index
    %7 = vector.load %arg2[%c1_9, %c0_10, %c0_11] : memref<3x51x17xbf16, #tpu.memory_space<vmem>>, vector<1x51x17xbf16>
    %8 = vector.shape_cast %7 : vector<1x51x17xbf16> to vector<51x17xbf16>
    %cst_12 = arith.constant dense<0.000000e+00> : vector<64x17xf32>
    %9 = tpu.matmul %6, %8, %cst_12 {dimension_numbers = #tpu.dot_dimension_numbers<[1], [0], [0], [1], [0, 0, 1, 1], [], []>} : vector<64x51xbf16>, vector<51x17xbf16>, vector<64x17xf32> -> vector<64x17xf32>
    %10 = arith.addf %4, %9 : vector<64x17xf32>
    %c0_13 = arith.constant 0 : index
    %c2 = arith.constant 2 : index
    %c0_14 = arith.constant 0 : index
    %c0_15 = arith.constant 0 : index
    %11 = vector.load %arg1[%c0_13, %c2, %c0_14, %c0_15] : memref<1x10x8x51xbf16, #tpu.memory_space<vmem>>, vector<1x8x8x51xbf16>
    %12 = vector.shape_cast %11 : vector<1x8x8x51xbf16> to vector<64x51xbf16>
    %c2_16 = arith.constant 2 : index
    %c0_17 = arith.constant 0 : index
    %c0_18 = arith.constant 0 : index
    %13 = vector.load %arg2[%c2_16, %c0_17, %c0_18] : memref<3x51x17xbf16, #tpu.memory_space<vmem>>, vector<1x51x17xbf16>
    %14 = vector.shape_cast %13 : vector<1x51x17xbf16> to vector<51x17xbf16>
    %cst_19 = arith.constant dense<0.000000e+00> : vector<64x17xf32>
    %15 = tpu.matmul %12, %14, %cst_19 {dimension_numbers = #tpu.dot_dimension_numbers<[1], [0], [0], [1], [0, 0, 1, 1], [], []>} : vector<64x51xbf16>, vector<51x17xbf16>, vector<64x17xf32> -> vector<64x17xf32>
    %16 = arith.addf %10, %15 : vector<64x17xf32>
    %c0_20 = arith.constant 0 : index
    %c0_21 = arith.constant 0 : index
    %17 = vector.load %arg4[%c0_20, %c0_21] : memref<64x16xbf16, #tpu.memory_space<vmem>>, vector<64x16xbf16>
    %c0_22 = arith.constant 0 : index
    %c0_23 = arith.constant 0 : index
    %18 = vector.load %arg5[%c0_22, %c0_23] : memref<16x17xbf16, #tpu.memory_space<vmem>>, vector<16x17xbf16>
    %cst_24 = arith.constant dense<0.000000e+00> : vector<64x17xf32>
    %19 = tpu.matmul %17, %18, %cst_24 {dimension_numbers = #tpu.dot_dimension_numbers<[1], [0], [0], [1], [0, 0, 1, 1], [], []>} : vector<64x16xbf16>, vector<16x17xbf16>, vector<64x17xf32> -> vector<64x17xf32>
    %20 = arith.addf %16, %19 : vector<64x17xf32>
    %c0_25 = arith.constant 0 : index
    %c0_26 = arith.constant 0 : index
    %21 = vector.load %arg3[%c0_25, %c0_26] : memref<1x17xf32, #tpu.memory_space<vmem>>, vector<1x17xf32>
    %22 = vector.broadcast %21 : vector<1x17xf32> to vector<64x17xf32>
    %23 = arith.addf %20, %22 : vector<64x17xf32>
    %24 = vector.extract_strided_slice %23 {offsets = [0, 16], sizes = [64, 1], strides = [1, 1]} : vector<64x17xf32> to vector<64x1xf32>
    %25 = arith.negf %24 : vector<64x1xf32>
    %26 = math.exp %25 : vector<64x1xf32>
    %cst_27 = arith.constant 1.000000e+00 : f32
    %27 = vector.broadcast %cst_27 : f32 to vector<64x1xf32>
    %28 = arith.addf %27, %26 : vector<64x1xf32>
    %29 = arith.divf %27, %28 : vector<64x1xf32>
    %cst_28 = arith.constant 0.000000e+00 : f32
    %30 = vector.broadcast %cst_28 : f32 to vector<64x17xf32>
    %31 = arith.cmpf ogt, %23, %30 : vector<64x17xf32>
    %cst_29 = arith.constant 2.000000e-01 : f32
    %32 = vector.broadcast %cst_29 : f32 to vector<64x17xf32>
    %33 = arith.mulf %32, %23 : vector<64x17xf32>
    %34 = arith.select %31, %23, %33 : vector<64x17xi1>, vector<64x17xf32>
    %35 = vector.broadcast %29 : vector<64x1xf32> to vector<64x17xf32>
    %36 = arith.mulf %34, %35 : vector<64x17xf32>
    %37 = tpu.iota {dimensions = array<i32: 1>} : vector<64x17xi32>
    %c16_i32 = arith.constant 16 : i32
    %38 = vector.broadcast %c16_i32 : i32 to vector<64x17xi32>
    %39 = arith.cmpi slt, %37, %38 : vector<64x17xi32>
    %40 = vector.shape_cast %29 : vector<64x1xf32> to vector<64x1xf32>
    %41 = vector.broadcast %40 : vector<64x1xf32> to vector<64x17xf32>
    %42 = arith.select %39, %36, %41 : vector<64x17xi1>, vector<64x17xf32>
    %c0_30 = arith.constant 0 : index
    %c0_31 = arith.constant 0 : index
    %43 = vector.load %arg6[%c0_30, %c0_31] : memref<64x17xf32, #tpu.memory_space<vmem>>, vector<64x17xf32>
    tpu.vector_store %arg6[%c0_30, %c0_31], %42 {strides = array<i32>} : memref<64x17xf32, #tpu.memory_space<vmem>>, vector<64x17xf32>,
    return
  }
  func.func @transform_0(%arg0: i32) -> (i32, i32, i32, i32) {
    %c0_i32 = arith.constant 0 : i32
    %c0_i32_0 = arith.constant 0 : i32
    %c0_i32_1 = arith.constant 0 : i32
    %c0_i32_2 = arith.constant 0 : i32
    return %arg0, %c0_i32, %c0_i32_0, %c0_i32_1 : i32, i32, i32, i32
  }
  func.func @transform_1(%arg0: i32) -> (i32, i32, i32) {
    %c0_i32 = arith.constant 0 : i32
    %c0_i32_0 = arith.constant 0 : i32
    %c0_i32_1 = arith.constant 0 : i32
    %c0_i32_2 = arith.constant 0 : i32
    return %c0_i32, %c0_i32_0, %c0_i32_1 : i32, i32, i32
  }
  func.func @transform_2(%arg0: i32) -> (i32, i32) {
    %c0_i32 = arith.constant 0 : i32
    %c0_i32_0 = arith.constant 0 : i32
    %c0_i32_1 = arith.constant 0 : i32
    return %c0_i32, %c0_i32_0 : i32, i32
  }
  func.func @transform_3(%arg0: i32) -> (i32, i32) {
    %c0_i32 = arith.constant 0 : i32
    %c0_i32_0 = arith.constant 0 : i32
    return %arg0, %c0_i32 : i32, i32
  }
  func.func @transform_4(%arg0: i32) -> (i32, i32) {
    %c0_i32 = arith.constant 0 : i32
    %c0_i32_0 = arith.constant 0 : i32
    %c0_i32_1 = arith.constant 0 : i32
    return %c0_i32, %c0_i32_0 : i32, i32
  }
  func.func @transform_5(%arg0: i32) -> (i32, i32) {
    %c0_i32 = arith.constant 0 : i32
    %c0_i32_0 = arith.constant 0 : i32
    return %arg0, %c0_i32 : i32, i32
  }
}

module attributes {stable_mosaic.version = 11 : i64} {
  func.func @_fused_matmul_kernel(%arg0: i32, %arg1: memref<32x144xbf16, #tpu.memory_space<vmem>>, %arg2: memref<144x32xbf16, #tpu.memory_space<vmem>>, %arg3: memref<1x32xf32, #tpu.memory_space<vmem>>, %arg4: memref<32x32xbf16, #tpu.memory_space<vmem>>) attributes {dimension_semantics = [#tpu.dimension_semantics<parallel>], iteration_bounds = array<i64: 1>, scalar_prefetch = 0 : i64, scratch_operands = 0 : i64, tpu.core_type = #tpu.core_type<tc>, window_params = [{transform_indices = @transform_0, window_bounds = array<i64: 32, 144>}, {pipeline_mode = #tpu.pipeline_mode<synchronous>, transform_indices = @transform_1, window_bounds = array<i64: 144, 32>}, {pipeline_mode = #tpu.pipeline_mode<synchronous>, transform_indices = @transform_2, window_bounds = array<i64: 1, 32>}, {transform_indices = @transform_3, window_bounds = array<i64: 32, 32>}]} {
    %c0 = arith.constant 0 : index
    %c0_0 = arith.constant 0 : index
    %0 = vector.load %arg1[%c0, %c0_0] : memref<32x144xbf16, #tpu.memory_space<vmem>>, vector<32x144xbf16>
    %c0_1 = arith.constant 0 : index
    %c0_2 = arith.constant 0 : index
    %1 = vector.load %arg2[%c0_1, %c0_2] : memref<144x32xbf16, #tpu.memory_space<vmem>>, vector<144x32xbf16>
    %cst = arith.constant dense<0.000000e+00> : vector<32x32xf32>
    %2 = tpu.matmul %0, %1, %cst {dimension_numbers = #tpu.dot_dimension_numbers<[1], [0], [0], [1], [0, 0, 1, 1], [], []>} : vector<32x144xbf16>, vector<144x32xbf16>, vector<32x32xf32> -> vector<32x32xf32>
    %c0_3 = arith.constant 0 : index
    %c0_4 = arith.constant 0 : index
    %3 = vector.load %arg3[%c0_3, %c0_4] : memref<1x32xf32, #tpu.memory_space<vmem>>, vector<1x32xf32>
    %4 = vector.broadcast %3 : vector<1x32xf32> to vector<32x32xf32>
    %5 = arith.addf %2, %4 : vector<32x32xf32>
    %cst_5 = arith.constant 0.000000e+00 : f32
    %6 = vector.broadcast %cst_5 : f32 to vector<32x32xf32>
    %7 = arith.cmpf ogt, %5, %6 : vector<32x32xf32>
    %cst_6 = arith.constant 2.000000e-01 : f32
    %8 = vector.broadcast %cst_6 : f32 to vector<32x32xf32>
    %9 = arith.mulf %8, %5 : vector<32x32xf32>
    %10 = arith.select %7, %5, %9 : vector<32x32xi1>, vector<32x32xf32>
    %11 = arith.truncf %10 : vector<32x32xf32> to vector<32x32xbf16>
    %c0_7 = arith.constant 0 : index
    %c0_8 = arith.constant 0 : index
    %12 = vector.load %arg4[%c0_7, %c0_8] : memref<32x32xbf16, #tpu.memory_space<vmem>>, vector<32x32xbf16>
    tpu.vector_store %arg4[%c0_7, %c0_8], %11 {strides = array<i32>} : memref<32x32xbf16, #tpu.memory_space<vmem>>, vector<32x32xbf16>,
    return
  }
  func.func @transform_0(%arg0: i32) -> (i32, i32) {
    %c0_i32 = arith.constant 0 : i32
    %c0_i32_0 = arith.constant 0 : i32
    return %arg0, %c0_i32 : i32, i32
  }
  func.func @transform_1(%arg0: i32) -> (i32, i32) {
    %c0_i32 = arith.constant 0 : i32
    %c0_i32_0 = arith.constant 0 : i32
    %c0_i32_1 = arith.constant 0 : i32
    return %c0_i32, %c0_i32_0 : i32, i32
  }
  func.func @transform_2(%arg0: i32) -> (i32, i32) {
    %c0_i32 = arith.constant 0 : i32
    %c0_i32_0 = arith.constant 0 : i32
    %c0_i32_1 = arith.constant 0 : i32
    return %c0_i32, %c0_i32_0 : i32, i32
  }
  func.func @transform_3(%arg0: i32) -> (i32, i32) {
    %c0_i32 = arith.constant 0 : i32
    %c0_i32_0 = arith.constant 0 : i32
    return %arg0, %c0_i32 : i32, i32
  }
}

module attributes {stable_mosaic.version = 11 : i64} {
  func.func @_fused_matmul_kernel(%arg0: i32, %arg1: memref<32x288xbf16, #tpu.memory_space<vmem>>, %arg2: memref<288x32xbf16, #tpu.memory_space<vmem>>, %arg3: memref<1x32xf32, #tpu.memory_space<vmem>>, %arg4: memref<32x32xbf16, #tpu.memory_space<vmem>>, %arg5: memref<32x32xbf16, #tpu.memory_space<vmem>>) attributes {dimension_semantics = [#tpu.dimension_semantics<parallel>], iteration_bounds = array<i64: 1>, scalar_prefetch = 0 : i64, scratch_operands = 0 : i64, tpu.core_type = #tpu.core_type<tc>, window_params = [{transform_indices = @transform_0, window_bounds = array<i64: 32, 288>}, {pipeline_mode = #tpu.pipeline_mode<synchronous>, transform_indices = @transform_1, window_bounds = array<i64: 288, 32>}, {pipeline_mode = #tpu.pipeline_mode<synchronous>, transform_indices = @transform_2, window_bounds = array<i64: 1, 32>}, {transform_indices = @transform_3, window_bounds = array<i64: 32, 32>}, {transform_indices = @transform_4, window_bounds = array<i64: 32, 32>}]} {
    %c0 = arith.constant 0 : index
    %c0_0 = arith.constant 0 : index
    %0 = vector.load %arg1[%c0, %c0_0] : memref<32x288xbf16, #tpu.memory_space<vmem>>, vector<32x288xbf16>
    %c0_1 = arith.constant 0 : index
    %c0_2 = arith.constant 0 : index
    %1 = vector.load %arg2[%c0_1, %c0_2] : memref<288x32xbf16, #tpu.memory_space<vmem>>, vector<288x32xbf16>
    %cst = arith.constant dense<0.000000e+00> : vector<32x32xf32>
    %2 = tpu.matmul %0, %1, %cst {dimension_numbers = #tpu.dot_dimension_numbers<[1], [0], [0], [1], [0, 0, 1, 1], [], []>} : vector<32x288xbf16>, vector<288x32xbf16>, vector<32x32xf32> -> vector<32x32xf32>
    %c0_3 = arith.constant 0 : index
    %c0_4 = arith.constant 0 : index
    %3 = vector.load %arg3[%c0_3, %c0_4] : memref<1x32xf32, #tpu.memory_space<vmem>>, vector<1x32xf32>
    %4 = vector.broadcast %3 : vector<1x32xf32> to vector<32x32xf32>
    %5 = arith.addf %2, %4 : vector<32x32xf32>
    %c0_5 = arith.constant 0 : index
    %c0_6 = arith.constant 0 : index
    %6 = vector.load %arg4[%c0_5, %c0_6] : memref<32x32xbf16, #tpu.memory_space<vmem>>, vector<32x32xbf16>
    %7 = arith.extf %6 : vector<32x32xbf16> to vector<32x32xf32>
    %8 = arith.addf %5, %7 : vector<32x32xf32>
    %cst_7 = arith.constant 0.000000e+00 : f32
    %9 = vector.broadcast %cst_7 : f32 to vector<32x32xf32>
    %10 = arith.cmpf ogt, %8, %9 : vector<32x32xf32>
    %cst_8 = arith.constant 2.000000e-01 : f32
    %11 = vector.broadcast %cst_8 : f32 to vector<32x32xf32>
    %12 = arith.mulf %11, %8 : vector<32x32xf32>
    %13 = arith.select %10, %8, %12 : vector<32x32xi1>, vector<32x32xf32>
    %14 = arith.truncf %13 : vector<32x32xf32> to vector<32x32xbf16>
    %c0_9 = arith.constant 0 : index
    %c0_10 = arith.constant 0 : index
    %15 = vector.load %arg5[%c0_9, %c0_10] : memref<32x32xbf16, #tpu.memory_space<vmem>>, vector<32x32xbf16>
    tpu.vector_store %arg5[%c0_9, %c0_10], %14 {strides = array<i32>} : memref<32x32xbf16, #tpu.memory_space<vmem>>, vector<32x32xbf16>,
    return
  }
  func.func @transform_0(%arg0: i32) -> (i32, i32) {
    %c0_i32 = arith.constant 0 : i32
    %c0_i32_0 = arith.constant 0 : i32
    return %arg0, %c0_i32 : i32, i32
  }
  func.func @transform_1(%arg0: i32) -> (i32, i32) {
    %c0_i32 = arith.constant 0 : i32
    %c0_i32_0 = arith.constant 0 : i32
    %c0_i32_1 = arith.constant 0 : i32
    return %c0_i32, %c0_i32_0 : i32, i32
  }
  func.func @transform_2(%arg0: i32) -> (i32, i32) {
    %c0_i32 = arith.constant 0 : i32
    %c0_i32_0 = arith.constant 0 : i32
    %c0_i32_1 = arith.constant 0 : i32
    return %c0_i32, %c0_i32_0 : i32, i32
  }
  func.func @transform_3(%arg0: i32) -> (i32, i32) {
    %c0_i32 = arith.constant 0 : i32
    %c0_i32_0 = arith.constant 0 : i32
    return %arg0, %c0_i32 : i32, i32
  }
  func.func @transform_4(%arg0: i32) -> (i32, i32) {
    %c0_i32 = arith.constant 0 : i32
    %c0_i32_0 = arith.constant 0 : i32
    return %arg0, %c0_i32 : i32, i32
  }
}

module attributes {stable_mosaic.version = 11 : i64} {
  func.func @_fused_matmul_kernel(%arg0: i32, %arg1: memref<32x304xbf16, #tpu.memory_space<vmem>>, %arg2: memref<304x32xbf16, #tpu.memory_space<vmem>>, %arg3: memref<1x32xf32, #tpu.memory_space<vmem>>, %arg4: memref<32x32xbf16, #tpu.memory_space<vmem>>) attributes {dimension_semantics = [#tpu.dimension_semantics<parallel>], iteration_bounds = array<i64: 1>, scalar_prefetch = 0 : i64, scratch_operands = 0 : i64, tpu.core_type = #tpu.core_type<tc>, window_params = [{transform_indices = @transform_0, window_bounds = array<i64: 32, 304>}, {pipeline_mode = #tpu.pipeline_mode<synchronous>, transform_indices = @transform_1, window_bounds = array<i64: 304, 32>}, {pipeline_mode = #tpu.pipeline_mode<synchronous>, transform_indices = @transform_2, window_bounds = array<i64: 1, 32>}, {transform_indices = @transform_3, window_bounds = array<i64: 32, 32>}]} {
    %c0 = arith.constant 0 : index
    %c0_0 = arith.constant 0 : index
    %0 = vector.load %arg1[%c0, %c0_0] : memref<32x304xbf16, #tpu.memory_space<vmem>>, vector<32x304xbf16>
    %c0_1 = arith.constant 0 : index
    %c0_2 = arith.constant 0 : index
    %1 = vector.load %arg2[%c0_1, %c0_2] : memref<304x32xbf16, #tpu.memory_space<vmem>>, vector<304x32xbf16>
    %cst = arith.constant dense<0.000000e+00> : vector<32x32xf32>
    %2 = tpu.matmul %0, %1, %cst {dimension_numbers = #tpu.dot_dimension_numbers<[1], [0], [0], [1], [0, 0, 1, 1], [], []>} : vector<32x304xbf16>, vector<304x32xbf16>, vector<32x32xf32> -> vector<32x32xf32>
    %c0_3 = arith.constant 0 : index
    %c0_4 = arith.constant 0 : index
    %3 = vector.load %arg3[%c0_3, %c0_4] : memref<1x32xf32, #tpu.memory_space<vmem>>, vector<1x32xf32>
    %4 = vector.broadcast %3 : vector<1x32xf32> to vector<32x32xf32>
    %5 = arith.addf %2, %4 : vector<32x32xf32>
    %cst_5 = arith.constant 0.000000e+00 : f32
    %6 = vector.broadcast %cst_5 : f32 to vector<32x32xf32>
    %7 = arith.cmpf ogt, %5, %6 : vector<32x32xf32>
    %cst_6 = arith.constant 2.000000e-01 : f32
    %8 = vector.broadcast %cst_6 : f32 to vector<32x32xf32>
    %9 = arith.mulf %8, %5 : vector<32x32xf32>
    %10 = arith.select %7, %5, %9 : vector<32x32xi1>, vector<32x32xf32>
    %11 = arith.truncf %10 : vector<32x32xf32> to vector<32x32xbf16>
    %c0_7 = arith.constant 0 : index
    %c0_8 = arith.constant 0 : index
    %12 = vector.load %arg4[%c0_7, %c0_8] : memref<32x32xbf16, #tpu.memory_space<vmem>>, vector<32x32xbf16>
    tpu.vector_store %arg4[%c0_7, %c0_8], %11 {strides = array<i32>} : memref<32x32xbf16, #tpu.memory_space<vmem>>, vector<32x32xbf16>,
    return
  }
  func.func @transform_0(%arg0: i32) -> (i32, i32) {
    %c0_i32 = arith.constant 0 : i32
    %c0_i32_0 = arith.constant 0 : i32
    return %arg0, %c0_i32 : i32, i32
  }
  func.func @transform_1(%arg0: i32) -> (i32, i32) {
    %c0_i32 = arith.constant 0 : i32
    %c0_i32_0 = arith.constant 0 : i32
    %c0_i32_1 = arith.constant 0 : i32
    return %c0_i32, %c0_i32_0 : i32, i32
  }
  func.func @transform_2(%arg0: i32) -> (i32, i32) {
    %c0_i32 = arith.constant 0 : i32
    %c0_i32_0 = arith.constant 0 : i32
    %c0_i32_1 = arith.constant 0 : i32
    return %c0_i32, %c0_i32_0 : i32, i32
  }
  func.func @transform_3(%arg0: i32) -> (i32, i32) {
    %c0_i32 = arith.constant 0 : i32
    %c0_i32_0 = arith.constant 0 : i32
    return %arg0, %c0_i32 : i32, i32
  }
}

module attributes {stable_mosaic.version = 11 : i64} {
  func.func @_fused_matmul_kernel(%arg0: i32, %arg1: memref<32x288xbf16, #tpu.memory_space<vmem>>, %arg2: memref<288x32xbf16, #tpu.memory_space<vmem>>, %arg3: memref<1x32xf32, #tpu.memory_space<vmem>>, %arg4: memref<32x32xbf16, #tpu.memory_space<vmem>>) attributes {dimension_semantics = [#tpu.dimension_semantics<parallel>], iteration_bounds = array<i64: 1>, scalar_prefetch = 0 : i64, scratch_operands = 0 : i64, tpu.core_type = #tpu.core_type<tc>, window_params = [{transform_indices = @transform_0, window_bounds = array<i64: 32, 288>}, {pipeline_mode = #tpu.pipeline_mode<synchronous>, transform_indices = @transform_1, window_bounds = array<i64: 288, 32>}, {pipeline_mode = #tpu.pipeline_mode<synchronous>, transform_indices = @transform_2, window_bounds = array<i64: 1, 32>}, {transform_indices = @transform_3, window_bounds = array<i64: 32, 32>}]} {
    %c0 = arith.constant 0 : index
    %c0_0 = arith.constant 0 : index
    %0 = vector.load %arg1[%c0, %c0_0] : memref<32x288xbf16, #tpu.memory_space<vmem>>, vector<32x288xbf16>
    %c0_1 = arith.constant 0 : index
    %c0_2 = arith.constant 0 : index
    %1 = vector.load %arg2[%c0_1, %c0_2] : memref<288x32xbf16, #tpu.memory_space<vmem>>, vector<288x32xbf16>
    %cst = arith.constant dense<0.000000e+00> : vector<32x32xf32>
    %2 = tpu.matmul %0, %1, %cst {dimension_numbers = #tpu.dot_dimension_numbers<[1], [0], [0], [1], [0, 0, 1, 1], [], []>} : vector<32x288xbf16>, vector<288x32xbf16>, vector<32x32xf32> -> vector<32x32xf32>
    %c0_3 = arith.constant 0 : index
    %c0_4 = arith.constant 0 : index
    %3 = vector.load %arg3[%c0_3, %c0_4] : memref<1x32xf32, #tpu.memory_space<vmem>>, vector<1x32xf32>
    %4 = vector.broadcast %3 : vector<1x32xf32> to vector<32x32xf32>
    %5 = arith.addf %2, %4 : vector<32x32xf32>
    %cst_5 = arith.constant 0.000000e+00 : f32
    %6 = vector.broadcast %cst_5 : f32 to vector<32x32xf32>
    %7 = arith.cmpf ogt, %5, %6 : vector<32x32xf32>
    %cst_6 = arith.constant 2.000000e-01 : f32
    %8 = vector.broadcast %cst_6 : f32 to vector<32x32xf32>
    %9 = arith.mulf %8, %5 : vector<32x32xf32>
    %10 = arith.select %7, %5, %9 : vector<32x32xi1>, vector<32x32xf32>
    %11 = arith.truncf %10 : vector<32x32xf32> to vector<32x32xbf16>
    %c0_7 = arith.constant 0 : index
    %c0_8 = arith.constant 0 : index
    %12 = vector.load %arg4[%c0_7, %c0_8] : memref<32x32xbf16, #tpu.memory_space<vmem>>, vector<32x32xbf16>
    tpu.vector_store %arg4[%c0_7, %c0_8], %11 {strides = array<i32>} : memref<32x32xbf16, #tpu.memory_space<vmem>>, vector<32x32xbf16>,
    return
  }
  func.func @transform_0(%arg0: i32) -> (i32, i32) {
    %c0_i32 = arith.constant 0 : i32
    %c0_i32_0 = arith.constant 0 : i32
    return %arg0, %c0_i32 : i32, i32
  }
  func.func @transform_1(%arg0: i32) -> (i32, i32) {
    %c0_i32 = arith.constant 0 : i32
    %c0_i32_0 = arith.constant 0 : i32
    %c0_i32_1 = arith.constant 0 : i32
    return %c0_i32, %c0_i32_0 : i32, i32
  }
  func.func @transform_2(%arg0: i32) -> (i32, i32) {
    %c0_i32 = arith.constant 0 : i32
    %c0_i32_0 = arith.constant 0 : i32
    %c0_i32_1 = arith.constant 0 : i32
    return %c0_i32, %c0_i32_0 : i32, i32
  }
  func.func @transform_3(%arg0: i32) -> (i32, i32) {
    %c0_i32 = arith.constant 0 : i32
    %c0_i32_0 = arith.constant 0 : i32
    return %arg0, %c0_i32 : i32, i32
  }
}

module attributes {stable_mosaic.version = 11 : i64} {
  func.func @_fused_matmul_kernel(%arg0: i32, %arg1: memref<8x288xbf16, #tpu.memory_space<vmem>>, %arg2: memref<288x64xbf16, #tpu.memory_space<vmem>>, %arg3: memref<1x64xf32, #tpu.memory_space<vmem>>, %arg4: memref<8x64xbf16, #tpu.memory_space<vmem>>) attributes {dimension_semantics = [#tpu.dimension_semantics<parallel>], iteration_bounds = array<i64: 1>, scalar_prefetch = 0 : i64, scratch_operands = 0 : i64, tpu.core_type = #tpu.core_type<tc>, window_params = [{transform_indices = @transform_0, window_bounds = array<i64: 8, 288>}, {pipeline_mode = #tpu.pipeline_mode<synchronous>, transform_indices = @transform_1, window_bounds = array<i64: 288, 64>}, {pipeline_mode = #tpu.pipeline_mode<synchronous>, transform_indices = @transform_2, window_bounds = array<i64: 1, 64>}, {transform_indices = @transform_3, window_bounds = array<i64: 8, 64>}]} {
    %c0 = arith.constant 0 : index
    %c0_0 = arith.constant 0 : index
    %0 = vector.load %arg1[%c0, %c0_0] : memref<8x288xbf16, #tpu.memory_space<vmem>>, vector<8x288xbf16>
    %c0_1 = arith.constant 0 : index
    %c0_2 = arith.constant 0 : index
    %1 = vector.load %arg2[%c0_1, %c0_2] : memref<288x64xbf16, #tpu.memory_space<vmem>>, vector<288x64xbf16>
    %cst = arith.constant dense<0.000000e+00> : vector<8x64xf32>
    %2 = tpu.matmul %0, %1, %cst {dimension_numbers = #tpu.dot_dimension_numbers<[1], [0], [0], [1], [0, 0, 1, 1], [], []>} : vector<8x288xbf16>, vector<288x64xbf16>, vector<8x64xf32> -> vector<8x64xf32>
    %c0_3 = arith.constant 0 : index
    %c0_4 = arith.constant 0 : index
    %3 = vector.load %arg3[%c0_3, %c0_4] : memref<1x64xf32, #tpu.memory_space<vmem>>, vector<1x64xf32>
    %4 = vector.broadcast %3 : vector<1x64xf32> to vector<8x64xf32>
    %5 = arith.addf %2, %4 : vector<8x64xf32>
    %cst_5 = arith.constant 0.000000e+00 : f32
    %6 = vector.broadcast %cst_5 : f32 to vector<8x64xf32>
    %7 = arith.cmpf ogt, %5, %6 : vector<8x64xf32>
    %cst_6 = arith.constant 2.000000e-01 : f32
    %8 = vector.broadcast %cst_6 : f32 to vector<8x64xf32>
    %9 = arith.mulf %8, %5 : vector<8x64xf32>
    %10 = arith.select %7, %5, %9 : vector<8x64xi1>, vector<8x64xf32>
    %11 = arith.truncf %10 : vector<8x64xf32> to vector<8x64xbf16>
    %c0_7 = arith.constant 0 : index
    %c0_8 = arith.constant 0 : index
    %12 = vector.load %arg4[%c0_7, %c0_8] : memref<8x64xbf16, #tpu.memory_space<vmem>>, vector<8x64xbf16>
    tpu.vector_store %arg4[%c0_7, %c0_8], %11 {strides = array<i32>} : memref<8x64xbf16, #tpu.memory_space<vmem>>, vector<8x64xbf16>,
    return
  }
  func.func @transform_0(%arg0: i32) -> (i32, i32) {
    %c0_i32 = arith.constant 0 : i32
    %c0_i32_0 = arith.constant 0 : i32
    return %arg0, %c0_i32 : i32, i32
  }
  func.func @transform_1(%arg0: i32) -> (i32, i32) {
    %c0_i32 = arith.constant 0 : i32
    %c0_i32_0 = arith.constant 0 : i32
    %c0_i32_1 = arith.constant 0 : i32
    return %c0_i32, %c0_i32_0 : i32, i32
  }
  func.func @transform_2(%arg0: i32) -> (i32, i32) {
    %c0_i32 = arith.constant 0 : i32
    %c0_i32_0 = arith.constant 0 : i32
    %c0_i32_1 = arith.constant 0 : i32
    return %c0_i32, %c0_i32_0 : i32, i32
  }
  func.func @transform_3(%arg0: i32) -> (i32, i32) {
    %c0_i32 = arith.constant 0 : i32
    %c0_i32_0 = arith.constant 0 : i32
    return %arg0, %c0_i32 : i32, i32
  }
}

module attributes {stable_mosaic.version = 11 : i64} {
  func.func @_fused_matmul_kernel(%arg0: i32, %arg1: memref<8x608xbf16, #tpu.memory_space<vmem>>, %arg2: memref<608x64xbf16, #tpu.memory_space<vmem>>, %arg3: memref<1x64xf32, #tpu.memory_space<vmem>>, %arg4: memref<8x64xbf16, #tpu.memory_space<vmem>>) attributes {dimension_semantics = [#tpu.dimension_semantics<parallel>], iteration_bounds = array<i64: 1>, scalar_prefetch = 0 : i64, scratch_operands = 0 : i64, tpu.core_type = #tpu.core_type<tc>, window_params = [{transform_indices = @transform_0, window_bounds = array<i64: 8, 608>}, {pipeline_mode = #tpu.pipeline_mode<synchronous>, transform_indices = @transform_1, window_bounds = array<i64: 608, 64>}, {pipeline_mode = #tpu.pipeline_mode<synchronous>, transform_indices = @transform_2, window_bounds = array<i64: 1, 64>}, {transform_indices = @transform_3, window_bounds = array<i64: 8, 64>}]} {
    %c0 = arith.constant 0 : index
    %c0_0 = arith.constant 0 : index
    %0 = vector.load %arg1[%c0, %c0_0] : memref<8x608xbf16, #tpu.memory_space<vmem>>, vector<8x608xbf16>
    %c0_1 = arith.constant 0 : index
    %c0_2 = arith.constant 0 : index
    %1 = vector.load %arg2[%c0_1, %c0_2] : memref<608x64xbf16, #tpu.memory_space<vmem>>, vector<608x64xbf16>
    %cst = arith.constant dense<0.000000e+00> : vector<8x64xf32>
    %2 = tpu.matmul %0, %1, %cst {dimension_numbers = #tpu.dot_dimension_numbers<[1], [0], [0], [1], [0, 0, 1, 1], [], []>} : vector<8x608xbf16>, vector<608x64xbf16>, vector<8x64xf32> -> vector<8x64xf32>
    %c0_3 = arith.constant 0 : index
    %c0_4 = arith.constant 0 : index
    %3 = vector.load %arg3[%c0_3, %c0_4] : memref<1x64xf32, #tpu.memory_space<vmem>>, vector<1x64xf32>
    %4 = vector.broadcast %3 : vector<1x64xf32> to vector<8x64xf32>
    %5 = arith.addf %2, %4 : vector<8x64xf32>
    %cst_5 = arith.constant 0.000000e+00 : f32
    %6 = vector.broadcast %cst_5 : f32 to vector<8x64xf32>
    %7 = arith.cmpf ogt, %5, %6 : vector<8x64xf32>
    %cst_6 = arith.constant 2.000000e-01 : f32
    %8 = vector.broadcast %cst_6 : f32 to vector<8x64xf32>
    %9 = arith.mulf %8, %5 : vector<8x64xf32>
    %10 = arith.select %7, %5, %9 : vector<8x64xi1>, vector<8x64xf32>
    %11 = arith.truncf %10 : vector<8x64xf32> to vector<8x64xbf16>
    %c0_7 = arith.constant 0 : index
    %c0_8 = arith.constant 0 : index
    %12 = vector.load %arg4[%c0_7, %c0_8] : memref<8x64xbf16, #tpu.memory_space<vmem>>, vector<8x64xbf16>
    tpu.vector_store %arg4[%c0_7, %c0_8], %11 {strides = array<i32>} : memref<8x64xbf16, #tpu.memory_space<vmem>>, vector<8x64xbf16>,
    return
  }
  func.func @transform_0(%arg0: i32) -> (i32, i32) {
    %c0_i32 = arith.constant 0 : i32
    %c0_i32_0 = arith.constant 0 : i32
    return %arg0, %c0_i32 : i32, i32
  }
  func.func @transform_1(%arg0: i32) -> (i32, i32) {
    %c0_i32 = arith.constant 0 : i32
    %c0_i32_0 = arith.constant 0 : i32
    %c0_i32_1 = arith.constant 0 : i32
    return %c0_i32, %c0_i32_0 : i32, i32
  }
  func.func @transform_2(%arg0: i32) -> (i32, i32) {
    %c0_i32 = arith.constant 0 : i32
    %c0_i32_0 = arith.constant 0 : i32
    %c0_i32_1 = arith.constant 0 : i32
    return %c0_i32, %c0_i32_0 : i32, i32
  }
  func.func @transform_3(%arg0: i32) -> (i32, i32) {
    %c0_i32 = arith.constant 0 : i32
    %c0_i32_0 = arith.constant 0 : i32
    return %arg0, %c0_i32 : i32, i32
  }
}

module attributes {stable_mosaic.version = 11 : i64} {
  func.func @_fused_matmul_kernel(%arg0: i32, %arg1: memref<8x576xbf16, #tpu.memory_space<vmem>>, %arg2: memref<576x64xbf16, #tpu.memory_space<vmem>>, %arg3: memref<1x64xf32, #tpu.memory_space<vmem>>, %arg4: memref<8x64xbf16, #tpu.memory_space<vmem>>, %arg5: memref<8x64xbf16, #tpu.memory_space<vmem>>) attributes {dimension_semantics = [#tpu.dimension_semantics<parallel>], iteration_bounds = array<i64: 1>, scalar_prefetch = 0 : i64, scratch_operands = 0 : i64, tpu.core_type = #tpu.core_type<tc>, window_params = [{transform_indices = @transform_0, window_bounds = array<i64: 8, 576>}, {pipeline_mode = #tpu.pipeline_mode<synchronous>, transform_indices = @transform_1, window_bounds = array<i64: 576, 64>}, {pipeline_mode = #tpu.pipeline_mode<synchronous>, transform_indices = @transform_2, window_bounds = array<i64: 1, 64>}, {transform_indices = @transform_3, window_bounds = array<i64: 8, 64>}, {transform_indices = @transform_4, window_bounds = array<i64: 8, 64>}]} {
    %c0 = arith.constant 0 : index
    %c0_0 = arith.constant 0 : index
    %0 = vector.load %arg1[%c0, %c0_0] : memref<8x576xbf16, #tpu.memory_space<vmem>>, vector<8x576xbf16>
    %c0_1 = arith.constant 0 : index
    %c0_2 = arith.constant 0 : index
    %1 = vector.load %arg2[%c0_1, %c0_2] : memref<576x64xbf16, #tpu.memory_space<vmem>>, vector<576x64xbf16>
    %cst = arith.constant dense<0.000000e+00> : vector<8x64xf32>
    %2 = tpu.matmul %0, %1, %cst {dimension_numbers = #tpu.dot_dimension_numbers<[1], [0], [0], [1], [0, 0, 1, 1], [], []>} : vector<8x576xbf16>, vector<576x64xbf16>, vector<8x64xf32> -> vector<8x64xf32>
    %c0_3 = arith.constant 0 : index
    %c0_4 = arith.constant 0 : index
    %3 = vector.load %arg3[%c0_3, %c0_4] : memref<1x64xf32, #tpu.memory_space<vmem>>, vector<1x64xf32>
    %4 = vector.broadcast %3 : vector<1x64xf32> to vector<8x64xf32>
    %5 = arith.addf %2, %4 : vector<8x64xf32>
    %c0_5 = arith.constant 0 : index
    %c0_6 = arith.constant 0 : index
    %6 = vector.load %arg4[%c0_5, %c0_6] : memref<8x64xbf16, #tpu.memory_space<vmem>>, vector<8x64xbf16>
    %7 = arith.extf %6 : vector<8x64xbf16> to vector<8x64xf32>
    %8 = arith.addf %5, %7 : vector<8x64xf32>
    %cst_7 = arith.constant 0.000000e+00 : f32
    %9 = vector.broadcast %cst_7 : f32 to vector<8x64xf32>
    %10 = arith.cmpf ogt, %8, %9 : vector<8x64xf32>
    %cst_8 = arith.constant 2.000000e-01 : f32
    %11 = vector.broadcast %cst_8 : f32 to vector<8x64xf32>
    %12 = arith.mulf %11, %8 : vector<8x64xf32>
    %13 = arith.select %10, %8, %12 : vector<8x64xi1>, vector<8x64xf32>
    %14 = arith.truncf %13 : vector<8x64xf32> to vector<8x64xbf16>
    %c0_9 = arith.constant 0 : index
    %c0_10 = arith.constant 0 : index
    %15 = vector.load %arg5[%c0_9, %c0_10] : memref<8x64xbf16, #tpu.memory_space<vmem>>, vector<8x64xbf16>
    tpu.vector_store %arg5[%c0_9, %c0_10], %14 {strides = array<i32>} : memref<8x64xbf16, #tpu.memory_space<vmem>>, vector<8x64xbf16>,
    return
  }
  func.func @transform_0(%arg0: i32) -> (i32, i32) {
    %c0_i32 = arith.constant 0 : i32
    %c0_i32_0 = arith.constant 0 : i32
    return %arg0, %c0_i32 : i32, i32
  }
  func.func @transform_1(%arg0: i32) -> (i32, i32) {
    %c0_i32 = arith.constant 0 : i32
    %c0_i32_0 = arith.constant 0 : i32
    %c0_i32_1 = arith.constant 0 : i32
    return %c0_i32, %c0_i32_0 : i32, i32
  }
  func.func @transform_2(%arg0: i32) -> (i32, i32) {
    %c0_i32 = arith.constant 0 : i32
    %c0_i32_0 = arith.constant 0 : i32
    %c0_i32_1 = arith.constant 0 : i32
    return %c0_i32, %c0_i32_0 : i32, i32
  }
  func.func @transform_3(%arg0: i32) -> (i32, i32) {
    %c0_i32 = arith.constant 0 : i32
    %c0_i32_0 = arith.constant 0 : i32
    return %arg0, %c0_i32 : i32, i32
  }
  func.func @transform_4(%arg0: i32) -> (i32, i32) {
    %c0_i32 = arith.constant 0 : i32
    %c0_i32_0 = arith.constant 0 : i32
    return %arg0, %c0_i32 : i32, i32
  }
}

module attributes {stable_mosaic.version = 11 : i64} {
  func.func @_fused_matmul_kernel(%arg0: i32, %arg1: memref<8x576xbf16, #tpu.memory_space<vmem>>, %arg2: memref<576x64xbf16, #tpu.memory_space<vmem>>, %arg3: memref<1x64xf32, #tpu.memory_space<vmem>>, %arg4: memref<8x64xbf16, #tpu.memory_space<vmem>>) attributes {dimension_semantics = [#tpu.dimension_semantics<parallel>], iteration_bounds = array<i64: 1>, scalar_prefetch = 0 : i64, scratch_operands = 0 : i64, tpu.core_type = #tpu.core_type<tc>, window_params = [{transform_indices = @transform_0, window_bounds = array<i64: 8, 576>}, {pipeline_mode = #tpu.pipeline_mode<synchronous>, transform_indices = @transform_1, window_bounds = array<i64: 576, 64>}, {pipeline_mode = #tpu.pipeline_mode<synchronous>, transform_indices = @transform_2, window_bounds = array<i64: 1, 64>}, {transform_indices = @transform_3, window_bounds = array<i64: 8, 64>}]} {
    %c0 = arith.constant 0 : index
    %c0_0 = arith.constant 0 : index
    %0 = vector.load %arg1[%c0, %c0_0] : memref<8x576xbf16, #tpu.memory_space<vmem>>, vector<8x576xbf16>
    %c0_1 = arith.constant 0 : index
    %c0_2 = arith.constant 0 : index
    %1 = vector.load %arg2[%c0_1, %c0_2] : memref<576x64xbf16, #tpu.memory_space<vmem>>, vector<576x64xbf16>
    %cst = arith.constant dense<0.000000e+00> : vector<8x64xf32>
    %2 = tpu.matmul %0, %1, %cst {dimension_numbers = #tpu.dot_dimension_numbers<[1], [0], [0], [1], [0, 0, 1, 1], [], []>} : vector<8x576xbf16>, vector<576x64xbf16>, vector<8x64xf32> -> vector<8x64xf32>
    %c0_3 = arith.constant 0 : index
    %c0_4 = arith.constant 0 : index
    %3 = vector.load %arg3[%c0_3, %c0_4] : memref<1x64xf32, #tpu.memory_space<vmem>>, vector<1x64xf32>
    %4 = vector.broadcast %3 : vector<1x64xf32> to vector<8x64xf32>
    %5 = arith.addf %2, %4 : vector<8x64xf32>
    %cst_5 = arith.constant 0.000000e+00 : f32
    %6 = vector.broadcast %cst_5 : f32 to vector<8x64xf32>
    %7 = arith.cmpf ogt, %5, %6 : vector<8x64xf32>
    %cst_6 = arith.constant 2.000000e-01 : f32
    %8 = vector.broadcast %cst_6 : f32 to vector<8x64xf32>
    %9 = arith.mulf %8, %5 : vector<8x64xf32>
    %10 = arith.select %7, %5, %9 : vector<8x64xi1>, vector<8x64xf32>
    %11 = arith.truncf %10 : vector<8x64xf32> to vector<8x64xbf16>
    %c0_7 = arith.constant 0 : index
    %c0_8 = arith.constant 0 : index
    %12 = vector.load %arg4[%c0_7, %c0_8] : memref<8x64xbf16, #tpu.memory_space<vmem>>, vector<8x64xbf16>
    tpu.vector_store %arg4[%c0_7, %c0_8], %11 {strides = array<i32>} : memref<8x64xbf16, #tpu.memory_space<vmem>>, vector<8x64xbf16>,
    return
  }
  func.func @transform_0(%arg0: i32) -> (i32, i32) {
    %c0_i32 = arith.constant 0 : i32
    %c0_i32_0 = arith.constant 0 : i32
    return %arg0, %c0_i32 : i32, i32
  }
  func.func @transform_1(%arg0: i32) -> (i32, i32) {
    %c0_i32 = arith.constant 0 : i32
    %c0_i32_0 = arith.constant 0 : i32
    %c0_i32_1 = arith.constant 0 : i32
    return %c0_i32, %c0_i32_0 : i32, i32
  }
  func.func @transform_2(%arg0: i32) -> (i32, i32) {
    %c0_i32 = arith.constant 0 : i32
    %c0_i32_0 = arith.constant 0 : i32
    %c0_i32_1 = arith.constant 0 : i32
    return %c0_i32, %c0_i32_0 : i32, i32
  }
  func.func @transform_3(%arg0: i32) -> (i32, i32) {
    %c0_i32 = arith.constant 0 : i32
    %c0_i32_0 = arith.constant 0 : i32
    return %arg0, %c0_i32 : i32, i32
  }
}

module attributes {stable_mosaic.version = 11 : i64} {
  func.func @_fused_matmul_kernel(%arg0: i32, %arg1: memref<2x64xbf16, #tpu.memory_space<vmem>>, %arg2: memref<64x12xbf16, #tpu.memory_space<vmem>>, %arg3: memref<1x12xf32, #tpu.memory_space<vmem>>, %arg4: memref<2x12xf32, #tpu.memory_space<vmem>>) attributes {dimension_semantics = [#tpu.dimension_semantics<parallel>], iteration_bounds = array<i64: 1>, scalar_prefetch = 0 : i64, scratch_operands = 0 : i64, tpu.core_type = #tpu.core_type<tc>, window_params = [{transform_indices = @transform_0, window_bounds = array<i64: 2, 64>}, {pipeline_mode = #tpu.pipeline_mode<synchronous>, transform_indices = @transform_1, window_bounds = array<i64: 64, 12>}, {pipeline_mode = #tpu.pipeline_mode<synchronous>, transform_indices = @transform_2, window_bounds = array<i64: 1, 12>}, {transform_indices = @transform_3, window_bounds = array<i64: 2, 12>}]} {
    %c0 = arith.constant 0 : index
    %c0_0 = arith.constant 0 : index
    %0 = vector.load %arg1[%c0, %c0_0] : memref<2x64xbf16, #tpu.memory_space<vmem>>, vector<2x64xbf16>
    %c0_1 = arith.constant 0 : index
    %c0_2 = arith.constant 0 : index
    %1 = vector.load %arg2[%c0_1, %c0_2] : memref<64x12xbf16, #tpu.memory_space<vmem>>, vector<64x12xbf16>
    %cst = arith.constant dense<0.000000e+00> : vector<2x12xf32>
    %2 = tpu.matmul %0, %1, %cst {dimension_numbers = #tpu.dot_dimension_numbers<[1], [0], [0], [1], [0, 0, 1, 1], [], []>} : vector<2x64xbf16>, vector<64x12xbf16>, vector<2x12xf32> -> vector<2x12xf32>
    %c0_3 = arith.constant 0 : index
    %c0_4 = arith.constant 0 : index
    %3 = vector.load %arg3[%c0_3, %c0_4] : memref<1x12xf32, #tpu.memory_space<vmem>>, vector<1x12xf32>
    %4 = vector.broadcast %3 : vector<1x12xf32> to vector<2x12xf32>
    %5 = arith.addf %2, %4 : vector<2x12xf32>
    %c0_5 = arith.constant 0 : index
    %c0_6 = arith.constant 0 : index
    %6 = vector.load %arg4[%c0_5, %c0_6] : memref<2x12xf32, #tpu.memory_space<vmem>>, vector<2x12xf32>
    tpu.vector_store %arg4[%c0_5, %c0_6], %5 {strides = array<i32>} : memref<2x12xf32, #tpu.memory_space<vmem>>, vector<2x12xf32>,
    return
  }
  func.func @transform_0(%arg0: i32) -> (i32, i32) {
    %c0_i32 = arith.constant 0 : i32
    %c0_i32_0 = arith.constant 0 : i32
    return %arg0, %c0_i32 : i32, i32
  }
  func.func @transform_1(%arg0: i32) -> (i32, i32) {
    %c0_i32 = arith.constant 0 : i32
    %c0_i32_0 = arith.constant 0 : i32
    %c0_i32_1 = arith.constant 0 : i32
    return %c0_i32, %c0_i32_0 : i32, i32
  }
  func.func @transform_2(%arg0: i32) -> (i32, i32) {
    %c0_i32 = arith.constant 0 : i32
    %c0_i32_0 = arith.constant 0 : i32
    %c0_i32_1 = arith.constant 0 : i32
    return %c0_i32, %c0_i32_0 : i32, i32
  }
  func.func @transform_3(%arg0: i32) -> (i32, i32) {
    %c0_i32 = arith.constant 0 : i32
    %c0_i32_0 = arith.constant 0 : i32
    return %arg0, %c0_i32 : i32, i32
  }
}

</mosaic_0001>

<llo_original>
// kernel: object_encoder_v4_forward.12
$region0: #{object_encoder_v4_forward.12}
  #allocation0 [shape = 'u32[]', space=smem, size = 0x4, offset = 0x4, fixed_abs, tag = 'smem constant byte address 0x4 - core index']
  #allocation1 [shape = 'u32[144,128]{1,0:T(1,128)}', space=vmem, size = 0x12000, scoped, tag = 'internal scratch']
  %s0 = inlined_call_operand.vmem [shape: bf16[2,9,8,36], index: 0, kind: input, shape index: {}]
  %s1 = inlined_call_operand.vmem [shape: bf16[2,9,8,36], index: 1, kind: input, shape index: {}]
  %s2 = inlined_call_operand.vmem [shape: bf16[4,36,16], index: 2, kind: input, shape index: {}]
  %s3 = inlined_call_operand.vmem [shape: f32[1,16], index: 3, kind: input, shape index: {}]
  %s4 = inlined_call_operand.vmem [shape: bf16[128,16], index: 4, kind: output, shape index: {}]
  %s5 = sld [smem:[#allocation0]]
  $region49: #{object_encoder_v4_forward.12} parent=0
    _
  %s7 = ssub.s32 1, %s5
  %s8 = scalar_select 0, %s7, %s5
  loop: start=0, step=1, limit=4
  $region2: #{object_encoder_v4_forward.12} parent=0 // loop_pre_header
    _
  $region3: #{object_encoder_v4_forward.12} parent=0 // loop_header
    %s10 = sphi 0, %s14
    %p11 = scmp.ge.s32.totalorder %s10, 4
    %s20 = sphi 0, %s22
    %s23 = sphi 0, %s20
    %s24 = sphi 0, %s23
    %s40 = sphi 0, %s24
    %s46 = sphi 0, %s48
    %s49 = sphi 0, %s46
    %s50 = sphi 0, %s49
    %s66 = sphi 0, %s50
    %s70 = sphi 0, %s70
    %s72 = sphi 0, %s70
    %s73 = sphi 0, %s72
    %s87 = sphi 0, %s73
    %s91 = sphi 0, %s91
    %s93 = sphi 0, %s91
    %s94 = sphi 0, %s93
    %s108 = sphi 0, %s94
    %s114 = sphi 0, %s116
    %s117 = sphi 0, %s114
    %s118 = sphi 0, %s117
    %s134 = sphi 0, %s118
  $region4: #{object_encoder_v4_forward.12} parent=0 // loop_header_branch
    %13 = sbr.rel (%p11) target = $region8
  $region5: #{object_encoder_v4_forward.12} parent=0 // loop_body
    %s15 = ssub.s32 %s10, 1
    %s16 = ssub.s32 %s10, 2
    %s17 = sadd.s32 %s10, 1
    %s18 = ssub.s32 %s10, %s17
    %p19 = scmp.eq.s32.totalorder %s18, 0
    %s21 = sadd.s32 %s20, 1
    %s22 = scalar_select %p19, %s20, %s21
    %p25 = pneg %p19
    %p26 = scmp.eq.s32.totalorder %s10, 1
    %p27 = por %p25, %p26
    %p28 = scmp.ne.s32.totalorder %s20, %s23
    %p29 = scmp.eq.s32.totalorder %s10, 0
    %p30 = por %p28, %p29
    %p31 = scmp.ne.s32.totalorder %s20, %s23
    %p32 = scmp.eq.s32.totalorder %s15, 1
    %p33 = por %p31, %p32
    %p34 = scmp.ne.s32.totalorder %s23, %s24
    %p35 = scmp.eq.s32.totalorder %s15, 0
    %p36 = por %p34, %p35
    %p37 = scmp.ne.s32.totalorder %s23, %s24
    %p38 = scmp.eq.s32.totalorder %s16, 1
    %p39 = por %p37, %p38
    %p41 = scmp.ne.s32.totalorder %s24, %s40
    %p42 = scmp.eq.s32.totalorder %s16, 0
    %p43 = por %p41, %p42
    %s44 = ssub.s32 %s10, %s17
    %p45 = scmp.eq.s32.totalorder %s44, 0
    %s47 = sadd.s32 %s46, 1
    %s48 = scalar_select %p45, %s46, %s47
    %p51 = pneg %p45
    %p52 = scmp.eq.s32.totalorder %s10, 1
    %p53 = por %p51, %p52
    %p54 = scmp.ne.s32.totalorder %s46, %s49
    %p55 = scmp.eq.s32.totalorder %s10, 0
    %p56 = por %p54, %p55
    %p57 = scmp.ne.s32.totalorder %s46, %s49
    %p58 = scmp.eq.s32.totalorder %s15, 1
    %p59 = por %p57, %p58
    %p60 = scmp.ne.s32.totalorder %s49, %s50
    %p61 = scmp.eq.s32.totalorder %s15, 0
    %p62 = por %p60, %p61
    %p63 = scmp.ne.s32.totalorder %s49, %s50
    %p64 = scmp.eq.s32.totalorder %s16, 1
    %p65 = por %p63, %p64
    %p67 = scmp.ne.s32.totalorder %s50, %s66
    %p68 = scmp.eq.s32.totalorder %s16, 0
    %p69 = por %p67, %p68
    %s71 = sadd.s32 %s70, 1
    %p74 = scmp.eq.s32.totalorder %s10, 1
    %p75 = scmp.ne.s32.totalorder %s70, %s72
    %p76 = scmp.eq.s32.totalorder %s10, 0
    %p77 = por %p75, %p76
    %p78 = scmp.ne.s32.totalorder %s70, %s72
    %p79 = scmp.eq.s32.totalorder %s15, 1
    %p80 = por %p78, %p79
    %p81 = scmp.ne.s32.totalorder %s72, %s73
    %p82 = scmp.eq.s32.totalorder %s15, 0
    %p83 = por %p81, %p82
    %p84 = scmp.ne.s32.totalorder %s72, %s73
    %p85 = scmp.eq.s32.totalorder %s16, 1
    %p86 = por %p84, %p85
    %p88 = scmp.ne.s32.totalorder %s73, %s87
    %p89 = scmp.eq.s32.totalorder %s16, 0
    %p90 = por %p88, %p89
    %s92 = sadd.s32 %s91, 1
    %p95 = scmp.eq.s32.totalorder %s10, 1
    %p96 = scmp.ne.s32.totalorder %s91, %s93
    %p97 = scmp.eq.s32.totalorder %s10, 0
    %p98 = por %p96, %p97
    %p99 = scmp.ne.s32.totalorder %s91, %s93
    %p100 = scmp.eq.s32.totalorder %s15, 1
    %p101 = por %p99, %p100
    %p102 = scmp.ne.s32.totalorder %s93, %s94
    %p103 = scmp.eq.s32.totalorder %s15, 0
    %p104 = por %p102, %p103
    %p105 = scmp.ne.s32.totalorder %s93, %s94
    %p106 = scmp.eq.s32.totalorder %s16, 1
    %p107 = por %p105, %p106
    %p109 = scmp.ne.s32.totalorder %s94, %s108
    %p110 = scmp.eq.s32.totalorder %s16, 0
    %p111 = por %p109, %p110
    %s112 = ssub.s32 %s10, %s17
    %p113 = scmp.eq.s32.totalorder %s112, 0
    %s115 = sadd.s32 %s114, 1
    %s116 = scalar_select %p113, %s114, %s115
    %p119 = pneg %p113
    %p120 = scmp.eq.s32.totalorder %s10, 1
    %p121 = por %p119, %p120
    %p122 = scmp.ne.s32.totalorder %s114, %s117
    %p123 = scmp.eq.s32.totalorder %s10, 0
    %p124 = por %p122, %p123
    %p125 = scmp.ne.s32.totalorder %s114, %s117
    %p126 = scmp.eq.s32.totalorder %s15, 1
    %p127 = por %p125, %p126
    %p128 = scmp.ne.s32.totalorder %s117, %s118
    %p129 = scmp.eq.s32.totalorder %s15, 0
    %p130 = por %p128, %p129
    %p131 = scmp.ne.s32.totalorder %s117, %s118
    %p132 = scmp.eq.s32.totalorder %s16, 1
    %p133 = por %p131, %p132
    %p135 = scmp.ne.s32.totalorder %s118, %s134
    %p136 = scmp.eq.s32.totalorder %s16, 0
    %p137 = por %p135, %p136
    %p138 = scmp.le.s32.totalorder 1, %s10
    %p139 = scmp.lt.s32.totalorder %s10, 3
    %p140 = pnand %p138, %p139
    %p141 = pneg %p140
    // Predicated region
    $region9: #{object_encoder_v4_forward.12} parent=5 // pred_check
      _
    $region10: #{object_encoder_v4_forward.12} parent=5 // pred_check_branch
      %143 = sbr.rel (%p140) target = $region12
    $region11: #{object_encoder_v4_forward.12} parent=5 // pred_region
      %s144 = ssub.s32 %s10, 1
      // Predicated region
      $region13: #{object_encoder_v4_forward.12} parent=11 // pred_check
        %p145 = pneg %p83
      $region14: #{object_encoder_v4_forward.12} parent=11 // pred_check_branch
        %147 = sbr.rel (%p145) target = $region16
      $region15: #{object_encoder_v4_forward.12} parent=11 // pred_region
        _
      $region16: #{object_encoder_v4_forward.12} parent=11 // pred_fallthru
        _
      // Predicated region
      $region17: #{object_encoder_v4_forward.12} parent=11 // pred_check
        %p148 = pneg %p104
      $region18: #{object_encoder_v4_forward.12} parent=11 // pred_check_branch
        %150 = sbr.rel (%p148) target = $region20
      $region19: #{object_encoder_v4_forward.12} parent=11 // pred_region
        _
      $region20: #{object_encoder_v4_forward.12} parent=11 // pred_fallthru
        _
    $region12: #{object_encoder_v4_forward.12} parent=5 // pred_fallthru
      _
    %p151 = scmp.lt.s32.totalorder %s10, 2
    // Predicated region
    $region21: #{object_encoder_v4_forward.12} parent=5 // pred_check
      %p152 = pneg %p151
    $region22: #{object_encoder_v4_forward.12} parent=5 // pred_check_branch
      %154 = sbr.rel (%p152) target = $region24
    $region23: #{object_encoder_v4_forward.12} parent=5 // pred_region
      // Predicated region
      $region25: #{object_encoder_v4_forward.12} parent=23 // pred_check
        %p155 = pneg %p30
      $region26: #{object_encoder_v4_forward.12} parent=23 // pred_check_branch
        %157 = sbr.rel (%p155) target = $region28
      $region27: #{object_encoder_v4_forward.12} parent=23 // pred_region
        %p158 = scmp.lt.s32.totalorder %s10, 1
        %s159 = scalar_select %p158, %s10, 1
        %s160 = smul.addr %s159, 9
        %s161 = smul.addr %s160, 4
        %s162 = scalar_lea.vmem %s0, %s161
      $region28: #{object_encoder_v4_forward.12} parent=23 // pred_fallthru
        _
      // Predicated region
      $region29: #{object_encoder_v4_forward.12} parent=23 // pred_check
        %p163 = pneg %p56
      $region30: #{object_encoder_v4_forward.12} parent=23 // pred_check_branch
        %165 = sbr.rel (%p163) target = $region32
      $region31: #{object_encoder_v4_forward.12} parent=23 // pred_region
        %p166 = scmp.lt.s32.totalorder %s10, 1
        %s167 = scalar_select %p166, %s10, 1
        %s168 = smul.addr %s167, 9
        %s169 = smul.addr %s168, 4
        %s170 = scalar_lea.vmem %s1, %s169
      $region32: #{object_encoder_v4_forward.12} parent=23 // pred_fallthru
        _
    $region24: #{object_encoder_v4_forward.12} parent=5 // pred_fallthru
      _
    %p171 = scmp.le.s32.totalorder 1, %s10
    %p172 = scmp.lt.s32.totalorder %s10, 3
    %p173 = pnand %p171, %p172
    %p174 = pneg %p173
    // Predicated region
    $region33: #{object_encoder_v4_forward.12} parent=5 // pred_check
      _
    $region34: #{object_encoder_v4_forward.12} parent=5 // pred_check_branch
      %176 = sbr.rel (%p173) target = $region36
    $region35: #{object_encoder_v4_forward.12} parent=5 // pred_region
      %s177 = ssub.s32 %s10, 1
      %p178 = scmp.lt.s32.totalorder %s15, 1
      %s179 = scalar_select %p178, %s15, 1
      %s180 = smul.addr %s179, 9
      %s181 = smul.addr %s180, 4
      %s182 = scalar_lea.vmem %s0, %s181
      %p183 = pneg %p36
      %p184 = pneg %p33
      %p185 = scmp.lt.s32.totalorder %s15, 1
      %s186 = scalar_select %p185, %s15, 1
      %s187 = smul.addr %s186, 9
      %s188 = smul.addr %s187, 4
      %s189 = scalar_lea.vmem %s1, %s188
      %p190 = pneg %p62
      %p191 = pneg %p59
      %p192 = pneg %p83
      %p193 = pneg %p80
      %p194 = pneg %p104
      %p195 = pneg %p101
      %p196 = pneg %p130
      %p197 = pneg %p127
      %s198 = smul.u32 8, %s15
      %p199 = scmp.lt.s32.totalorder %s198, 15
      %s200 = scalar_select %p199, %s198, 15
      %s201 = smul.addr %s200, 4
      %s202 = scalar_lea.vmem %s4, %s201
      %p203 = scmp.lt.s32.totalorder %s15, 1
      %s204 = scalar_select %p203, %s15, 1
      %s205 = smul.addr %s204, 9
      %s206 = smul.addr %s205, 4
      %s207 = scalar_lea.vmem %s0, %s206
      %p208 = scmp.lt.s32.totalorder %s15, 1
      %s209 = scalar_select %p208, %s15, 1
      %s210 = smul.addr %s209, 9
      %s211 = smul.addr %s210, 4
      %s212 = scalar_lea.vmem %s1, %s211
      %s213 = smul.u32 8, %s15
      %p214 = scmp.lt.s32.totalorder %s213, 15
      %s215 = scalar_select %p214, %s213, 15
      %s216 = smul.addr %s215, 4
      %s217 = scalar_lea.vmem %s4, %s216
      %s218 = smul.u32 8, %s15
      %v220 = vld [vmem:[%s207] sm:$0xf]
      %v221 = vld [vmem:[%s207 + $0x4] sm:$0xf]
      %v222 = vld [vmem:[%s207 + $0x8] sm:$0xf]
      %v223 = vld [vmem:[%s207 + $0xc] sm:$0xf]
      %v224 = vld [vmem:[%s207 + $0x10] sm:$0xf]
      %v225 = vld [vmem:[%s207 + $0x14] sm:$0xf]
      %v226 = vld [vmem:[%s207 + $0x18] sm:$0xf]
      %v227 = vld [vmem:[%s207 + $0x1c] sm:$0xf]
      %v228 = vld [vmem:[%s2] sm:$0xf]
      %v229 = vld [vmem:[%s2 + $0x4] sm:$0xf]
      %v230 = vld [vmem:[%s2 + $0x8] sm:$0xf]
      %v231 = vld [vmem:[%s2 + $0xc] sm:$0xf]
      %v232 = vld [vmem:[%s2 + $0x10] sm:$0x3]
      %v233 = vld [vmem:[%s212] sm:$0xf]
      %v234 = vld [vmem:[%s212 + $0x4] sm:$0xf]
      %v235 = vld [vmem:[%s212 + $0x8] sm:$0xf]
      %v236 = vld [vmem:[%s212 + $0xc] sm:$0xf]
      %v237 = vld [vmem:[%s212 + $0x10] sm:$0xf]
      %v238 = vld [vmem:[%s212 + $0x14] sm:$0xf]
      %v239 = vld [vmem:[%s212 + $0x18] sm:$0xf]
      %v240 = vld [vmem:[%s212 + $0x1c] sm:$0xf]
      %s241 = scalar_lea.vmem %s2, 20
      %v242 = vld [vmem:[%s241] sm:$0xf]
      %v243 = vld [vmem:[%s241 + $0x4] sm:$0xf]
      %v244 = vld [vmem:[%s241 + $0x8] sm:$0xf]
      %v245 = vld [vmem:[%s241 + $0xc] sm:$0xf]
      %v246 = vld [vmem:[%s241 + $0x10] sm:$0x3]
      %v255 = vunpack.c.l.b16 %v233
      %v256 = vunpack.c.l.b16 %v234
      %v257 = vunpack.c.l.b16 %v235
      %v258 = vunpack.c.l.b16 %v236
      %v259 = vunpack.c.l.b16 %v237
      %v260 = vunpack.c.l.b16 %v238
      %v261 = vunpack.c.l.b16 %v239
      %v262 = vunpack.c.l.b16 %v240
      %v263 = vpack.c.b16 %v256, %v255
      %v264 = vpack.c.b16 %v258, %v257
      %v265 = vpack.c.b16 %v260, %v259
      %v266 = vpack.c.b16 %v262, %v261
      %v272 = vunpack.c.l.b16 %v242
      %v273 = vunpack.c.l.b16 %v243
      %v274 = vunpack.c.l.b16 %v244
      %v275 = vunpack.c.l.b16 %v245
      %v276 = vunpack.c.l.b16 %v246
      %v277 = vpack.c.b16 %v273, %v272
      %v278 = vpack.c.b16 %v275, %v274
      %v279 = vpack.c.b16 %v276, %v276
      %vm282 = vcmask 293888
      %v284 = vsel %vm282, %v263, 0
      %v287 = vsel %vm282, %v264, 0
      %v290 = vsel %vm282, %v265, 0
      %v293 = vsel %vm282, %v266, 0
      %vm295 = vcmask 1041408
      %v297 = vsel %vm295, %v279, 0
      %299 = vmatprep.subr.bf16.mxu0 0
      %300 = vmatpush1.bf16.msra.mxu0 %v277
      %301 = vmatprep.subr.bf16.mxu0 0
      %302 = vmatpush1.bf16.msra.mxu0 %v278
      %303 = vmatprep.subr.bf16.mxu0 0
      %304 = vmatpush1.bf16.msra.mxu0 %v297
      %305 = vmatprep.subr.bf16.mxu0 0
      %306 = vmatpush1.bf16.msra.mxu0 0
      %307 = vmatprep.subr.bf16.mxu0 0
      %308 = vmatpush1.bf16.msra.mxu0 0
      %309 = vmatprep.subr.bf16.mxu0 0
      %310 = vmatpush1.bf16.msra.mxu0 0
      %311 = vmatprep.subr.bf16.mxu0 0
      %312 = vmatpush1.bf16.msra.mxu0 0
      %313 = vmatprep.subr.bf16.mxu0 0
      %314 = vmatpush1.bf16.msra.mxu0 0
      %315 = vmatprep.subr.bf16.mxu0 0
      %316 = vmatpush1.bf16.msra.mxu0 0
      %317 = vmatprep.subr.bf16.mxu0 0
      %318 = vmatpush1.bf16.msra.mxu0 0
      %319 = vmatprep.subr.bf16.mxu0 0
      %320 = vmatpush1.bf16.msra.mxu0 0
      %321 = vmatprep.subr.bf16.mxu0 0
      %322 = vmatpush1.bf16.msra.mxu0 0
      %323 = vmatprep.subr.bf16.mxu0 0
      %324 = vmatpush1.bf16.msra.mxu0 0
      %325 = vmatprep.subr.bf16.mxu0 0
      %326 = vmatpush1.bf16.msra.mxu0 0
      %327 = vmatprep.subr.bf16.mxu0 0
      %328 = vmatpush1.bf16.msra.mxu0 0
      %329 = vmatprep.subr.bf16.mxu0 0
      %330 = vmatpush1.bf16.msra.mxu0 0
      %331 = vmatprep.mubr.bf16.mxu0 0
      %332 = vmatmul.mubr.bf16.gmra.mrb[0].mxu0 %v284
      %v333 = vpop.f32.mrb[0].mxu0
      %v334 = vadd.f32 0.0, %v333
      %v335 = vpop.f32.mrb[0].mxu0
      %v336 = vpop.f32.mrb[0].mxu0
      %v337 = vadd.f32 0.0, %v336
      %v338 = vpop.f32.mrb[0].mxu0
      %339 = vmatprep.mubr.bf16.mxu0 0
      %340 = vmatmul.mubr.bf16.gmra.mrb[0].mxu0 %v287
      %v341 = vpop.f32.mrb[0].mxu0
      %v342 = vadd.f32 0.0, %v341
      %v343 = vpop.f32.mrb[0].mxu0
      %v344 = vpop.f32.mrb[0].mxu0
      %v345 = vadd.f32 0.0, %v344
      %v346 = vpop.f32.mrb[0].mxu0
      %347 = vmatprep.mubr.bf16.mxu0 0
      %348 = vmatmul.mubr.bf16.gmra.mrb[0].mxu0 %v290
      %v349 = vpop.f32.mrb[0].mxu0
      %v350 = vadd.f32 0.0, %v349
      %v351 = vpop.f32.mrb[0].mxu0
      %v352 = vpop.f32.mrb[0].mxu0
      %v353 = vadd.f32 0.0, %v352
      %v354 = vpop.f32.mrb[0].mxu0
      %355 = vmatprep.mubr.bf16.mxu0 0
      %356 = vmatmul.mubr.bf16.gmra.mrb[0].mxu0 %v293
      %v357 = vpop.f32.mrb[0].mxu0
      %v358 = vadd.f32 0.0, %v357
      %v359 = vpop.f32.mrb[0].mxu0
      %v360 = vpop.f32.mrb[0].mxu0
      %v361 = vadd.f32 0.0, %v360
      %v362 = vpop.f32.mrb[0].mxu0
      %363 = vdwg.mxu0
      %v372 = vunpack.c.l.b16 %v220
      %v373 = vunpack.c.l.b16 %v221
      %v374 = vunpack.c.l.b16 %v222
      %v375 = vunpack.c.l.b16 %v223
      %v376 = vunpack.c.l.b16 %v224
      %v377 = vunpack.c.l.b16 %v225
      %v378 = vunpack.c.l.b16 %v226
      %v379 = vunpack.c.l.b16 %v227
      %v380 = vpack.c.b16 %v373, %v372
      %v381 = vpack.c.b16 %v375, %v374
      %v382 = vpack.c.b16 %v377, %v376
      %v383 = vpack.c.b16 %v379, %v378
      %v389 = vunpack.c.l.b16 %v228
      %v390 = vunpack.c.l.b16 %v229
      %v391 = vunpack.c.l.b16 %v230
      %v392 = vunpack.c.l.b16 %v231
      %v393 = vunpack.c.l.b16 %v232
      %v394 = vpack.c.b16 %v390, %v389
      %v395 = vpack.c.b16 %v392, %v391
      %v396 = vpack.c.b16 %v393, %v393
      %v400 = vsel %vm282, %v380, 0
      %v403 = vsel %vm282, %v381, 0
      %v406 = vsel %vm282, %v382, 0
      %v409 = vsel %vm282, %v383, 0
      %v412 = vsel %vm295, %v396, 0
      %414 = vmatprep.subr.bf16.mxu0 0
      %415 = vmatpush1.bf16.msra.mxu0 %v394
      %416 = vmatprep.subr.bf16.mxu0 0
      %417 = vmatpush1.bf16.msra.mxu0 %v395
      %418 = vmatprep.subr.bf16.mxu0 0
      %419 = vmatpush1.bf16.msra.mxu0 %v412
      %420 = vmatprep.subr.bf16.mxu0 0
      %421 = vmatpush1.bf16.msra.mxu0 0
      %422 = vmatprep.subr.bf16.mxu0 0
      %423 = vmatpush1.bf16.msra.mxu0 0
      %424 = vmatprep.subr.bf16.mxu0 0
      %425 = vmatpush1.bf16.msra.mxu0 0
      %426 = vmatprep.subr.bf16.mxu0 0
      %427 = vmatpush1.bf16.msra.mxu0 0
      %428 = vmatprep.subr.bf16.mxu0 0
      %429 = vmatpush1.bf16.msra.mxu0 0
      %430 = vmatprep.subr.bf16.mxu0 0
      %431 = vmatpush1.bf16.msra.mxu0 0
      %432 = vmatprep.subr.bf16.mxu0 0
      %433 = vmatpush1.bf16.msra.mxu0 0
      %434 = vmatprep.subr.bf16.mxu0 0
      %435 = vmatpush1.bf16.msra.mxu0 0
      %436 = vmatprep.subr.bf16.mxu0 0
      %437 = vmatpush1.bf16.msra.mxu0 0
      %438 = vmatprep.subr.bf16.mxu0 0
      %439 = vmatpush1.bf16.msra.mxu0 0
      %440 = vmatprep.subr.bf16.mxu0 0
      %441 = vmatpush1.bf16.msra.mxu0 0
      %442 = vmatprep.subr.bf16.mxu0 0
      %443 = vmatpush1.bf16.msra.mxu0 0
      %444 = vmatprep.subr.bf16.mxu0 0
      %445 = vmatpush1.bf16.msra.mxu0 0
      %446 = vmatprep.mubr.bf16.mxu0 0
      %447 = vmatmul.mubr.bf16.gmra.mrb[0].mxu0 %v400
      %v448 = vpop.f32.mrb[0].mxu0
      %v449 = vadd.f32 %v334, %v448
      %v450 = vpop.f32.mrb[0].mxu0
      %v451 = vpop.f32.mrb[0].mxu0
      %v452 = vadd.f32 %v337, %v451
      %v453 = vpop.f32.mrb[0].mxu0
      %454 = vmatprep.mubr.bf16.mxu0 0
      %455 = vmatmul.mubr.bf16.gmra.mrb[0].mxu0 %v403
      %v456 = vpop.f32.mrb[0].mxu0
      %v457 = vadd.f32 %v342, %v456
      %v458 = vpop.f32.mrb[0].mxu0
      %v459 = vpop.f32.mrb[0].mxu0
      %v460 = vadd.f32 %v345, %v459
      %v461 = vpop.f32.mrb[0].mxu0
      %462 = vmatprep.mubr.bf16.mxu0 0
      %463 = vmatmul.mubr.bf16.gmra.mrb[0].mxu0 %v406
      %v464 = vpop.f32.mrb[0].mxu0
      %v465 = vadd.f32 %v350, %v464
      %v466 = vpop.f32.mrb[0].mxu0
      %v467 = vpop.f32.mrb[0].mxu0
      %v468 = vadd.f32 %v353, %v467
      %v469 = vpop.f32.mrb[0].mxu0
      %470 = vmatprep.mubr.bf16.mxu0 0
      %471 = vmatmul.mubr.bf16.gmra.mrb[0].mxu0 %v409
      %v472 = vpop.f32.mrb[0].mxu0
      %v473 = vadd.f32 %v358, %v472
      %v474 = vpop.f32.mrb[0].mxu0
      %v475 = vpop.f32.mrb[0].mxu0
      %v476 = vadd.f32 %v361, %v475
      %v477 = vpop.f32.mrb[0].mxu0
      %478 = vdwg.mxu0
      %s479 = scalar_lea.vmem %s207, 4
      %v480 = vld [vmem:[%s479] sm:$0xf]
      %v481 = vld [vmem:[%s479 + $0x4] sm:$0xf]
      %v482 = vld [vmem:[%s479 + $0x8] sm:$0xf]
      %v483 = vld [vmem:[%s479 + $0xc] sm:$0xf]
      %v484 = vld [vmem:[%s479 + $0x10] sm:$0xf]
      %v485 = vld [vmem:[%s479 + $0x14] sm:$0xf]
      %v486 = vld [vmem:[%s479 + $0x18] sm:$0xf]
      %v487 = vld [vmem:[%s479 + $0x1c] sm:$0xf]
      %s488 = scalar_lea.vmem %s2, 40
      %v489 = vld [vmem:[%s488] sm:$0xf]
      %v490 = vld [vmem:[%s488 + $0x4] sm:$0xf]
      %v491 = vld [vmem:[%s488 + $0x8] sm:$0xf]
      %v492 = vld [vmem:[%s488 + $0xc] sm:$0xf]
      %v493 = vld [vmem:[%s488 + $0x10] sm:$0x3]
      %v502 = vunpack.c.l.b16 %v480
      %v503 = vunpack.c.l.b16 %v481
      %v504 = vunpack.c.l.b16 %v482
      %v505 = vunpack.c.l.b16 %v483
      %v506 = vunpack.c.l.b16 %v484
      %v507 = vunpack.c.l.b16 %v485
      %v508 = vunpack.c.l.b16 %v486
      %v509 = vunpack.c.l.b16 %v487
      %v510 = vpack.c.b16 %v503, %v502
      %v511 = vpack.c.b16 %v505, %v504
      %v512 = vpack.c.b16 %v507, %v506
      %v513 = vpack.c.b16 %v509, %v508
      %v519 = vunpack.c.l.b16 %v489
      %v520 = vunpack.c.l.b16 %v490
      %v521 = vunpack.c.l.b16 %v491
      %v522 = vunpack.c.l.b16 %v492
      %v523 = vunpack.c.l.b16 %v493
      %v524 = vpack.c.b16 %v520, %v519
      %v525 = vpack.c.b16 %v522, %v521
      %v526 = vpack.c.b16 %v523, %v523
      %v530 = vsel %vm282, %v510, 0
      %v533 = vsel %vm282, %v511, 0
      %v536 = vsel %vm282, %v512, 0
      %v539 = vsel %vm282, %v513, 0
      %v542 = vsel %vm295, %v526, 0
      %544 = vmatprep.subr.bf16.mxu0 0
      %545 = vmatpush1.bf16.msra.mxu0 %v524
      %546 = vmatprep.subr.bf16.mxu0 0
      %547 = vmatpush1.bf16.msra.mxu0 %v525
      %548 = vmatprep.subr.bf16.mxu0 0
      %549 = vmatpush1.bf16.msra.mxu0 %v542
      %550 = vmatprep.subr.bf16.mxu0 0
      %551 = vmatpush1.bf16.msra.mxu0 0
      %552 = vmatprep.subr.bf16.mxu0 0
      %553 = vmatpush1.bf16.msra.mxu0 0
      %554 = vmatprep.subr.bf16.mxu0 0
      %555 = vmatpush1.bf16.msra.mxu0 0
      %556 = vmatprep.subr.bf16.mxu0 0
      %557 = vmatpush1.bf16.msra.mxu0 0
      %558 = vmatprep.subr.bf16.mxu0 0
      %559 = vmatpush1.bf16.msra.mxu0 0
      %560 = vmatprep.subr.bf16.mxu0 0
      %561 = vmatpush1.bf16.msra.mxu0 0
      %562 = vmatprep.subr.bf16.mxu0 0
      %563 = vmatpush1.bf16.msra.mxu0 0
      %564 = vmatprep.subr.bf16.mxu0 0
      %565 = vmatpush1.bf16.msra.mxu0 0
      %566 = vmatprep.subr.bf16.mxu0 0
      %567 = vmatpush1.bf16.msra.mxu0 0
      %568 = vmatprep.subr.bf16.mxu0 0
      %569 = vmatpush1.bf16.msra.mxu0 0
      %570 = vmatprep.subr.bf16.mxu0 0
      %571 = vmatpush1.bf16.msra.mxu0 0
      %572 = vmatprep.subr.bf16.mxu0 0
      %573 = vmatpush1.bf16.msra.mxu0 0
      %574 = vmatprep.subr.bf16.mxu0 0
      %575 = vmatpush1.bf16.msra.mxu0 0
      %576 = vmatprep.mubr.bf16.mxu0 0
      %577 = vmatmul.mubr.bf16.gmra.mrb[0].mxu0 %v530
      %v578 = vpop.f32.mrb[0].mxu0
      %v579 = vadd.f32 0.0, %v578
      %v580 = vpop.f32.mrb[0].mxu0
      %v581 = vpop.f32.mrb[0].mxu0
      %v582 = vadd.f32 0.0, %v581
      %v583 = vpop.f32.mrb[0].mxu0
      %584 = vmatprep.mubr.bf16.mxu0 0
      %585 = vmatmul.mubr.bf16.gmra.mrb[0].mxu0 %v533
      %v586 = vpop.f32.mrb[0].mxu0
      %v587 = vadd.f32 0.0, %v586
      %v588 = vpop.f32.mrb[0].mxu0
      %v589 = vpop.f32.mrb[0].mxu0
      %v590 = vadd.f32 0.0, %v589
      %v591 = vpop.f32.mrb[0].mxu0
      %592 = vmatprep.mubr.bf16.mxu0 0
      %593 = vmatmul.mubr.bf16.gmra.mrb[0].mxu0 %v536
      %v594 = vpop.f32.mrb[0].mxu0
      %v595 = vadd.f32 0.0, %v594
      %v596 = vpop.f32.mrb[0].mxu0
      %v597 = vpop.f32.mrb[0].mxu0
      %v598 = vadd.f32 0.0, %v597
      %v599 = vpop.f32.mrb[0].mxu0
      %600 = vmatprep.mubr.bf16.mxu0 0
      %601 = vmatmul.mubr.bf16.gmra.mrb[0].mxu0 %v539
      %v602 = vpop.f32.mrb[0].mxu0
      %v603 = vadd.f32 0.0, %v602
      %v604 = vpop.f32.mrb[0].mxu0
      %v605 = vpop.f32.mrb[0].mxu0
      %v606 = vadd.f32 0.0, %v605
      %v607 = vpop.f32.mrb[0].mxu0
      %608 = vdwg.mxu0
      %v609 = vadd.f32 %v449, %v579
      %v610 = vadd.f32 %v452, %v582
      %v611 = vadd.f32 %v457, %v587
      %v612 = vadd.f32 %v460, %v590
      %v613 = vadd.f32 %v465, %v595
      %v614 = vadd.f32 %v468, %v598
      %v615 = vadd.f32 %v473, %v603
      %v616 = vadd.f32 %v476, %v606
      %s617 = scalar_lea.vmem %s212, 4
      %v618 = vld [vmem:[%s617] sm:$0xf]
      %v619 = vld [vmem:[%s617 + $0x4] sm:$0xf]
      %v620 = vld [vmem:[%s617 + $0x8] sm:$0xf]
      %v621 = vld [vmem:[%s617 + $0xc] sm:$0xf]
      %v622 = vld [vmem:[%s617 + $0x10] sm:$0xf]
      %v623 = vld [vmem:[%s617 + $0x14] sm:$0xf]
      %v624 = vld [vmem:[%s617 + $0x18] sm:$0xf]
      %v625 = vld [vmem:[%s617 + $0x1c] sm:$0xf]
      %s626 = scalar_lea.vmem %s2, 60
      %v627 = vld [vmem:[%s626] sm:$0xf]
      %v628 = vld [vmem:[%s626 + $0x4] sm:$0xf]
      %v629 = vld [vmem:[%s626 + $0x8] sm:$0xf]
      %v630 = vld [vmem:[%s626 + $0xc] sm:$0xf]
      %v631 = vld [vmem:[%s626 + $0x10] sm:$0x3]
      %v640 = vunpack.c.l.b16 %v618
      %v641 = vunpack.c.l.b16 %v619
      %v642 = vunpack.c.l.b16 %v620
      %v643 = vunpack.c.l.b16 %v621
      %v644 = vunpack.c.l.b16 %v622
      %v645 = vunpack.c.l.b16 %v623
      %v646 = vunpack.c.l.b16 %v624
      %v647 = vunpack.c.l.b16 %v625
      %v648 = vpack.c.b16 %v641, %v640
      %v649 = vpack.c.b16 %v643, %v642
      %v650 = vpack.c.b16 %v645, %v644
      %v651 = vpack.c.b16 %v647, %v646
      %v657 = vunpack.c.l.b16 %v627
      %v658 = vunpack.c.l.b16 %v628
      %v659 = vunpack.c.l.b16 %v629
      %v660 = vunpack.c.l.b16 %v630
      %v661 = vunpack.c.l.b16 %v631
      %v662 = vpack.c.b16 %v658, %v657
      %v663 = vpack.c.b16 %v660, %v659
      %v664 = vpack.c.b16 %v661, %v661
      %v668 = vsel %vm282, %v648, 0
      %v671 = vsel %vm282, %v649, 0
      %v674 = vsel %vm282, %v650, 0
      %v677 = vsel %vm282, %v651, 0
      %v680 = vsel %vm295, %v664, 0
      %682 = vmatprep.subr.bf16.mxu0 0
      %683 = vmatpush1.bf16.msra.mxu0 %v662
      %684 = vmatprep.subr.bf16.mxu0 0
      %685 = vmatpush1.bf16.msra.mxu0 %v663
      %686 = vmatprep.subr.bf16.mxu0 0
      %687 = vmatpush1.bf16.msra.mxu0 %v680
      %688 = vmatprep.subr.bf16.mxu0 0
      %689 = vmatpush1.bf16.msra.mxu0 0
      %690 = vmatprep.subr.bf16.mxu0 0
      %691 = vmatpush1.bf16.msra.mxu0 0
      %692 = vmatprep.subr.bf16.mxu0 0
      %693 = vmatpush1.bf16.msra.mxu0 0
      %694 = vmatprep.subr.bf16.mxu0 0
      %695 = vmatpush1.bf16.msra.mxu0 0
      %696 = vmatprep.subr.bf16.mxu0 0
      %697 = vmatpush1.bf16.msra.mxu0 0
      %698 = vmatprep.subr.bf16.mxu0 0
      %699 = vmatpush1.bf16.msra.mxu0 0
      %700 = vmatprep.subr.bf16.mxu0 0
      %701 = vmatpush1.bf16.msra.mxu0 0
      %702 = vmatprep.subr.bf16.mxu0 0
      %703 = vmatpush1.bf16.msra.mxu0 0
      %704 = vmatprep.subr.bf16.mxu0 0
      %705 = vmatpush1.bf16.msra.mxu0 0
      %706 = vmatprep.subr.bf16.mxu0 0
      %707 = vmatpush1.bf16.msra.mxu0 0
      %708 = vmatprep.subr.bf16.mxu0 0
      %709 = vmatpush1.bf16.msra.mxu0 0
      %710 = vmatprep.subr.bf16.mxu0 0
      %711 = vmatpush1.bf16.msra.mxu0 0
      %712 = vmatprep.subr.bf16.mxu0 0
      %713 = vmatpush1.bf16.msra.mxu0 0
      %714 = vmatprep.mubr.bf16.mxu0 0
      %715 = vmatmul.mubr.bf16.gmra.mrb[0].mxu0 %v668
      %v716 = vpop.f32.mrb[0].mxu0
      %v717 = vadd.f32 0.0, %v716
      %v718 = vpop.f32.mrb[0].mxu0
      %v719 = vpop.f32.mrb[0].mxu0
      %v720 = vadd.f32 0.0, %v719
      %v721 = vpop.f32.mrb[0].mxu0
      %722 = vmatprep.mubr.bf16.mxu0 0
      %723 = vmatmul.mubr.bf16.gmra.mrb[0].mxu0 %v671
      %v724 = vpop.f32.mrb[0].mxu0
      %v725 = vadd.f32 0.0, %v724
      %v726 = vpop.f32.mrb[0].mxu0
      %v727 = vpop.f32.mrb[0].mxu0
      %v728 = vadd.f32 0.0, %v727
      %v729 = vpop.f32.mrb[0].mxu0
      %730 = vmatprep.mubr.bf16.mxu0 0
      %731 = vmatmul.mubr.bf16.gmra.mrb[0].mxu0 %v674
      %v732 = vpop.f32.mrb[0].mxu0
      %v733 = vadd.f32 0.0, %v732
      %v734 = vpop.f32.mrb[0].mxu0
      %v735 = vpop.f32.mrb[0].mxu0
      %v736 = vadd.f32 0.0, %v735
      %v737 = vpop.f32.mrb[0].mxu0
      %738 = vmatprep.mubr.bf16.mxu0 0
      %739 = vmatmul.mubr.bf16.gmra.mrb[0].mxu0 %v677
      %v740 = vpop.f32.mrb[0].mxu0
      %v741 = vadd.f32 0.0, %v740
      %v742 = vpop.f32.mrb[0].mxu0
      %v743 = vpop.f32.mrb[0].mxu0
      %v744 = vadd.f32 0.0, %v743
      %v745 = vpop.f32.mrb[0].mxu0
      %746 = vdwg.mxu0
      %v747 = vadd.f32 %v609, %v717
      %v748 = vadd.f32 %v610, %v720
      %v749 = vadd.f32 %v611, %v725
      %v750 = vadd.f32 %v612, %v728
      %v751 = vadd.f32 %v613, %v733
      %v752 = vadd.f32 %v614, %v736
      %v753 = vadd.f32 %v615, %v741
      %v754 = vadd.f32 %v616, %v744
      %v755 = vld [vmem:[%s3] sm:$0x1]
      %v757 = vlaneseq
      %v758 = vshrl.u32 %v757, 7
      %v759 = vsub.s32 0, %v758
      %v760 = vrot.slane %v755, %v759
      %v762 = vadd.f32 %v747, %v760
      %v763 = vadd.f32 %v748, %v760
      %v764 = vadd.f32 %v749, %v760
      %v765 = vadd.f32 %v750, %v760
      %v766 = vadd.f32 %v751, %v760
      %v767 = vadd.f32 %v752, %v760
      %v768 = vadd.f32 %v753, %v760
      %v769 = vadd.f32 %v754, %v760
      %vm770 = vcmp.gt.f32.partialorder %v762, 0.0
      %vm771 = vcmp.gt.f32.partialorder %v763, 0.0
      %vm772 = vcmp.gt.f32.partialorder %v764, 0.0
      %vm773 = vcmp.gt.f32.partialorder %v765, 0.0
      %vm774 = vcmp.gt.f32.partialorder %v766, 0.0
      %vm775 = vcmp.gt.f32.partialorder %v767, 0.0
      %vm776 = vcmp.gt.f32.partialorder %v768, 0.0
      %vm777 = vcmp.gt.f32.partialorder %v769, 0.0
      %v778 = vmul.f32 %v762, 0.2
      %v779 = vmul.f32 %v763, 0.2
      %v780 = vmul.f32 %v764, 0.2
      %v781 = vmul.f32 %v765, 0.2
      %v782 = vmul.f32 %v766, 0.2
      %v783 = vmul.f32 %v767, 0.2
      %v784 = vmul.f32 %v768, 0.2
      %v785 = vmul.f32 %v769, 0.2
      %v786 = vsel %vm770, %v762, %v778
      %v787 = vsel %vm771, %v763, %v779
      %v788 = vsel %vm772, %v764, %v780
      %v789 = vsel %vm773, %v765, %v781
      %v790 = vsel %vm774, %v766, %v782
      %v791 = vsel %vm775, %v767, %v783
      %v792 = vsel %vm776, %v768, %v784
      %v793 = vsel %vm777, %v769, %v785
      %v794 = vpack.c.bf16 %v787, %v786
      %v795 = vpack.c.bf16 %v789, %v788
      %v796 = vpack.c.bf16 %v791, %v790
      %v797 = vpack.c.bf16 %v793, %v792
      %v802 = vunpack.c.l.b16 %v794
      %v803 = vunpack.c.h.b16 %v794
      %v804 = vunpack.c.l.b16 %v795
      %v805 = vunpack.c.h.b16 %v795
      %v806 = vunpack.c.l.b16 %v796
      %v807 = vunpack.c.h.b16 %v796
      %v808 = vunpack.c.l.b16 %v797
      %v809 = vunpack.c.h.b16 %v797
      %v810 = vpack.c.b16 %v802, %v802
      %v811 = vpack.c.b16 %v803, %v803
      %v812 = vpack.c.b16 %v804, %v804
      %v813 = vpack.c.b16 %v805, %v805
      %v814 = vpack.c.b16 %v806, %v806
      %v815 = vpack.c.b16 %v807, %v807
      %v816 = vpack.c.b16 %v808, %v808
      %v817 = vpack.c.b16 %v809, %v809
      %vm826 = vcmask 125952
      %827 = vst.msk [vmem:[%s217] sm:$0xf] %vm826, %v810
      %828 = vst.msk [vmem:[%s217 + $0x4] sm:$0xf] %vm826, %v811
      %829 = vst.msk [vmem:[%s217 + $0x8] sm:$0xf] %vm826, %v812
      %830 = vst.msk [vmem:[%s217 + $0xc] sm:$0xf] %vm826, %v813
      %831 = vst.msk [vmem:[%s217 + $0x10] sm:$0xf] %vm826, %v814
      %832 = vst.msk [vmem:[%s217 + $0x14] sm:$0xf] %vm826, %v815
      %833 = vst.msk [vmem:[%s217 + $0x18] sm:$0xf] %vm826, %v816
      %834 = vst.msk [vmem:[%s217 + $0x1c] sm:$0xf] %vm826, %v817
      %s835 = smul.u32 8, %s15
      %p836 = scmp.lt.s32.totalorder %s835, 15
      %s837 = scalar_select %p836, %s835, 15
      %s838 = smul.addr %s837, 4
      %s839 = scalar_lea.vmem %s4, %s838
      // Predicated region
      $region37: #{object_encoder_v4_forward.12} parent=35 // pred_check
        %p840 = pneg %p127
      $region38: #{object_encoder_v4_forward.12} parent=35 // pred_check_branch
        %842 = sbr.rel (%p840) target = $region40
      $region39: #{object_encoder_v4_forward.12} parent=35 // pred_region
        %s843 = smul.u32 8, %s15
      $region40: #{object_encoder_v4_forward.12} parent=35 // pred_fallthru
        _
    $region36: #{object_encoder_v4_forward.12} parent=5 // pred_fallthru
      _
    %p844 = scmp.le.s32.totalorder 2, %s10
    // Predicated region
    $region41: #{object_encoder_v4_forward.12} parent=5 // pred_check
      %p845 = pneg %p844
    $region42: #{object_encoder_v4_forward.12} parent=5 // pred_check_branch
      %847 = sbr.rel (%p845) target = $region44
    $region43: #{object_encoder_v4_forward.12} parent=5 // pred_region
      %s848 = ssub.s32 %s10, 2
      // Predicated region
      $region45: #{object_encoder_v4_forward.12} parent=43 // pred_check
        %p849 = pneg %p133
      $region46: #{object_encoder_v4_forward.12} parent=43 // pred_check_branch
        %851 = sbr.rel (%p849) target = $region48
      $region47: #{object_encoder_v4_forward.12} parent=43 // pred_region
        %s852 = smul.u32 8, %s16
        %p853 = scmp.lt.s32.totalorder %s852, 15
        %s854 = scalar_select %p853, %s852, 15
        %s855 = smul.addr %s854, 4
        %s856 = scalar_lea.vmem %s4, %s855
      $region48: #{object_encoder_v4_forward.12} parent=43 // pred_fallthru
        _
    $region44: #{object_encoder_v4_forward.12} parent=5 // pred_fallthru
      _
  $region6: #{object_encoder_v4_forward.12} parent=0 // loop_footer
    %s14 = sadd.s32 1, %s10
  $region7: #{object_encoder_v4_forward.12} parent=0 // loop_footer_branch
    %9 = sbr.rel target = $region3
  $region8: #{object_encoder_v4_forward.12} parent=0 // loop_exit
    _

// kernel: object_encoder_v4_forward.13
$region0: #{object_encoder_v4_forward.13}
  #allocation0 [shape = 'u32[]', space=smem, size = 0x4, offset = 0x4, fixed_abs, tag = 'smem constant byte address 0x4 - core index']
  #allocation1 [shape = 'u32[144,128]{1,0:T(1,128)}', space=vmem, size = 0x12000, scoped, tag = 'internal scratch']
  %s0 = inlined_call_operand.vmem [shape: bf16[2,10,8,48], index: 0, kind: input, shape index: {}]
  %s1 = inlined_call_operand.vmem [shape: bf16[3,48,17], index: 1, kind: input, shape index: {}]
  %s2 = inlined_call_operand.vmem [shape: f32[1,17], index: 2, kind: input, shape index: {}]
  %s3 = inlined_call_operand.vmem [shape: bf16[128,17], index: 3, kind: output, shape index: {}]
  %s4 = sld [smem:[#allocation0]]
  $region45: #{object_encoder_v4_forward.13} parent=0
    _
  %s6 = ssub.s32 1, %s4
  %s7 = scalar_select 0, %s6, %s4
  loop: start=0, step=1, limit=4
  $region2: #{object_encoder_v4_forward.13} parent=0 // loop_pre_header
    _
  $region3: #{object_encoder_v4_forward.13} parent=0 // loop_header
    %s9 = sphi 0, %s13
    %p10 = scmp.ge.s32.totalorder %s9, 4
    %s19 = sphi 0, %s21
    %s22 = sphi 0, %s19
    %s23 = sphi 0, %s22
    %s39 = sphi 0, %s23
    %s43 = sphi 0, %s43
    %s45 = sphi 0, %s43
    %s46 = sphi 0, %s45
    %s60 = sphi 0, %s46
    %s64 = sphi 0, %s64
    %s66 = sphi 0, %s64
    %s67 = sphi 0, %s66
    %s81 = sphi 0, %s67
    %s87 = sphi 0, %s89
    %s90 = sphi 0, %s87
    %s91 = sphi 0, %s90
    %s107 = sphi 0, %s91
  $region4: #{object_encoder_v4_forward.13} parent=0 // loop_header_branch
    %12 = sbr.rel (%p10) target = $region8
  $region5: #{object_encoder_v4_forward.13} parent=0 // loop_body
    %s14 = ssub.s32 %s9, 1
    %s15 = ssub.s32 %s9, 2
    %s16 = sadd.s32 %s9, 1
    %s17 = ssub.s32 %s9, %s16
    %p18 = scmp.eq.s32.totalorder %s17, 0
    %s20 = sadd.s32 %s19, 1
    %s21 = scalar_select %p18, %s19, %s20
    %p24 = pneg %p18
    %p25 = scmp.eq.s32.totalorder %s9, 1
    %p26 = por %p24, %p25
    %p27 = scmp.ne.s32.totalorder %s19, %s22
    %p28 = scmp.eq.s32.totalorder %s9, 0
    %p29 = por %p27, %p28
    %p30 = scmp.ne.s32.totalorder %s19, %s22
    %p31 = scmp.eq.s32.totalorder %s14, 1
    %p32 = por %p30, %p31
    %p33 = scmp.ne.s32.totalorder %s22, %s23
    %p34 = scmp.eq.s32.totalorder %s14, 0
    %p35 = por %p33, %p34
    %p36 = scmp.ne.s32.totalorder %s22, %s23
    %p37 = scmp.eq.s32.totalorder %s15, 1
    %p38 = por %p36, %p37
    %p40 = scmp.ne.s32.totalorder %s23, %s39
    %p41 = scmp.eq.s32.totalorder %s15, 0
    %p42 = por %p40, %p41
    %s44 = sadd.s32 %s43, 1
    %p47 = scmp.eq.s32.totalorder %s9, 1
    %p48 = scmp.ne.s32.totalorder %s43, %s45
    %p49 = scmp.eq.s32.totalorder %s9, 0
    %p50 = por %p48, %p49
    %p51 = scmp.ne.s32.totalorder %s43, %s45
    %p52 = scmp.eq.s32.totalorder %s14, 1
    %p53 = por %p51, %p52
    %p54 = scmp.ne.s32.totalorder %s45, %s46
    %p55 = scmp.eq.s32.totalorder %s14, 0
    %p56 = por %p54, %p55
    %p57 = scmp.ne.s32.totalorder %s45, %s46
    %p58 = scmp.eq.s32.totalorder %s15, 1
    %p59 = por %p57, %p58
    %p61 = scmp.ne.s32.totalorder %s46, %s60
    %p62 = scmp.eq.s32.totalorder %s15, 0
    %p63 = por %p61, %p62
    %s65 = sadd.s32 %s64, 1
    %p68 = scmp.eq.s32.totalorder %s9, 1
    %p69 = scmp.ne.s32.totalorder %s64, %s66
    %p70 = scmp.eq.s32.totalorder %s9, 0
    %p71 = por %p69, %p70
    %p72 = scmp.ne.s32.totalorder %s64, %s66
    %p73 = scmp.eq.s32.totalorder %s14, 1
    %p74 = por %p72, %p73
    %p75 = scmp.ne.s32.totalorder %s66, %s67
    %p76 = scmp.eq.s32.totalorder %s14, 0
    %p77 = por %p75, %p76
    %p78 = scmp.ne.s32.totalorder %s66, %s67
    %p79 = scmp.eq.s32.totalorder %s15, 1
    %p80 = por %p78, %p79
    %p82 = scmp.ne.s32.totalorder %s67, %s81
    %p83 = scmp.eq.s32.totalorder %s15, 0
    %p84 = por %p82, %p83
    %s85 = ssub.s32 %s9, %s16
    %p86 = scmp.eq.s32.totalorder %s85, 0
    %s88 = sadd.s32 %s87, 1
    %s89 = scalar_select %p86, %s87, %s88
    %p92 = pneg %p86
    %p93 = scmp.eq.s32.totalorder %s9, 1
    %p94 = por %p92, %p93
    %p95 = scmp.ne.s32.totalorder %s87, %s90
    %p96 = scmp.eq.s32.totalorder %s9, 0
    %p97 = por %p95, %p96
    %p98 = scmp.ne.s32.totalorder %s87, %s90
    %p99 = scmp.eq.s32.totalorder %s14, 1
    %p100 = por %p98, %p99
    %p101 = scmp.ne.s32.totalorder %s90, %s91
    %p102 = scmp.eq.s32.totalorder %s14, 0
    %p103 = por %p101, %p102
    %p104 = scmp.ne.s32.totalorder %s90, %s91
    %p105 = scmp.eq.s32.totalorder %s15, 1
    %p106 = por %p104, %p105
    %p108 = scmp.ne.s32.totalorder %s91, %s107
    %p109 = scmp.eq.s32.totalorder %s15, 0
    %p110 = por %p108, %p109
    %p111 = scmp.le.s32.totalorder 1, %s9
    %p112 = scmp.lt.s32.totalorder %s9, 3
    %p113 = pnand %p111, %p112
    %p114 = pneg %p113
    // Predicated region
    $region9: #{object_encoder_v4_forward.13} parent=5 // pred_check
      _
    $region10: #{object_encoder_v4_forward.13} parent=5 // pred_check_branch
      %116 = sbr.rel (%p113) target = $region12
    $region11: #{object_encoder_v4_forward.13} parent=5 // pred_region
      %s117 = ssub.s32 %s9, 1
      // Predicated region
      $region13: #{object_encoder_v4_forward.13} parent=11 // pred_check
        %p118 = pneg %p56
      $region14: #{object_encoder_v4_forward.13} parent=11 // pred_check_branch
        %120 = sbr.rel (%p118) target = $region16
      $region15: #{object_encoder_v4_forward.13} parent=11 // pred_region
        _
      $region16: #{object_encoder_v4_forward.13} parent=11 // pred_fallthru
        _
      // Predicated region
      $region17: #{object_encoder_v4_forward.13} parent=11 // pred_check
        %p121 = pneg %p77
      $region18: #{object_encoder_v4_forward.13} parent=11 // pred_check_branch
        %123 = sbr.rel (%p121) target = $region20
      $region19: #{object_encoder_v4_forward.13} parent=11 // pred_region
        _
      $region20: #{object_encoder_v4_forward.13} parent=11 // pred_fallthru
        _
    $region12: #{object_encoder_v4_forward.13} parent=5 // pred_fallthru
      _
    %p124 = scmp.lt.s32.totalorder %s9, 2
    // Predicated region
    $region21: #{object_encoder_v4_forward.13} parent=5 // pred_check
      %p125 = pneg %p124
    $region22: #{object_encoder_v4_forward.13} parent=5 // pred_check_branch
      %127 = sbr.rel (%p125) target = $region24
    $region23: #{object_encoder_v4_forward.13} parent=5 // pred_region
      // Predicated region
      $region25: #{object_encoder_v4_forward.13} parent=23 // pred_check
        %p128 = pneg %p29
      $region26: #{object_encoder_v4_forward.13} parent=23 // pred_check_branch
        %130 = sbr.rel (%p128) target = $region28
      $region27: #{object_encoder_v4_forward.13} parent=23 // pred_region
        %p131 = scmp.lt.s32.totalorder %s9, 1
        %s132 = scalar_select %p131, %s9, 1
        %s133 = smul.addr %s132, 10
        %s134 = smul.addr %s133, 4
        %s135 = scalar_lea.vmem %s0, %s134
      $region28: #{object_encoder_v4_forward.13} parent=23 // pred_fallthru
        _
    $region24: #{object_encoder_v4_forward.13} parent=5 // pred_fallthru
      _
    %p136 = scmp.le.s32.totalorder 1, %s9
    %p137 = scmp.lt.s32.totalorder %s9, 3
    %p138 = pnand %p136, %p137
    %p139 = pneg %p138
    // Predicated region
    $region29: #{object_encoder_v4_forward.13} parent=5 // pred_check
      _
    $region30: #{object_encoder_v4_forward.13} parent=5 // pred_check_branch
      %141 = sbr.rel (%p138) target = $region32
    $region31: #{object_encoder_v4_forward.13} parent=5 // pred_region
      %s142 = ssub.s32 %s9, 1
      %p143 = scmp.lt.s32.totalorder %s14, 1
      %s144 = scalar_select %p143, %s14, 1
      %s145 = smul.addr %s144, 10
      %s146 = smul.addr %s145, 4
      %s147 = scalar_lea.vmem %s0, %s146
      %p148 = pneg %p35
      %p149 = pneg %p32
      %p150 = pneg %p56
      %p151 = pneg %p53
      %p152 = pneg %p77
      %p153 = pneg %p74
      %p154 = pneg %p103
      %p155 = pneg %p100
      %s156 = smul.u32 8, %s14
      %p157 = scmp.lt.s32.totalorder %s156, 15
      %s158 = scalar_select %p157, %s156, 15
      %s159 = smul.addr %s158, 4
      %s160 = scalar_lea.vmem %s3, %s159
      %p161 = scmp.lt.s32.totalorder %s14, 1
      %s162 = scalar_select %p161, %s14, 1
      %s163 = smul.addr %s162, 10
      %s164 = smul.addr %s163, 4
      %s165 = scalar_lea.vmem %s0, %s164
      %s166 = smul.u32 8, %s14
      %p167 = scmp.lt.s32.totalorder %s166, 15
      %s168 = scalar_select %p167, %s166, 15
      %s169 = smul.addr %s168, 4
      %s170 = scalar_lea.vmem %s3, %s169
      %s171 = smul.u32 8, %s14
      %v173 = vld [vmem:[%s165] sm:$0xf]
      %v174 = vld [vmem:[%s165 + $0x4] sm:$0xf]
      %v175 = vld [vmem:[%s165 + $0x8] sm:$0xf]
      %v176 = vld [vmem:[%s165 + $0xc] sm:$0xf]
      %v177 = vld [vmem:[%s165 + $0x10] sm:$0xf]
      %v178 = vld [vmem:[%s165 + $0x14] sm:$0xf]
      %v179 = vld [vmem:[%s165 + $0x18] sm:$0xf]
      %v180 = vld [vmem:[%s165 + $0x1c] sm:$0xf]
      %v181 = vld [vmem:[%s1] sm:$0xf]
      %v182 = vld [vmem:[%s1 + $0x4] sm:$0xf]
      %v183 = vld [vmem:[%s1 + $0x8] sm:$0xf]
      %v184 = vld [vmem:[%s1 + $0xc] sm:$0xf]
      %v185 = vld [vmem:[%s1 + $0x10] sm:$0xf]
      %v186 = vld [vmem:[%s1 + $0x14] sm:$0xf]
      %s187 = scalar_lea.vmem %s165, 4
      %v188 = vld [vmem:[%s187] sm:$0xf]
      %v189 = vld [vmem:[%s187 + $0x4] sm:$0xf]
      %v190 = vld [vmem:[%s187 + $0x8] sm:$0xf]
      %v191 = vld [vmem:[%s187 + $0xc] sm:$0xf]
      %v192 = vld [vmem:[%s187 + $0x10] sm:$0xf]
      %v193 = vld [vmem:[%s187 + $0x14] sm:$0xf]
      %v194 = vld [vmem:[%s187 + $0x18] sm:$0xf]
      %v195 = vld [vmem:[%s187 + $0x1c] sm:$0xf]
      %s196 = scalar_lea.vmem %s1, 24
      %v197 = vld [vmem:[%s196] sm:$0xf]
      %v198 = vld [vmem:[%s196 + $0x4] sm:$0xf]
      %v199 = vld [vmem:[%s196 + $0x8] sm:$0xf]
      %v200 = vld [vmem:[%s196 + $0xc] sm:$0xf]
      %v201 = vld [vmem:[%s196 + $0x10] sm:$0xf]
      %v202 = vld [vmem:[%s196 + $0x14] sm:$0xf]
      %v211 = vunpack.c.l.b16 %v188
      %v212 = vunpack.c.l.b16 %v189
      %v213 = vunpack.c.l.b16 %v190
      %v214 = vunpack.c.l.b16 %v191
      %v215 = vunpack.c.l.b16 %v192
      %v216 = vunpack.c.l.b16 %v193
      %v217 = vunpack.c.l.b16 %v194
      %v218 = vunpack.c.l.b16 %v195
      %v219 = vpack.c.b16 %v212, %v211
      %v220 = vpack.c.b16 %v214, %v213
      %v221 = vpack.c.b16 %v216, %v215
      %v222 = vpack.c.b16 %v218, %v217
      %v229 = vunpack.c.l.b16 %v197
      %v230 = vunpack.c.l.b16 %v198
      %v231 = vunpack.c.l.b16 %v199
      %v232 = vunpack.c.l.b16 %v200
      %v233 = vunpack.c.l.b16 %v201
      %v234 = vunpack.c.l.b16 %v202
      %v235 = vpack.c.b16 %v230, %v229
      %v236 = vpack.c.b16 %v232, %v231
      %v237 = vpack.c.b16 %v234, %v233
      %vm241 = vcmask 392192
      %v243 = vsel %vm241, %v219, 0
      %v246 = vsel %vm241, %v220, 0
      %v249 = vsel %vm241, %v221, 0
      %v252 = vsel %vm241, %v222, 0
      %254 = vmatprep.subr.bf16.mxu0 0
      %255 = vmatpush1.bf16.msra.mxu0 %v235
      %256 = vmatprep.subr.bf16.mxu0 0
      %257 = vmatpush1.bf16.msra.mxu0 %v236
      %258 = vmatprep.subr.bf16.mxu0 0
      %259 = vmatpush1.bf16.msra.mxu0 %v237
      %260 = vmatprep.subr.bf16.mxu0 0
      %261 = vmatpush1.bf16.msra.mxu0 0
      %262 = vmatprep.subr.bf16.mxu0 0
      %263 = vmatpush1.bf16.msra.mxu0 0
      %264 = vmatprep.subr.bf16.mxu0 0
      %265 = vmatpush1.bf16.msra.mxu0 0
      %266 = vmatprep.subr.bf16.mxu0 0
      %267 = vmatpush1.bf16.msra.mxu0 0
      %268 = vmatprep.subr.bf16.mxu0 0
      %269 = vmatpush1.bf16.msra.mxu0 0
      %270 = vmatprep.subr.bf16.mxu0 0
      %271 = vmatpush1.bf16.msra.mxu0 0
      %272 = vmatprep.subr.bf16.mxu0 0
      %273 = vmatpush1.bf16.msra.mxu0 0
      %274 = vmatprep.subr.bf16.mxu0 0
      %275 = vmatpush1.bf16.msra.mxu0 0
      %276 = vmatprep.subr.bf16.mxu0 0
      %277 = vmatpush1.bf16.msra.mxu0 0
      %278 = vmatprep.subr.bf16.mxu0 0
      %279 = vmatpush1.bf16.msra.mxu0 0
      %280 = vmatprep.subr.bf16.mxu0 0
      %281 = vmatpush1.bf16.msra.mxu0 0
      %282 = vmatprep.subr.bf16.mxu0 0
      %283 = vmatpush1.bf16.msra.mxu0 0
      %284 = vmatprep.subr.bf16.mxu0 0
      %285 = vmatpush1.bf16.msra.mxu0 0
      %286 = vmatprep.mubr.bf16.mxu0 0
      %287 = vmatmul.mubr.bf16.gmra.mrb[0].mxu0 %v243
      %v288 = vpop.f32.mrb[0].mxu0
      %v289 = vadd.f32 0.0, %v288
      %v290 = vpop.f32.mrb[0].mxu0
      %v291 = vpop.f32.mrb[0].mxu0
      %v292 = vadd.f32 0.0, %v291
      %v293 = vpop.f32.mrb[0].mxu0
      %294 = vmatprep.mubr.bf16.mxu0 0
      %295 = vmatmul.mubr.bf16.gmra.mrb[0].mxu0 %v246
      %v296 = vpop.f32.mrb[0].mxu0
      %v297 = vadd.f32 0.0, %v296
      %v298 = vpop.f32.mrb[0].mxu0
      %v299 = vpop.f32.mrb[0].mxu0
      %v300 = vadd.f32 0.0, %v299
      %v301 = vpop.f32.mrb[0].mxu0
      %302 = vmatprep.mubr.bf16.mxu0 0
      %303 = vmatmul.mubr.bf16.gmra.mrb[0].mxu0 %v249
      %v304 = vpop.f32.mrb[0].mxu0
      %v305 = vadd.f32 0.0, %v304
      %v306 = vpop.f32.mrb[0].mxu0
      %v307 = vpop.f32.mrb[0].mxu0
      %v308 = vadd.f32 0.0, %v307
      %v309 = vpop.f32.mrb[0].mxu0
      %310 = vmatprep.mubr.bf16.mxu0 0
      %311 = vmatmul.mubr.bf16.gmra.mrb[0].mxu0 %v252
      %v312 = vpop.f32.mrb[0].mxu0
      %v313 = vadd.f32 0.0, %v312
      %v314 = vpop.f32.mrb[0].mxu0
      %v315 = vpop.f32.mrb[0].mxu0
      %v316 = vadd.f32 0.0, %v315
      %v317 = vpop.f32.mrb[0].mxu0
      %318 = vdwg.mxu0
      %v327 = vunpack.c.l.b16 %v173
      %v328 = vunpack.c.l.b16 %v174
      %v329 = vunpack.c.l.b16 %v175
      %v330 = vunpack.c.l.b16 %v176
      %v331 = vunpack.c.l.b16 %v177
      %v332 = vunpack.c.l.b16 %v178
      %v333 = vunpack.c.l.b16 %v179
      %v334 = vunpack.c.l.b16 %v180
      %v335 = vpack.c.b16 %v328, %v327
      %v336 = vpack.c.b16 %v330, %v329
      %v337 = vpack.c.b16 %v332, %v331
      %v338 = vpack.c.b16 %v334, %v333
      %v345 = vunpack.c.l.b16 %v181
      %v346 = vunpack.c.l.b16 %v182
      %v347 = vunpack.c.l.b16 %v183
      %v348 = vunpack.c.l.b16 %v184
      %v349 = vunpack.c.l.b16 %v185
      %v350 = vunpack.c.l.b16 %v186
      %v351 = vpack.c.b16 %v346, %v345
      %v352 = vpack.c.b16 %v348, %v347
      %v353 = vpack.c.b16 %v350, %v349
      %v358 = vsel %vm241, %v335, 0
      %v361 = vsel %vm241, %v336, 0
      %v364 = vsel %vm241, %v337, 0
      %v367 = vsel %vm241, %v338, 0
      %369 = vmatprep.subr.bf16.mxu0 0
      %370 = vmatpush1.bf16.msra.mxu0 %v351
      %371 = vmatprep.subr.bf16.mxu0 0
      %372 = vmatpush1.bf16.msra.mxu0 %v352
      %373 = vmatprep.subr.bf16.mxu0 0
      %374 = vmatpush1.bf16.msra.mxu0 %v353
      %375 = vmatprep.subr.bf16.mxu0 0
      %376 = vmatpush1.bf16.msra.mxu0 0
      %377 = vmatprep.subr.bf16.mxu0 0
      %378 = vmatpush1.bf16.msra.mxu0 0
      %379 = vmatprep.subr.bf16.mxu0 0
      %380 = vmatpush1.bf16.msra.mxu0 0
      %381 = vmatprep.subr.bf16.mxu0 0
      %382 = vmatpush1.bf16.msra.mxu0 0
      %383 = vmatprep.subr.bf16.mxu0 0
      %384 = vmatpush1.bf16.msra.mxu0 0
      %385 = vmatprep.subr.bf16.mxu0 0
      %386 = vmatpush1.bf16.msra.mxu0 0
      %387 = vmatprep.subr.bf16.mxu0 0
      %388 = vmatpush1.bf16.msra.mxu0 0
      %389 = vmatprep.subr.bf16.mxu0 0
      %390 = vmatpush1.bf16.msra.mxu0 0
      %391 = vmatprep.subr.bf16.mxu0 0
      %392 = vmatpush1.bf16.msra.mxu0 0
      %393 = vmatprep.subr.bf16.mxu0 0
      %394 = vmatpush1.bf16.msra.mxu0 0
      %395 = vmatprep.subr.bf16.mxu0 0
      %396 = vmatpush1.bf16.msra.mxu0 0
      %397 = vmatprep.subr.bf16.mxu0 0
      %398 = vmatpush1.bf16.msra.mxu0 0
      %399 = vmatprep.subr.bf16.mxu0 0
      %400 = vmatpush1.bf16.msra.mxu0 0
      %401 = vmatprep.mubr.bf16.mxu0 0
      %402 = vmatmul.mubr.bf16.gmra.mrb[0].mxu0 %v358
      %v403 = vpop.f32.mrb[0].mxu0
      %v404 = vadd.f32 %v289, %v403
      %v405 = vpop.f32.mrb[0].mxu0
      %v406 = vpop.f32.mrb[0].mxu0
      %v407 = vadd.f32 %v292, %v406
      %v408 = vpop.f32.mrb[0].mxu0
      %409 = vmatprep.mubr.bf16.mxu0 0
      %410 = vmatmul.mubr.bf16.gmra.mrb[0].mxu0 %v361
      %v411 = vpop.f32.mrb[0].mxu0
      %v412 = vadd.f32 %v297, %v411
      %v413 = vpop.f32.mrb[0].mxu0
      %v414 = vpop.f32.mrb[0].mxu0
      %v415 = vadd.f32 %v300, %v414
      %v416 = vpop.f32.mrb[0].mxu0
      %417 = vmatprep.mubr.bf16.mxu0 0
      %418 = vmatmul.mubr.bf16.gmra.mrb[0].mxu0 %v364
      %v419 = vpop.f32.mrb[0].mxu0
      %v420 = vadd.f32 %v305, %v419
      %v421 = vpop.f32.mrb[0].mxu0
      %v422 = vpop.f32.mrb[0].mxu0
      %v423 = vadd.f32 %v308, %v422
      %v424 = vpop.f32.mrb[0].mxu0
      %425 = vmatprep.mubr.bf16.mxu0 0
      %426 = vmatmul.mubr.bf16.gmra.mrb[0].mxu0 %v367
      %v427 = vpop.f32.mrb[0].mxu0
      %v428 = vadd.f32 %v313, %v427
      %v429 = vpop.f32.mrb[0].mxu0
      %v430 = vpop.f32.mrb[0].mxu0
      %v431 = vadd.f32 %v316, %v430
      %v432 = vpop.f32.mrb[0].mxu0
      %433 = vdwg.mxu0
      %s434 = scalar_lea.vmem %s165, 8
      %v435 = vld [vmem:[%s434] sm:$0xf]
      %v436 = vld [vmem:[%s434 + $0x4] sm:$0xf]
      %v437 = vld [vmem:[%s434 + $0x8] sm:$0xf]
      %v438 = vld [vmem:[%s434 + $0xc] sm:$0xf]
      %v439 = vld [vmem:[%s434 + $0x10] sm:$0xf]
      %v440 = vld [vmem:[%s434 + $0x14] sm:$0xf]
      %v441 = vld [vmem:[%s434 + $0x18] sm:$0xf]
      %v442 = vld [vmem:[%s434 + $0x1c] sm:$0xf]
      %s443 = scalar_lea.vmem %s1, 48
      %v444 = vld [vmem:[%s443] sm:$0xf]
      %v445 = vld [vmem:[%s443 + $0x4] sm:$0xf]
      %v446 = vld [vmem:[%s443 + $0x8] sm:$0xf]
      %v447 = vld [vmem:[%s443 + $0xc] sm:$0xf]
      %v448 = vld [vmem:[%s443 + $0x10] sm:$0xf]
      %v449 = vld [vmem:[%s443 + $0x14] sm:$0xf]
      %v458 = vunpack.c.l.b16 %v435
      %v459 = vunpack.c.l.b16 %v436
      %v460 = vunpack.c.l.b16 %v437
      %v461 = vunpack.c.l.b16 %v438
      %v462 = vunpack.c.l.b16 %v439
      %v463 = vunpack.c.l.b16 %v440
      %v464 = vunpack.c.l.b16 %v441
      %v465 = vunpack.c.l.b16 %v442
      %v466 = vpack.c.b16 %v459, %v458
      %v467 = vpack.c.b16 %v461, %v460
      %v468 = vpack.c.b16 %v463, %v462
      %v469 = vpack.c.b16 %v465, %v464
      %v476 = vunpack.c.l.b16 %v444
      %v477 = vunpack.c.l.b16 %v445
      %v478 = vunpack.c.l.b16 %v446
      %v479 = vunpack.c.l.b16 %v447
      %v480 = vunpack.c.l.b16 %v448
      %v481 = vunpack.c.l.b16 %v449
      %v482 = vpack.c.b16 %v477, %v476
      %v483 = vpack.c.b16 %v479, %v478
      %v484 = vpack.c.b16 %v481, %v480
      %v489 = vsel %vm241, %v466, 0
      %v492 = vsel %vm241, %v467, 0
      %v495 = vsel %vm241, %v468, 0
      %v498 = vsel %vm241, %v469, 0
      %500 = vmatprep.subr.bf16.mxu0 0
      %501 = vmatpush1.bf16.msra.mxu0 %v482
      %502 = vmatprep.subr.bf16.mxu0 0
      %503 = vmatpush1.bf16.msra.mxu0 %v483
      %504 = vmatprep.subr.bf16.mxu0 0
      %505 = vmatpush1.bf16.msra.mxu0 %v484
      %506 = vmatprep.subr.bf16.mxu0 0
      %507 = vmatpush1.bf16.msra.mxu0 0
      %508 = vmatprep.subr.bf16.mxu0 0
      %509 = vmatpush1.bf16.msra.mxu0 0
      %510 = vmatprep.subr.bf16.mxu0 0
      %511 = vmatpush1.bf16.msra.mxu0 0
      %512 = vmatprep.subr.bf16.mxu0 0
      %513 = vmatpush1.bf16.msra.mxu0 0
      %514 = vmatprep.subr.bf16.mxu0 0
      %515 = vmatpush1.bf16.msra.mxu0 0
      %516 = vmatprep.subr.bf16.mxu0 0
      %517 = vmatpush1.bf16.msra.mxu0 0
      %518 = vmatprep.subr.bf16.mxu0 0
      %519 = vmatpush1.bf16.msra.mxu0 0
      %520 = vmatprep.subr.bf16.mxu0 0
      %521 = vmatpush1.bf16.msra.mxu0 0
      %522 = vmatprep.subr.bf16.mxu0 0
      %523 = vmatpush1.bf16.msra.mxu0 0
      %524 = vmatprep.subr.bf16.mxu0 0
      %525 = vmatpush1.bf16.msra.mxu0 0
      %526 = vmatprep.subr.bf16.mxu0 0
      %527 = vmatpush1.bf16.msra.mxu0 0
      %528 = vmatprep.subr.bf16.mxu0 0
      %529 = vmatpush1.bf16.msra.mxu0 0
      %530 = vmatprep.subr.bf16.mxu0 0
      %531 = vmatpush1.bf16.msra.mxu0 0
      %532 = vmatprep.mubr.bf16.mxu0 0
      %533 = vmatmul.mubr.bf16.gmra.mrb[0].mxu0 %v489
      %v534 = vpop.f32.mrb[0].mxu0
      %v535 = vadd.f32 0.0, %v534
      %v536 = vpop.f32.mrb[0].mxu0
      %v537 = vpop.f32.mrb[0].mxu0
      %v538 = vadd.f32 0.0, %v537
      %v539 = vpop.f32.mrb[0].mxu0
      %540 = vmatprep.mubr.bf16.mxu0 0
      %541 = vmatmul.mubr.bf16.gmra.mrb[0].mxu0 %v492
      %v542 = vpop.f32.mrb[0].mxu0
      %v543 = vadd.f32 0.0, %v542
      %v544 = vpop.f32.mrb[0].mxu0
      %v545 = vpop.f32.mrb[0].mxu0
      %v546 = vadd.f32 0.0, %v545
      %v547 = vpop.f32.mrb[0].mxu0
      %548 = vmatprep.mubr.bf16.mxu0 0
      %549 = vmatmul.mubr.bf16.gmra.mrb[0].mxu0 %v495
      %v550 = vpop.f32.mrb[0].mxu0
      %v551 = vadd.f32 0.0, %v550
      %v552 = vpop.f32.mrb[0].mxu0
      %v553 = vpop.f32.mrb[0].mxu0
      %v554 = vadd.f32 0.0, %v553
      %v555 = vpop.f32.mrb[0].mxu0
      %556 = vmatprep.mubr.bf16.mxu0 0
      %557 = vmatmul.mubr.bf16.gmra.mrb[0].mxu0 %v498
      %v558 = vpop.f32.mrb[0].mxu0
      %v559 = vadd.f32 0.0, %v558
      %v560 = vpop.f32.mrb[0].mxu0
      %v561 = vpop.f32.mrb[0].mxu0
      %v562 = vadd.f32 0.0, %v561
      %v563 = vpop.f32.mrb[0].mxu0
      %564 = vdwg.mxu0
      %v565 = vadd.f32 %v404, %v535
      %v566 = vadd.f32 %v407, %v538
      %v567 = vadd.f32 %v412, %v543
      %v568 = vadd.f32 %v415, %v546
      %v569 = vadd.f32 %v420, %v551
      %v570 = vadd.f32 %v423, %v554
      %v571 = vadd.f32 %v428, %v559
      %v572 = vadd.f32 %v431, %v562
      %v573 = vld [vmem:[%s2] sm:$0x1]
      %v575 = vlaneseq
      %v576 = vshrl.u32 %v575, 7
      %v577 = vsub.s32 0, %v576
      %v578 = vrot.slane %v573, %v577
      %v580 = vadd.f32 %v565, %v578
      %v581 = vadd.f32 %v566, %v578
      %v582 = vadd.f32 %v567, %v578
      %v583 = vadd.f32 %v568, %v578
      %v584 = vadd.f32 %v569, %v578
      %v585 = vadd.f32 %v570, %v578
      %v586 = vadd.f32 %v571, %v578
      %v587 = vadd.f32 %v572, %v578
      %vm588 = vcmp.gt.f32.partialorder %v580, 0.0
      %vm589 = vcmp.gt.f32.partialorder %v581, 0.0
      %vm590 = vcmp.gt.f32.partialorder %v582, 0.0
      %vm591 = vcmp.gt.f32.partialorder %v583, 0.0
      %vm592 = vcmp.gt.f32.partialorder %v584, 0.0
      %vm593 = vcmp.gt.f32.partialorder %v585, 0.0
      %vm594 = vcmp.gt.f32.partialorder %v586, 0.0
      %vm595 = vcmp.gt.f32.partialorder %v587, 0.0
      %v596 = vmul.f32 %v580, 0.2
      %v597 = vmul.f32 %v581, 0.2
      %v598 = vmul.f32 %v582, 0.2
      %v599 = vmul.f32 %v583, 0.2
      %v600 = vmul.f32 %v584, 0.2
      %v601 = vmul.f32 %v585, 0.2
      %v602 = vmul.f32 %v586, 0.2
      %v603 = vmul.f32 %v587, 0.2
      %v604 = vsel %vm588, %v580, %v596
      %v605 = vsel %vm589, %v581, %v597
      %v606 = vsel %vm590, %v582, %v598
      %v607 = vsel %vm591, %v583, %v599
      %v608 = vsel %vm592, %v584, %v600
      %v609 = vsel %vm593, %v585, %v601
      %v610 = vsel %vm594, %v586, %v602
      %v611 = vsel %vm595, %v587, %v603
      %v612 = vpack.c.bf16 %v605, %v604
      %v613 = vpack.c.bf16 %v607, %v606
      %v614 = vpack.c.bf16 %v609, %v608
      %v615 = vpack.c.bf16 %v611, %v610
      %v620 = vunpack.c.l.b16 %v612
      %v621 = vunpack.c.h.b16 %v612
      %v622 = vunpack.c.l.b16 %v613
      %v623 = vunpack.c.h.b16 %v613
      %v624 = vunpack.c.l.b16 %v614
      %v625 = vunpack.c.h.b16 %v614
      %v626 = vunpack.c.l.b16 %v615
      %v627 = vunpack.c.h.b16 %v615
      %v628 = vpack.c.b16 %v620, %v620
      %v629 = vpack.c.b16 %v621, %v621
      %v630 = vpack.c.b16 %v622, %v622
      %v631 = vpack.c.b16 %v623, %v623
      %v632 = vpack.c.b16 %v624, %v624
      %v633 = vpack.c.b16 %v625, %v625
      %v634 = vpack.c.b16 %v626, %v626
      %v635 = vpack.c.b16 %v627, %v627
      %vm644 = vcmask 134144
      %645 = vst.msk [vmem:[%s170] sm:$0xf] %vm644, %v628
      %646 = vst.msk [vmem:[%s170 + $0x4] sm:$0xf] %vm644, %v629
      %647 = vst.msk [vmem:[%s170 + $0x8] sm:$0xf] %vm644, %v630
      %648 = vst.msk [vmem:[%s170 + $0xc] sm:$0xf] %vm644, %v631
      %649 = vst.msk [vmem:[%s170 + $0x10] sm:$0xf] %vm644, %v632
      %650 = vst.msk [vmem:[%s170 + $0x14] sm:$0xf] %vm644, %v633
      %651 = vst.msk [vmem:[%s170 + $0x18] sm:$0xf] %vm644, %v634
      %652 = vst.msk [vmem:[%s170 + $0x1c] sm:$0xf] %vm644, %v635
      %s653 = smul.u32 8, %s14
      %p654 = scmp.lt.s32.totalorder %s653, 15
      %s655 = scalar_select %p654, %s653, 15
      %s656 = smul.addr %s655, 4
      %s657 = scalar_lea.vmem %s3, %s656
      // Predicated region
      $region33: #{object_encoder_v4_forward.13} parent=31 // pred_check
        %p658 = pneg %p100
      $region34: #{object_encoder_v4_forward.13} parent=31 // pred_check_branch
        %660 = sbr.rel (%p658) target = $region36
      $region35: #{object_encoder_v4_forward.13} parent=31 // pred_region
        %s661 = smul.u32 8, %s14
      $region36: #{object_encoder_v4_forward.13} parent=31 // pred_fallthru
        _
    $region32: #{object_encoder_v4_forward.13} parent=5 // pred_fallthru
      _
    %p662 = scmp.le.s32.totalorder 2, %s9
    // Predicated region
    $region37: #{object_encoder_v4_forward.13} parent=5 // pred_check
      %p663 = pneg %p662
    $region38: #{object_encoder_v4_forward.13} parent=5 // pred_check_branch
      %665 = sbr.rel (%p663) target = $region40
    $region39: #{object_encoder_v4_forward.13} parent=5 // pred_region
      %s666 = ssub.s32 %s9, 2
      // Predicated region
      $region41: #{object_encoder_v4_forward.13} parent=39 // pred_check
        %p667 = pneg %p106
      $region42: #{object_encoder_v4_forward.13} parent=39 // pred_check_branch
        %669 = sbr.rel (%p667) target = $region44
      $region43: #{object_encoder_v4_forward.13} parent=39 // pred_region
        %s670 = smul.u32 8, %s15
        %p671 = scmp.lt.s32.totalorder %s670, 15
        %s672 = scalar_select %p671, %s670, 15
        %s673 = smul.addr %s672, 4
        %s674 = scalar_lea.vmem %s3, %s673
      $region44: #{object_encoder_v4_forward.13} parent=39 // pred_fallthru
        _
    $region40: #{object_encoder_v4_forward.13} parent=5 // pred_fallthru
      _
  $region6: #{object_encoder_v4_forward.13} parent=0 // loop_footer
    %s13 = sadd.s32 1, %s9
  $region7: #{object_encoder_v4_forward.13} parent=0 // loop_footer_branch
    %8 = sbr.rel target = $region3
  $region8: #{object_encoder_v4_forward.13} parent=0 // loop_exit
    _

// kernel: object_encoder_v4_forward.15
$region0: #{object_encoder_v4_forward.15}
  #allocation0 [shape = 'u32[]', space=smem, size = 0x4, offset = 0x4, fixed_abs, tag = 'smem constant byte address 0x4 - core index']
  #allocation1 [shape = 'u32[144,128]{1,0:T(1,128)}', space=vmem, size = 0x12000, scoped, tag = 'internal scratch']
  %s0 = inlined_call_operand.vmem [shape: bf16[32,144], index: 0, kind: input, shape index: {}]
  %s1 = inlined_call_operand.vmem [shape: bf16[144,32], index: 1, kind: input, shape index: {}]
  %s2 = inlined_call_operand.vmem [shape: f32[1,32], index: 2, kind: input, shape index: {}]
  %s3 = inlined_call_operand.vmem [shape: bf16[32,32], index: 3, kind: output, shape index: {}]
  %s4 = sld [smem:[#allocation0]]
  $region22: #{object_encoder_v4_forward.15} parent=0
    _
  %s6 = ssub.s32 1, %s4
  %s7 = scalar_select 0, %s6, %s4
  // Predicated region
  $region2: #{object_encoder_v4_forward.15} parent=0 // pred_check
    _
  $region3: #{object_encoder_v4_forward.15} parent=0 // pred_check_branch
    %9 = sbr.rel (0) target = $region5
  $region4: #{object_encoder_v4_forward.15} parent=0 // pred_region
    _
  $region5: #{object_encoder_v4_forward.15} parent=0 // pred_fallthru
    _
  // Predicated region
  $region6: #{object_encoder_v4_forward.15} parent=0 // pred_check
    _
  $region7: #{object_encoder_v4_forward.15} parent=0 // pred_check_branch
    %11 = sbr.rel (0) target = $region9
  $region8: #{object_encoder_v4_forward.15} parent=0 // pred_region
    _
  $region9: #{object_encoder_v4_forward.15} parent=0 // pred_fallthru
    _
  // Predicated region
  $region10: #{object_encoder_v4_forward.15} parent=0 // pred_check
    _
  $region11: #{object_encoder_v4_forward.15} parent=0 // pred_check_branch
    %13 = sbr.rel (0) target = $region13
  $region12: #{object_encoder_v4_forward.15} parent=0 // pred_region
    _
  $region13: #{object_encoder_v4_forward.15} parent=0 // pred_fallthru
    _
  %v15 = vld [vmem:[%s0] sm:$0xff]
  %v16 = vld [vmem:[%s0 + $0x8] sm:$0xff]
  %v17 = vld [vmem:[%s0 + $0x10] sm:$0xff]
  %v18 = vld [vmem:[%s0 + $0x18] sm:$0xff]
  %v19 = vld [vmem:[%s1] sm:$0xf]
  %v20 = vld [vmem:[%s1 + $0x4] sm:$0xf]
  %v21 = vld [vmem:[%s1 + $0x8] sm:$0xf]
  %v22 = vld [vmem:[%s1 + $0xc] sm:$0xf]
  %v23 = vld [vmem:[%s1 + $0x10] sm:$0xf]
  %v24 = vld [vmem:[%s1 + $0x14] sm:$0xf]
  %v25 = vld [vmem:[%s1 + $0x18] sm:$0xf]
  %v26 = vld [vmem:[%s1 + $0x1c] sm:$0xf]
  %v27 = vld [vmem:[%s1 + $0x20] sm:$0xf]
  %v28 = vld [vmem:[%s1 + $0x24] sm:$0xf]
  %v29 = vld [vmem:[%s1 + $0x28] sm:$0xf]
  %v30 = vld [vmem:[%s1 + $0x2c] sm:$0xf]
  %v31 = vld [vmem:[%s1 + $0x30] sm:$0xf]
  %v32 = vld [vmem:[%s1 + $0x34] sm:$0xf]
  %v33 = vld [vmem:[%s1 + $0x38] sm:$0xf]
  %v34 = vld [vmem:[%s1 + $0x3c] sm:$0xf]
  %v35 = vld [vmem:[%s1 + $0x40] sm:$0xf]
  %v36 = vld [vmem:[%s1 + $0x44] sm:$0xf]
  %v37 = vld [vmem:[%s2] sm:$0x1]
  %v39 = vlaneseq
  %v40 = vshrl.u32 %v39, 7
  %v41 = vsub.s32 0, %v40
  %v42 = vrot.slane %v37, %v41
  %v48 = vunpack.c.l.b16 %v15
  %v49 = vunpack.c.h.b16 %v15
  %v50 = vunpack.c.l.b16 %v16
  %v51 = vunpack.c.h.b16 %v16
  %v52 = vunpack.c.l.b16 %v17
  %v53 = vunpack.c.h.b16 %v17
  %v54 = vunpack.c.l.b16 %v18
  %v55 = vunpack.c.h.b16 %v18
  %v56 = vpack.c.b16 %v50, %v48
  %v57 = vpack.c.b16 %v51, %v49
  %v58 = vpack.c.b16 %v54, %v52
  %v59 = vpack.c.b16 %v55, %v53
  %v80 = vunpack.c.l.b16 %v19
  %v81 = vunpack.c.l.b16 %v20
  %v82 = vunpack.c.l.b16 %v21
  %v83 = vunpack.c.l.b16 %v22
  %v84 = vunpack.c.l.b16 %v23
  %v85 = vunpack.c.l.b16 %v24
  %v86 = vunpack.c.l.b16 %v25
  %v87 = vunpack.c.l.b16 %v26
  %v88 = vunpack.c.l.b16 %v27
  %v89 = vunpack.c.l.b16 %v28
  %v90 = vunpack.c.l.b16 %v29
  %v91 = vunpack.c.l.b16 %v30
  %v92 = vunpack.c.l.b16 %v31
  %v93 = vunpack.c.l.b16 %v32
  %v94 = vunpack.c.l.b16 %v33
  %v95 = vunpack.c.l.b16 %v34
  %v96 = vunpack.c.l.b16 %v35
  %v97 = vunpack.c.l.b16 %v36
  %v98 = vpack.c.b16 %v81, %v80
  %v99 = vpack.c.b16 %v83, %v82
  %v100 = vpack.c.b16 %v85, %v84
  %v101 = vpack.c.b16 %v87, %v86
  %v102 = vpack.c.b16 %v89, %v88
  %v103 = vpack.c.b16 %v91, %v90
  %v104 = vpack.c.b16 %v93, %v92
  %v105 = vpack.c.b16 %v95, %v94
  %v106 = vpack.c.b16 %v97, %v96
  %vm116 = vcmask 130048
  %v118 = vsel %vm116, %v57, 0
  %v121 = vsel %vm116, %v59, 0
  %123 = vmatprep.subr.bf16.mxu0 0
  %124 = vmatpush1.bf16.msra.mxu0 %v98
  %125 = vmatprep.subr.bf16.mxu0 0
  %126 = vmatpush1.bf16.msra.mxu0 %v99
  %127 = vmatprep.subr.bf16.mxu0 0
  %128 = vmatpush1.bf16.msra.mxu0 %v100
  %129 = vmatprep.subr.bf16.mxu0 0
  %130 = vmatpush1.bf16.msra.mxu0 %v101
  %131 = vmatprep.subr.bf16.mxu0 0
  %132 = vmatpush1.bf16.msra.mxu0 %v102
  %133 = vmatprep.subr.bf16.mxu0 0
  %134 = vmatpush1.bf16.msra.mxu0 %v103
  %135 = vmatprep.subr.bf16.mxu0 0
  %136 = vmatpush1.bf16.msra.mxu0 %v104
  %137 = vmatprep.subr.bf16.mxu0 0
  %138 = vmatpush1.bf16.msra.mxu0 %v105
  %139 = vmatprep.subr.bf16.mxu0 0
  %140 = vmatpush1.bf16.msra.mxu0 %v106
  %141 = vmatprep.subr.bf16.mxu0 0
  %142 = vmatpush1.bf16.msra.mxu0 0
  %143 = vmatprep.subr.bf16.mxu0 0
  %144 = vmatpush1.bf16.msra.mxu0 0
  %145 = vmatprep.subr.bf16.mxu0 0
  %146 = vmatpush1.bf16.msra.mxu0 0
  %147 = vmatprep.subr.bf16.mxu0 0
  %148 = vmatpush1.bf16.msra.mxu0 0
  %149 = vmatprep.subr.bf16.mxu0 0
  %150 = vmatpush1.bf16.msra.mxu0 0
  %151 = vmatprep.subr.bf16.mxu0 0
  %152 = vmatpush1.bf16.msra.mxu0 0
  %153 = vmatprep.subr.bf16.mxu0 0
  %154 = vmatpush1.bf16.msra.mxu0 0
  %155 = vmatprep.mubr.bf16.mxu0 %v118
  %156 = vmatmul.mubr.bf16.gmra.mrb[0].mxu0 %v56
  %v157 = vpop.f32.mrb[0].mxu0
  %v158 = vadd.f32 %v42, %v157
  %v159 = vpop.f32.mrb[0].mxu0
  %v160 = vpop.f32.mrb[0].mxu0
  %v161 = vadd.f32 %v42, %v160
  %v162 = vpop.f32.mrb[0].mxu0
  %163 = vmatprep.mubr.bf16.mxu0 %v121
  %164 = vmatmul.mubr.bf16.gmra.mrb[0].mxu0 %v58
  %v165 = vpop.f32.mrb[0].mxu0
  %v166 = vadd.f32 %v42, %v165
  %v167 = vpop.f32.mrb[0].mxu0
  %v168 = vpop.f32.mrb[0].mxu0
  %v169 = vadd.f32 %v42, %v168
  %v170 = vpop.f32.mrb[0].mxu0
  %171 = vdwg.mxu0
  %vm172 = vcmp.gt.f32.partialorder %v158, 0.0
  %vm173 = vcmp.gt.f32.partialorder %v161, 0.0
  %vm174 = vcmp.gt.f32.partialorder %v166, 0.0
  %vm175 = vcmp.gt.f32.partialorder %v169, 0.0
  %v176 = vmul.f32 %v158, 0.2
  %v177 = vmul.f32 %v161, 0.2
  %v178 = vmul.f32 %v166, 0.2
  %v179 = vmul.f32 %v169, 0.2
  %v180 = vsel %vm172, %v158, %v176
  %v181 = vsel %vm173, %v161, %v177
  %v182 = vsel %vm174, %v166, %v178
  %v183 = vsel %vm175, %v169, %v179
  %v184 = vpack.c.bf16 %v181, %v180
  %v185 = vpack.c.bf16 %v183, %v182
  %v188 = vunpack.c.l.b16 %v184
  %v189 = vunpack.c.h.b16 %v184
  %v190 = vunpack.c.l.b16 %v185
  %v191 = vunpack.c.h.b16 %v185
  %v192 = vpack.c.b16 %v188, %v188
  %v193 = vpack.c.b16 %v189, %v189
  %v194 = vpack.c.b16 %v190, %v190
  %v195 = vpack.c.b16 %v191, %v191
  %vm200 = vcmask 257024
  %201 = vst.msk [vmem:[%s3] sm:$0xf] %vm200, %v192
  %202 = vst.msk [vmem:[%s3 + $0x4] sm:$0xf] %vm200, %v193
  %203 = vst.msk [vmem:[%s3 + $0x8] sm:$0xf] %vm200, %v194
  %204 = vst.msk [vmem:[%s3 + $0xc] sm:$0xf] %vm200, %v195
  // Predicated region
  $region14: #{object_encoder_v4_forward.15} parent=0 // pred_check
    _
  $region15: #{object_encoder_v4_forward.15} parent=0 // pred_check_branch
    %206 = sbr.rel (0) target = $region17
  $region16: #{object_encoder_v4_forward.15} parent=0 // pred_region
    _
  $region17: #{object_encoder_v4_forward.15} parent=0 // pred_fallthru
    _
  // Predicated region
  $region18: #{object_encoder_v4_forward.15} parent=0 // pred_check
    _
  $region19: #{object_encoder_v4_forward.15} parent=0 // pred_check_branch
    %208 = sbr.rel (0) target = $region21
  $region20: #{object_encoder_v4_forward.15} parent=0 // pred_region
    _
  $region21: #{object_encoder_v4_forward.15} parent=0 // pred_fallthru
    _

// kernel: object_encoder_v4_forward.14
$region0: #{object_encoder_v4_forward.14}
  #allocation0 [shape = 'u32[]', space=smem, size = 0x4, offset = 0x4, fixed_abs, tag = 'smem constant byte address 0x4 - core index']
  #allocation1 [shape = 'u32[144,128]{1,0:T(1,128)}', space=vmem, size = 0x12000, scoped, tag = 'internal scratch']
  %s0 = inlined_call_operand.vmem [shape: bf16[2,10,8,51], index: 0, kind: input, shape index: {}]
  %s1 = inlined_call_operand.vmem [shape: bf16[3,51,17], index: 1, kind: input, shape index: {}]
  %s2 = inlined_call_operand.vmem [shape: f32[1,17], index: 2, kind: input, shape index: {}]
  %s3 = inlined_call_operand.vmem [shape: bf16[128,16], index: 3, kind: input, shape index: {}]
  %s4 = inlined_call_operand.vmem [shape: bf16[16,17], index: 4, kind: input, shape index: {}]
  %s5 = inlined_call_operand.vmem [shape: f32[128,17], index: 5, kind: output, shape index: {}]
  %s6 = sld [smem:[#allocation0]]
  $region53: #{object_encoder_v4_forward.14} parent=0
    _
  %s8 = ssub.s32 1, %s6
  %s9 = scalar_select 0, %s8, %s6
  loop: start=0, step=1, limit=4
  $region2: #{object_encoder_v4_forward.14} parent=0 // loop_pre_header
    _
  $region3: #{object_encoder_v4_forward.14} parent=0 // loop_header
    %s11 = sphi 0, %s15
    %p12 = scmp.ge.s32.totalorder %s11, 4
    %s21 = sphi 0, %s23
    %s24 = sphi 0, %s21
    %s25 = sphi 0, %s24
    %s41 = sphi 0, %s25
    %s45 = sphi 0, %s45
    %s47 = sphi 0, %s45
    %s48 = sphi 0, %s47
    %s62 = sphi 0, %s48
    %s66 = sphi 0, %s66
    %s68 = sphi 0, %s66
    %s69 = sphi 0, %s68
    %s83 = sphi 0, %s69
    %s89 = sphi 0, %s91
    %s92 = sphi 0, %s89
    %s93 = sphi 0, %s92
    %s109 = sphi 0, %s93
    %s113 = sphi 0, %s113
    %s115 = sphi 0, %s113
    %s116 = sphi 0, %s115
    %s130 = sphi 0, %s116
    %s136 = sphi 0, %s138
    %s139 = sphi 0, %s136
    %s140 = sphi 0, %s139
    %s156 = sphi 0, %s140
  $region4: #{object_encoder_v4_forward.14} parent=0 // loop_header_branch
    %14 = sbr.rel (%p12) target = $region8
  $region5: #{object_encoder_v4_forward.14} parent=0 // loop_body
    %s16 = ssub.s32 %s11, 1
    %s17 = ssub.s32 %s11, 2
    %s18 = sadd.s32 %s11, 1
    %s19 = ssub.s32 %s11, %s18
    %p20 = scmp.eq.s32.totalorder %s19, 0
    %s22 = sadd.s32 %s21, 1
    %s23 = scalar_select %p20, %s21, %s22
    %p26 = pneg %p20
    %p27 = scmp.eq.s32.totalorder %s11, 1
    %p28 = por %p26, %p27
    %p29 = scmp.ne.s32.totalorder %s21, %s24
    %p30 = scmp.eq.s32.totalorder %s11, 0
    %p31 = por %p29, %p30
    %p32 = scmp.ne.s32.totalorder %s21, %s24
    %p33 = scmp.eq.s32.totalorder %s16, 1
    %p34 = por %p32, %p33
    %p35 = scmp.ne.s32.totalorder %s24, %s25
    %p36 = scmp.eq.s32.totalorder %s16, 0
    %p37 = por %p35, %p36
    %p38 = scmp.ne.s32.totalorder %s24, %s25
    %p39 = scmp.eq.s32.totalorder %s17, 1
    %p40 = por %p38, %p39
    %p42 = scmp.ne.s32.totalorder %s25, %s41
    %p43 = scmp.eq.s32.totalorder %s17, 0
    %p44 = por %p42, %p43
    %s46 = sadd.s32 %s45, 1
    %p49 = scmp.eq.s32.totalorder %s11, 1
    %p50 = scmp.ne.s32.totalorder %s45, %s47
    %p51 = scmp.eq.s32.totalorder %s11, 0
    %p52 = por %p50, %p51
    %p53 = scmp.ne.s32.totalorder %s45, %s47
    %p54 = scmp.eq.s32.totalorder %s16, 1
    %p55 = por %p53, %p54
    %p56 = scmp.ne.s32.totalorder %s47, %s48
    %p57 = scmp.eq.s32.totalorder %s16, 0
    %p58 = por %p56, %p57
    %p59 = scmp.ne.s32.totalorder %s47, %s48
    %p60 = scmp.eq.s32.totalorder %s17, 1
    %p61 = por %p59, %p60
    %p63 = scmp.ne.s32.totalorder %s48, %s62
    %p64 = scmp.eq.s32.totalorder %s17, 0
    %p65 = por %p63, %p64
    %s67 = sadd.s32 %s66, 1
    %p70 = scmp.eq.s32.totalorder %s11, 1
    %p71 = scmp.ne.s32.totalorder %s66, %s68
    %p72 = scmp.eq.s32.totalorder %s11, 0
    %p73 = por %p71, %p72
    %p74 = scmp.ne.s32.totalorder %s66, %s68
    %p75 = scmp.eq.s32.totalorder %s16, 1
    %p76 = por %p74, %p75
    %p77 = scmp.ne.s32.totalorder %s68, %s69
    %p78 = scmp.eq.s32.totalorder %s16, 0
    %p79 = por %p77, %p78
    %p80 = scmp.ne.s32.totalorder %s68, %s69
    %p81 = scmp.eq.s32.totalorder %s17, 1
    %p82 = por %p80, %p81
    %p84 = scmp.ne.s32.totalorder %s69, %s83
    %p85 = scmp.eq.s32.totalorder %s17, 0
    %p86 = por %p84, %p85
    %s87 = ssub.s32 %s11, %s18
    %p88 = scmp.eq.s32.totalorder %s87, 0
    %s90 = sadd.s32 %s89, 1
    %s91 = scalar_select %p88, %s89, %s90
    %p94 = pneg %p88
    %p95 = scmp.eq.s32.totalorder %s11, 1
    %p96 = por %p94, %p95
    %p97 = scmp.ne.s32.totalorder %s89, %s92
    %p98 = scmp.eq.s32.totalorder %s11, 0
    %p99 = por %p97, %p98
    %p100 = scmp.ne.s32.totalorder %s89, %s92
    %p101 = scmp.eq.s32.totalorder %s16, 1
    %p102 = por %p100, %p101
    %p103 = scmp.ne.s32.totalorder %s92, %s93
    %p104 = scmp.eq.s32.totalorder %s16, 0
    %p105 = por %p103, %p104
    %p106 = scmp.ne.s32.totalorder %s92, %s93
    %p107 = scmp.eq.s32.totalorder %s17, 1
    %p108 = por %p106, %p107
    %p110 = scmp.ne.s32.totalorder %s93, %s109
    %p111 = scmp.eq.s32.totalorder %s17, 0
    %p112 = por %p110, %p111
    %s114 = sadd.s32 %s113, 1
    %p117 = scmp.eq.s32.totalorder %s11, 1
    %p118 = scmp.ne.s32.totalorder %s113, %s115
    %p119 = scmp.eq.s32.totalorder %s11, 0
    %p120 = por %p118, %p119
    %p121 = scmp.ne.s32.totalorder %s113, %s115
    %p122 = scmp.eq.s32.totalorder %s16, 1
    %p123 = por %p121, %p122
    %p124 = scmp.ne.s32.totalorder %s115, %s116
    %p125 = scmp.eq.s32.totalorder %s16, 0
    %p126 = por %p124, %p125
    %p127 = scmp.ne.s32.totalorder %s115, %s116
    %p128 = scmp.eq.s32.totalorder %s17, 1
    %p129 = por %p127, %p128
    %p131 = scmp.ne.s32.totalorder %s116, %s130
    %p132 = scmp.eq.s32.totalorder %s17, 0
    %p133 = por %p131, %p132
    %s134 = ssub.s32 %s11, %s18
    %p135 = scmp.eq.s32.totalorder %s134, 0
    %s137 = sadd.s32 %s136, 1
    %s138 = scalar_select %p135, %s136, %s137
    %p141 = pneg %p135
    %p142 = scmp.eq.s32.totalorder %s11, 1
    %p143 = por %p141, %p142
    %p144 = scmp.ne.s32.totalorder %s136, %s139
    %p145 = scmp.eq.s32.totalorder %s11, 0
    %p146 = por %p144, %p145
    %p147 = scmp.ne.s32.totalorder %s136, %s139
    %p148 = scmp.eq.s32.totalorder %s16, 1
    %p149 = por %p147, %p148
    %p150 = scmp.ne.s32.totalorder %s139, %s140
    %p151 = scmp.eq.s32.totalorder %s16, 0
    %p152 = por %p150, %p151
    %p153 = scmp.ne.s32.totalorder %s139, %s140
    %p154 = scmp.eq.s32.totalorder %s17, 1
    %p155 = por %p153, %p154
    %p157 = scmp.ne.s32.totalorder %s140, %s156
    %p158 = scmp.eq.s32.totalorder %s17, 0
    %p159 = por %p157, %p158
    %p160 = scmp.le.s32.totalorder 1, %s11
    %p161 = scmp.lt.s32.totalorder %s11, 3
    %p162 = pnand %p160, %p161
    %p163 = pneg %p162
    // Predicated region
    $region9: #{object_encoder_v4_forward.14} parent=5 // pred_check
      _
    $region10: #{object_encoder_v4_forward.14} parent=5 // pred_check_branch
      %165 = sbr.rel (%p162) target = $region12
    $region11: #{object_encoder_v4_forward.14} parent=5 // pred_region
      %s166 = ssub.s32 %s11, 1
      // Predicated region
      $region13: #{object_encoder_v4_forward.14} parent=11 // pred_check
        %p167 = pneg %p58
      $region14: #{object_encoder_v4_forward.14} parent=11 // pred_check_branch
        %169 = sbr.rel (%p167) target = $region16
      $region15: #{object_encoder_v4_forward.14} parent=11 // pred_region
        _
      $region16: #{object_encoder_v4_forward.14} parent=11 // pred_fallthru
        _
      // Predicated region
      $region17: #{object_encoder_v4_forward.14} parent=11 // pred_check
        %p170 = pneg %p79
      $region18: #{object_encoder_v4_forward.14} parent=11 // pred_check_branch
        %172 = sbr.rel (%p170) target = $region20
      $region19: #{object_encoder_v4_forward.14} parent=11 // pred_region
        _
      $region20: #{object_encoder_v4_forward.14} parent=11 // pred_fallthru
        _
      // Predicated region
      $region21: #{object_encoder_v4_forward.14} parent=11 // pred_check
        %p173 = pneg %p126
      $region22: #{object_encoder_v4_forward.14} parent=11 // pred_check_branch
        %175 = sbr.rel (%p173) target = $region24
      $region23: #{object_encoder_v4_forward.14} parent=11 // pred_region
        _
      $region24: #{object_encoder_v4_forward.14} parent=11 // pred_fallthru
        _
    $region12: #{object_encoder_v4_forward.14} parent=5 // pred_fallthru
      _
    %p176 = scmp.lt.s32.totalorder %s11, 2
    // Predicated region
    $region25: #{object_encoder_v4_forward.14} parent=5 // pred_check
      %p177 = pneg %p176
    $region26: #{object_encoder_v4_forward.14} parent=5 // pred_check_branch
      %179 = sbr.rel (%p177) target = $region28
    $region27: #{object_encoder_v4_forward.14} parent=5 // pred_region
      // Predicated region
      $region29: #{object_encoder_v4_forward.14} parent=27 // pred_check
        %p180 = pneg %p31
      $region30: #{object_encoder_v4_forward.14} parent=27 // pred_check_branch
        %182 = sbr.rel (%p180) target = $region32
      $region31: #{object_encoder_v4_forward.14} parent=27 // pred_region
        %p183 = scmp.lt.s32.totalorder %s11, 1
        %s184 = scalar_select %p183, %s11, 1
        %s185 = smul.addr %s184, 10
        %s186 = smul.addr %s185, 4
        %s187 = scalar_lea.vmem %s0, %s186
      $region32: #{object_encoder_v4_forward.14} parent=27 // pred_fallthru
        _
      // Predicated region
      $region33: #{object_encoder_v4_forward.14} parent=27 // pred_check
        %p188 = pneg %p99
      $region34: #{object_encoder_v4_forward.14} parent=27 // pred_check_branch
        %190 = sbr.rel (%p188) target = $region36
      $region35: #{object_encoder_v4_forward.14} parent=27 // pred_region
        %s191 = smul.u32 8, %s11
        %p192 = scmp.lt.s32.totalorder %s191, 15
        %s193 = scalar_select %p192, %s191, 15
        %s194 = smul.addr %s193, 4
        %s195 = scalar_lea.vmem %s3, %s194
        %s196 = smul.u32 8, %s11
      $region36: #{object_encoder_v4_forward.14} parent=27 // pred_fallthru
        _
    $region28: #{object_encoder_v4_forward.14} parent=5 // pred_fallthru
      _
    %p197 = scmp.le.s32.totalorder 1, %s11
    %p198 = scmp.lt.s32.totalorder %s11, 3
    %p199 = pnand %p197, %p198
    %p200 = pneg %p199
    // Predicated region
    $region37: #{object_encoder_v4_forward.14} parent=5 // pred_check
      _
    $region38: #{object_encoder_v4_forward.14} parent=5 // pred_check_branch
      %202 = sbr.rel (%p199) target = $region40
    $region39: #{object_encoder_v4_forward.14} parent=5 // pred_region
      %s203 = ssub.s32 %s11, 1
      %p204 = scmp.lt.s32.totalorder %s16, 1
      %s205 = scalar_select %p204, %s16, 1
      %s206 = smul.addr %s205, 10
      %s207 = smul.addr %s206, 4
      %s208 = scalar_lea.vmem %s0, %s207
      %p209 = pneg %p37
      %p210 = pneg %p34
      %p211 = pneg %p58
      %p212 = pneg %p55
      %p213 = pneg %p79
      %p214 = pneg %p76
      %s215 = smul.u32 8, %s16
      %p216 = scmp.lt.s32.totalorder %s215, 15
      %s217 = scalar_select %p216, %s215, 15
      %s218 = smul.addr %s217, 4
      %s219 = scalar_lea.vmem %s3, %s218
      %p220 = pneg %p105
      %p221 = pneg %p102
      %p222 = pneg %p126
      %p223 = pneg %p123
      %p224 = pneg %p152
      %p225 = pneg %p149
      %s226 = smul.u32 8, %s16
      %p227 = scmp.lt.s32.totalorder %s226, 15
      %s228 = scalar_select %p227, %s226, 15
      %s229 = smul.addr %s228, 8
      %s230 = scalar_lea.vmem %s5, %s229
      %p231 = scmp.lt.s32.totalorder %s16, 1
      %s232 = scalar_select %p231, %s16, 1
      %s233 = smul.addr %s232, 10
      %s234 = smul.addr %s233, 4
      %s235 = scalar_lea.vmem %s0, %s234
      %s236 = smul.u32 8, %s16
      %p237 = scmp.lt.s32.totalorder %s236, 15
      %s238 = scalar_select %p237, %s236, 15
      %s239 = smul.addr %s238, 4
      %s240 = scalar_lea.vmem %s3, %s239
      %s241 = smul.u32 8, %s16
      %s242 = smul.u32 8, %s16
      %p243 = scmp.lt.s32.totalorder %s242, 15
      %s244 = scalar_select %p243, %s242, 15
      %s245 = smul.addr %s244, 8
      %s246 = scalar_lea.vmem %s5, %s245
      %s247 = smul.u32 8, %s16
      %v249 = vld [vmem:[%s235] sm:$0xf]
      %v250 = vld [vmem:[%s235 + $0x4] sm:$0xf]
      %v251 = vld [vmem:[%s235 + $0x8] sm:$0xf]
      %v252 = vld [vmem:[%s235 + $0xc] sm:$0xf]
      %v253 = vld [vmem:[%s235 + $0x10] sm:$0xf]
      %v254 = vld [vmem:[%s235 + $0x14] sm:$0xf]
      %v255 = vld [vmem:[%s235 + $0x18] sm:$0xf]
      %v256 = vld [vmem:[%s235 + $0x1c] sm:$0xf]
      %v257 = vld [vmem:[%s1] sm:$0xf]
      %v258 = vld [vmem:[%s1 + $0x4] sm:$0xf]
      %v259 = vld [vmem:[%s1 + $0x8] sm:$0xf]
      %v260 = vld [vmem:[%s1 + $0xc] sm:$0xf]
      %v261 = vld [vmem:[%s1 + $0x10] sm:$0xf]
      %v262 = vld [vmem:[%s1 + $0x14] sm:$0xf]
      %v263 = vld [vmem:[%s1 + $0x18] sm:$0x3]
      %s264 = scalar_lea.vmem %s235, 4
      %v265 = vld [vmem:[%s264] sm:$0xf]
      %v266 = vld [vmem:[%s264 + $0x4] sm:$0xf]
      %v267 = vld [vmem:[%s264 + $0x8] sm:$0xf]
      %v268 = vld [vmem:[%s264 + $0xc] sm:$0xf]
      %v269 = vld [vmem:[%s264 + $0x10] sm:$0xf]
      %v270 = vld [vmem:[%s264 + $0x14] sm:$0xf]
      %v271 = vld [vmem:[%s264 + $0x18] sm:$0xf]
      %v272 = vld [vmem:[%s264 + $0x1c] sm:$0xf]
      %s273 = scalar_lea.vmem %s1, 28
      %v274 = vld [vmem:[%s273] sm:$0xf]
      %v275 = vld [vmem:[%s273 + $0x4] sm:$0xf]
      %v276 = vld [vmem:[%s273 + $0x8] sm:$0xf]
      %v277 = vld [vmem:[%s273 + $0xc] sm:$0xf]
      %v278 = vld [vmem:[%s273 + $0x10] sm:$0xf]
      %v279 = vld [vmem:[%s273 + $0x14] sm:$0xf]
      %v280 = vld [vmem:[%s273 + $0x18] sm:$0x3]
      %v289 = vunpack.c.l.b16 %v265
      %v290 = vunpack.c.l.b16 %v266
      %v291 = vunpack.c.l.b16 %v267
      %v292 = vunpack.c.l.b16 %v268
      %v293 = vunpack.c.l.b16 %v269
      %v294 = vunpack.c.l.b16 %v270
      %v295 = vunpack.c.l.b16 %v271
      %v296 = vunpack.c.l.b16 %v272
      %v297 = vpack.c.b16 %v290, %v289
      %v298 = vpack.c.b16 %v292, %v291
      %v299 = vpack.c.b16 %v294, %v293
      %v300 = vpack.c.b16 %v296, %v295
      %v308 = vunpack.c.l.b16 %v274
      %v309 = vunpack.c.l.b16 %v275
      %v310 = vunpack.c.l.b16 %v276
      %v311 = vunpack.c.l.b16 %v277
      %v312 = vunpack.c.l.b16 %v278
      %v313 = vunpack.c.l.b16 %v279
      %v314 = vunpack.c.l.b16 %v280
      %v315 = vpack.c.b16 %v309, %v308
      %v316 = vpack.c.b16 %v311, %v310
      %v317 = vpack.c.b16 %v313, %v312
      %v318 = vpack.c.b16 %v314, %v314
      %vm322 = vcmask 416768
      %v324 = vsel %vm322, %v297, 0
      %v327 = vsel %vm322, %v298, 0
      %v330 = vsel %vm322, %v299, 0
      %v333 = vsel %vm322, %v300, 0
      %vm335 = vcmask 1040384
      %vm336 = vcmask 1041408
      %v337 = vsel %vm335, 4294967295, 65535
      %v338 = vsel %vm336, %v337, 0
      %v340 = vand.u32 %v318, %v338
      %342 = vmatprep.subr.bf16.mxu0 0
      %343 = vmatpush1.bf16.msra.mxu0 %v315
      %344 = vmatprep.subr.bf16.mxu0 0
      %345 = vmatpush1.bf16.msra.mxu0 %v316
      %346 = vmatprep.subr.bf16.mxu0 0
      %347 = vmatpush1.bf16.msra.mxu0 %v317
      %348 = vmatprep.subr.bf16.mxu0 0
      %349 = vmatpush1.bf16.msra.mxu0 %v340
      %350 = vmatprep.subr.bf16.mxu0 0
      %351 = vmatpush1.bf16.msra.mxu0 0
      %352 = vmatprep.subr.bf16.mxu0 0
      %353 = vmatpush1.bf16.msra.mxu0 0
      %354 = vmatprep.subr.bf16.mxu0 0
      %355 = vmatpush1.bf16.msra.mxu0 0
      %356 = vmatprep.subr.bf16.mxu0 0
      %357 = vmatpush1.bf16.msra.mxu0 0
      %358 = vmatprep.subr.bf16.mxu0 0
      %359 = vmatpush1.bf16.msra.mxu0 0
      %360 = vmatprep.subr.bf16.mxu0 0
      %361 = vmatpush1.bf16.msra.mxu0 0
      %362 = vmatprep.subr.bf16.mxu0 0
      %363 = vmatpush1.bf16.msra.mxu0 0
      %364 = vmatprep.subr.bf16.mxu0 0
      %365 = vmatpush1.bf16.msra.mxu0 0
      %366 = vmatprep.subr.bf16.mxu0 0
      %367 = vmatpush1.bf16.msra.mxu0 0
      %368 = vmatprep.subr.bf16.mxu0 0
      %369 = vmatpush1.bf16.msra.mxu0 0
      %370 = vmatprep.subr.bf16.mxu0 0
      %371 = vmatpush1.bf16.msra.mxu0 0
      %372 = vmatprep.subr.bf16.mxu0 0
      %373 = vmatpush1.bf16.msra.mxu0 0
      %374 = vmatprep.mubr.bf16.mxu0 0
      %375 = vmatmul.mubr.bf16.gmra.mrb[0].mxu0 %v324
      %v376 = vpop.f32.mrb[0].mxu0
      %v377 = vadd.f32 0.0, %v376
      %v378 = vpop.f32.mrb[0].mxu0
      %v379 = vpop.f32.mrb[0].mxu0
      %v380 = vadd.f32 0.0, %v379
      %v381 = vpop.f32.mrb[0].mxu0
      %382 = vmatprep.mubr.bf16.mxu0 0
      %383 = vmatmul.mubr.bf16.gmra.mrb[0].mxu0 %v327
      %v384 = vpop.f32.mrb[0].mxu0
      %v385 = vadd.f32 0.0, %v384
      %v386 = vpop.f32.mrb[0].mxu0
      %v387 = vpop.f32.mrb[0].mxu0
      %v388 = vadd.f32 0.0, %v387
      %v389 = vpop.f32.mrb[0].mxu0
      %390 = vmatprep.mubr.bf16.mxu0 0
      %391 = vmatmul.mubr.bf16.gmra.mrb[0].mxu0 %v330
      %v392 = vpop.f32.mrb[0].mxu0
      %v393 = vadd.f32 0.0, %v392
      %v394 = vpop.f32.mrb[0].mxu0
      %v395 = vpop.f32.mrb[0].mxu0
      %v396 = vadd.f32 0.0, %v395
      %v397 = vpop.f32.mrb[0].mxu0
      %398 = vmatprep.mubr.bf16.mxu0 0
      %399 = vmatmul.mubr.bf16.gmra.mrb[0].mxu0 %v333
      %v400 = vpop.f32.mrb[0].mxu0
      %v401 = vadd.f32 0.0, %v400
      %v402 = vpop.f32.mrb[0].mxu0
      %v403 = vpop.f32.mrb[0].mxu0
      %v404 = vadd.f32 0.0, %v403
      %v405 = vpop.f32.mrb[0].mxu0
      %406 = vdwg.mxu0
      %v415 = vunpack.c.l.b16 %v249
      %v416 = vunpack.c.l.b16 %v250
      %v417 = vunpack.c.l.b16 %v251
      %v418 = vunpack.c.l.b16 %v252
      %v419 = vunpack.c.l.b16 %v253
      %v420 = vunpack.c.l.b16 %v254
      %v421 = vunpack.c.l.b16 %v255
      %v422 = vunpack.c.l.b16 %v256
      %v423 = vpack.c.b16 %v416, %v415
      %v424 = vpack.c.b16 %v418, %v417
      %v425 = vpack.c.b16 %v420, %v419
      %v426 = vpack.c.b16 %v422, %v421
      %v434 = vunpack.c.l.b16 %v257
      %v435 = vunpack.c.l.b16 %v258
      %v436 = vunpack.c.l.b16 %v259
      %v437 = vunpack.c.l.b16 %v260
      %v438 = vunpack.c.l.b16 %v261
      %v439 = vunpack.c.l.b16 %v262
      %v440 = vunpack.c.l.b16 %v263
      %v441 = vpack.c.b16 %v435, %v434
      %v442 = vpack.c.b16 %v437, %v436
      %v443 = vpack.c.b16 %v439, %v438
      %v444 = vpack.c.b16 %v440, %v440
      %v449 = vsel %vm322, %v423, 0
      %v452 = vsel %vm322, %v424, 0
      %v455 = vsel %vm322, %v425, 0
      %v458 = vsel %vm322, %v426, 0
      %v461 = vand.u32 %v444, %v338
      %463 = vmatprep.subr.bf16.mxu0 0
      %464 = vmatpush1.bf16.msra.mxu0 %v441
      %465 = vmatprep.subr.bf16.mxu0 0
      %466 = vmatpush1.bf16.msra.mxu0 %v442
      %467 = vmatprep.subr.bf16.mxu0 0
      %468 = vmatpush1.bf16.msra.mxu0 %v443
      %469 = vmatprep.subr.bf16.mxu0 0
      %470 = vmatpush1.bf16.msra.mxu0 %v461
      %471 = vmatprep.subr.bf16.mxu0 0
      %472 = vmatpush1.bf16.msra.mxu0 0
      %473 = vmatprep.subr.bf16.mxu0 0
      %474 = vmatpush1.bf16.msra.mxu0 0
      %475 = vmatprep.subr.bf16.mxu0 0
      %476 = vmatpush1.bf16.msra.mxu0 0
      %477 = vmatprep.subr.bf16.mxu0 0
      %478 = vmatpush1.bf16.msra.mxu0 0
      %479 = vmatprep.subr.bf16.mxu0 0
      %480 = vmatpush1.bf16.msra.mxu0 0
      %481 = vmatprep.subr.bf16.mxu0 0
      %482 = vmatpush1.bf16.msra.mxu0 0
      %483 = vmatprep.subr.bf16.mxu0 0
      %484 = vmatpush1.bf16.msra.mxu0 0
      %485 = vmatprep.subr.bf16.mxu0 0
      %486 = vmatpush1.bf16.msra.mxu0 0
      %487 = vmatprep.subr.bf16.mxu0 0
      %488 = vmatpush1.bf16.msra.mxu0 0
      %489 = vmatprep.subr.bf16.mxu0 0
      %490 = vmatpush1.bf16.msra.mxu0 0
      %491 = vmatprep.subr.bf16.mxu0 0
      %492 = vmatpush1.bf16.msra.mxu0 0
      %493 = vmatprep.subr.bf16.mxu0 0
      %494 = vmatpush1.bf16.msra.mxu0 0
      %495 = vmatprep.mubr.bf16.mxu0 0
      %496 = vmatmul.mubr.bf16.gmra.mrb[0].mxu0 %v449
      %v497 = vpop.f32.mrb[0].mxu0
      %v498 = vadd.f32 %v377, %v497
      %v499 = vpop.f32.mrb[0].mxu0
      %v500 = vpop.f32.mrb[0].mxu0
      %v501 = vadd.f32 %v380, %v500
      %v502 = vpop.f32.mrb[0].mxu0
      %503 = vmatprep.mubr.bf16.mxu0 0
      %504 = vmatmul.mubr.bf16.gmra.mrb[0].mxu0 %v452
      %v505 = vpop.f32.mrb[0].mxu0
      %v506 = vadd.f32 %v385, %v505
      %v507 = vpop.f32.mrb[0].mxu0
      %v508 = vpop.f32.mrb[0].mxu0
      %v509 = vadd.f32 %v388, %v508
      %v510 = vpop.f32.mrb[0].mxu0
      %511 = vmatprep.mubr.bf16.mxu0 0
      %512 = vmatmul.mubr.bf16.gmra.mrb[0].mxu0 %v455
      %v513 = vpop.f32.mrb[0].mxu0
      %v514 = vadd.f32 %v393, %v513
      %v515 = vpop.f32.mrb[0].mxu0
      %v516 = vpop.f32.mrb[0].mxu0
      %v517 = vadd.f32 %v396, %v516
      %v518 = vpop.f32.mrb[0].mxu0
      %519 = vmatprep.mubr.bf16.mxu0 0
      %520 = vmatmul.mubr.bf16.gmra.mrb[0].mxu0 %v458
      %v521 = vpop.f32.mrb[0].mxu0
      %v522 = vadd.f32 %v401, %v521
      %v523 = vpop.f32.mrb[0].mxu0
      %v524 = vpop.f32.mrb[0].mxu0
      %v525 = vadd.f32 %v404, %v524
      %v526 = vpop.f32.mrb[0].mxu0
      %527 = vdwg.mxu0
      %s528 = scalar_lea.vmem %s235, 8
      %v529 = vld [vmem:[%s528] sm:$0xf]
      %v530 = vld [vmem:[%s528 + $0x4] sm:$0xf]
      %v531 = vld [vmem:[%s528 + $0x8] sm:$0xf]
      %v532 = vld [vmem:[%s528 + $0xc] sm:$0xf]
      %v533 = vld [vmem:[%s528 + $0x10] sm:$0xf]
      %v534 = vld [vmem:[%s528 + $0x14] sm:$0xf]
      %v535 = vld [vmem:[%s528 + $0x18] sm:$0xf]
      %v536 = vld [vmem:[%s528 + $0x1c] sm:$0xf]
      %s537 = scalar_lea.vmem %s1, 56
      %v538 = vld [vmem:[%s537] sm:$0xf]
      %v539 = vld [vmem:[%s537 + $0x4] sm:$0xf]
      %v540 = vld [vmem:[%s537 + $0x8] sm:$0xf]
      %v541 = vld [vmem:[%s537 + $0xc] sm:$0xf]
      %v542 = vld [vmem:[%s537 + $0x10] sm:$0xf]
      %v543 = vld [vmem:[%s537 + $0x14] sm:$0xf]
      %v544 = vld [vmem:[%s537 + $0x18] sm:$0x3]
      %v553 = vunpack.c.l.b16 %v529
      %v554 = vunpack.c.l.b16 %v530
      %v555 = vunpack.c.l.b16 %v531
      %v556 = vunpack.c.l.b16 %v532
      %v557 = vunpack.c.l.b16 %v533
      %v558 = vunpack.c.l.b16 %v534
      %v559 = vunpack.c.l.b16 %v535
      %v560 = vunpack.c.l.b16 %v536
      %v561 = vpack.c.b16 %v554, %v553
      %v562 = vpack.c.b16 %v556, %v555
      %v563 = vpack.c.b16 %v558, %v557
      %v564 = vpack.c.b16 %v560, %v559
      %v572 = vunpack.c.l.b16 %v538
      %v573 = vunpack.c.l.b16 %v539
      %v574 = vunpack.c.l.b16 %v540
      %v575 = vunpack.c.l.b16 %v541
      %v576 = vunpack.c.l.b16 %v542
      %v577 = vunpack.c.l.b16 %v543
      %v578 = vunpack.c.l.b16 %v544
      %v579 = vpack.c.b16 %v573, %v572
      %v580 = vpack.c.b16 %v575, %v574
      %v581 = vpack.c.b16 %v577, %v576
      %v582 = vpack.c.b16 %v578, %v578
      %v587 = vsel %vm322, %v561, 0
      %v590 = vsel %vm322, %v562, 0
      %v593 = vsel %vm322, %v563, 0
      %v596 = vsel %vm322, %v564, 0
      %v599 = vand.u32 %v582, %v338
      %601 = vmatprep.subr.bf16.mxu0 0
      %602 = vmatpush1.bf16.msra.mxu0 %v579
      %603 = vmatprep.subr.bf16.mxu0 0
      %604 = vmatpush1.bf16.msra.mxu0 %v580
      %605 = vmatprep.subr.bf16.mxu0 0
      %606 = vmatpush1.bf16.msra.mxu0 %v581
      %607 = vmatprep.subr.bf16.mxu0 0
      %608 = vmatpush1.bf16.msra.mxu0 %v599
      %609 = vmatprep.subr.bf16.mxu0 0
      %610 = vmatpush1.bf16.msra.mxu0 0
      %611 = vmatprep.subr.bf16.mxu0 0
      %612 = vmatpush1.bf16.msra.mxu0 0
      %613 = vmatprep.subr.bf16.mxu0 0
      %614 = vmatpush1.bf16.msra.mxu0 0
      %615 = vmatprep.subr.bf16.mxu0 0
      %616 = vmatpush1.bf16.msra.mxu0 0
      %617 = vmatprep.subr.bf16.mxu0 0
      %618 = vmatpush1.bf16.msra.mxu0 0
      %619 = vmatprep.subr.bf16.mxu0 0
      %620 = vmatpush1.bf16.msra.mxu0 0
      %621 = vmatprep.subr.bf16.mxu0 0
      %622 = vmatpush1.bf16.msra.mxu0 0
      %623 = vmatprep.subr.bf16.mxu0 0
      %624 = vmatpush1.bf16.msra.mxu0 0
      %625 = vmatprep.subr.bf16.mxu0 0
      %626 = vmatpush1.bf16.msra.mxu0 0
      %627 = vmatprep.subr.bf16.mxu0 0
      %628 = vmatpush1.bf16.msra.mxu0 0
      %629 = vmatprep.subr.bf16.mxu0 0
      %630 = vmatpush1.bf16.msra.mxu0 0
      %631 = vmatprep.subr.bf16.mxu0 0
      %632 = vmatpush1.bf16.msra.mxu0 0
      %633 = vmatprep.mubr.bf16.mxu0 0
      %634 = vmatmul.mubr.bf16.gmra.mrb[0].mxu0 %v587
      %v635 = vpop.f32.mrb[0].mxu0
      %v636 = vadd.f32 0.0, %v635
      %v637 = vpop.f32.mrb[0].mxu0
      %v638 = vpop.f32.mrb[0].mxu0
      %v639 = vadd.f32 0.0, %v638
      %v640 = vpop.f32.mrb[0].mxu0
      %641 = vmatprep.mubr.bf16.mxu0 0
      %642 = vmatmul.mubr.bf16.gmra.mrb[0].mxu0 %v590
      %v643 = vpop.f32.mrb[0].mxu0
      %v644 = vadd.f32 0.0, %v643
      %v645 = vpop.f32.mrb[0].mxu0
      %v646 = vpop.f32.mrb[0].mxu0
      %v647 = vadd.f32 0.0, %v646
      %v648 = vpop.f32.mrb[0].mxu0
      %649 = vmatprep.mubr.bf16.mxu0 0
      %650 = vmatmul.mubr.bf16.gmra.mrb[0].mxu0 %v593
      %v651 = vpop.f32.mrb[0].mxu0
      %v652 = vadd.f32 0.0, %v651
      %v653 = vpop.f32.mrb[0].mxu0
      %v654 = vpop.f32.mrb[0].mxu0
      %v655 = vadd.f32 0.0, %v654
      %v656 = vpop.f32.mrb[0].mxu0
      %657 = vmatprep.mubr.bf16.mxu0 0
      %658 = vmatmul.mubr.bf16.gmra.mrb[0].mxu0 %v596
      %v659 = vpop.f32.mrb[0].mxu0
      %v660 = vadd.f32 0.0, %v659
      %v661 = vpop.f32.mrb[0].mxu0
      %v662 = vpop.f32.mrb[0].mxu0
      %v663 = vadd.f32 0.0, %v662
      %v664 = vpop.f32.mrb[0].mxu0
      %665 = vdwg.mxu0
      %v666 = vadd.f32 %v498, %v636
      %v667 = vadd.f32 %v501, %v639
      %v668 = vadd.f32 %v506, %v644
      %v669 = vadd.f32 %v509, %v647
      %v670 = vadd.f32 %v514, %v652
      %v671 = vadd.f32 %v517, %v655
      %v672 = vadd.f32 %v522, %v660
      %v673 = vadd.f32 %v525, %v663
      %v674 = vld [vmem:[%s240] sm:$0xf]
      %v675 = vld [vmem:[%s240 + $0x4] sm:$0xf]
      %v676 = vld [vmem:[%s240 + $0x8] sm:$0xf]
      %v677 = vld [vmem:[%s240 + $0xc] sm:$0xf]
      %v678 = vld [vmem:[%s240 + $0x10] sm:$0xf]
      %v679 = vld [vmem:[%s240 + $0x14] sm:$0xf]
      %v680 = vld [vmem:[%s240 + $0x18] sm:$0xf]
      %v681 = vld [vmem:[%s240 + $0x1c] sm:$0xf]
      %v682 = vld [vmem:[%s4] sm:$0xf]
      %v683 = vld [vmem:[%s4 + $0x4] sm:$0xf]
      %v692 = vunpack.c.l.b16 %v674
      %v693 = vunpack.c.l.b16 %v675
      %v694 = vunpack.c.l.b16 %v676
      %v695 = vunpack.c.l.b16 %v677
      %v696 = vunpack.c.l.b16 %v678
      %v697 = vunpack.c.l.b16 %v679
      %v698 = vunpack.c.l.b16 %v680
      %v699 = vunpack.c.l.b16 %v681
      %v700 = vpack.c.b16 %v693, %v692
      %v701 = vpack.c.b16 %v695, %v694
      %v702 = vpack.c.b16 %v697, %v696
      %v703 = vpack.c.b16 %v699, %v698
      %v706 = vunpack.c.l.b16 %v682
      %v707 = vunpack.c.l.b16 %v683
      %v708 = vpack.c.b16 %v707, %v706
      %vm710 = vcmask 130048
      %v712 = vsel %vm710, %v700, 0
      %v715 = vsel %vm710, %v701, 0
      %v718 = vsel %vm710, %v702, 0
      %v721 = vsel %vm710, %v703, 0
      %723 = vmatprep.subr.bf16.mxu0 0
      %724 = vmatpush1.bf16.msra.mxu0 %v708
      %725 = vmatprep.subr.bf16.mxu0 0
      %726 = vmatpush1.bf16.msra.mxu0 0
      %727 = vmatprep.subr.bf16.mxu0 0
      %728 = vmatpush1.bf16.msra.mxu0 0
      %729 = vmatprep.subr.bf16.mxu0 0
      %730 = vmatpush1.bf16.msra.mxu0 0
      %731 = vmatprep.subr.bf16.mxu0 0
      %732 = vmatpush1.bf16.msra.mxu0 0
      %733 = vmatprep.subr.bf16.mxu0 0
      %734 = vmatpush1.bf16.msra.mxu0 0
      %735 = vmatprep.subr.bf16.mxu0 0
      %736 = vmatpush1.bf16.msra.mxu0 0
      %737 = vmatprep.subr.bf16.mxu0 0
      %738 = vmatpush1.bf16.msra.mxu0 0
      %739 = vmatprep.subr.bf16.mxu0 0
      %740 = vmatpush1.bf16.msra.mxu0 0
      %741 = vmatprep.subr.bf16.mxu0 0
      %742 = vmatpush1.bf16.msra.mxu0 0
      %743 = vmatprep.subr.bf16.mxu0 0
      %744 = vmatpush1.bf16.msra.mxu0 0
      %745 = vmatprep.subr.bf16.mxu0 0
      %746 = vmatpush1.bf16.msra.mxu0 0
      %747 = vmatprep.subr.bf16.mxu0 0
      %748 = vmatpush1.bf16.msra.mxu0 0
      %749 = vmatprep.subr.bf16.mxu0 0
      %750 = vmatpush1.bf16.msra.mxu0 0
      %751 = vmatprep.subr.bf16.mxu0 0
      %752 = vmatpush1.bf16.msra.mxu0 0
      %753 = vmatprep.subr.bf16.mxu0 0
      %754 = vmatpush1.bf16.msra.mxu0 0
      %755 = vmatprep.mubr.bf16.mxu0 0
      %756 = vmatmul.mubr.bf16.gmra.mrb[0].mxu0 %v712
      %v757 = vpop.f32.mrb[0].mxu0
      %v758 = vadd.f32 0.0, %v757
      %v759 = vpop.f32.mrb[0].mxu0
      %v760 = vpop.f32.mrb[0].mxu0
      %v761 = vadd.f32 0.0, %v760
      %v762 = vpop.f32.mrb[0].mxu0
      %763 = vmatprep.mubr.bf16.mxu0 0
      %764 = vmatmul.mubr.bf16.gmra.mrb[0].mxu0 %v715
      %v765 = vpop.f32.mrb[0].mxu0
      %v766 = vadd.f32 0.0, %v765
      %v767 = vpop.f32.mrb[0].mxu0
      %v768 = vpop.f32.mrb[0].mxu0
      %v769 = vadd.f32 0.0, %v768
      %v770 = vpop.f32.mrb[0].mxu0
      %771 = vmatprep.mubr.bf16.mxu0 0
      %772 = vmatmul.mubr.bf16.gmra.mrb[0].mxu0 %v718
      %v773 = vpop.f32.mrb[0].mxu0
      %v774 = vadd.f32 0.0, %v773
      %v775 = vpop.f32.mrb[0].mxu0
      %v776 = vpop.f32.mrb[0].mxu0
      %v777 = vadd.f32 0.0, %v776
      %v778 = vpop.f32.mrb[0].mxu0
      %779 = vmatprep.mubr.bf16.mxu0 0
      %780 = vmatmul.mubr.bf16.gmra.mrb[0].mxu0 %v721
      %v781 = vpop.f32.mrb[0].mxu0
      %v782 = vadd.f32 0.0, %v781
      %v783 = vpop.f32.mrb[0].mxu0
      %v784 = vpop.f32.mrb[0].mxu0
      %v785 = vadd.f32 0.0, %v784
      %v786 = vpop.f32.mrb[0].mxu0
      %787 = vdwg.mxu0
      %v788 = vadd.f32 %v666, %v758
      %v789 = vadd.f32 %v667, %v761
      %v790 = vadd.f32 %v668, %v766
      %v791 = vadd.f32 %v669, %v769
      %v792 = vadd.f32 %v670, %v774
      %v793 = vadd.f32 %v671, %v777
      %v794 = vadd.f32 %v672, %v782
      %v795 = vadd.f32 %v673, %v785
      %v796 = vld [vmem:[%s2] sm:$0x1]
      %v798 = vlaneseq
      %v799 = vshrl.u32 %v798, 7
      %v800 = vsub.s32 0, %v799
      %v801 = vrot.slane %v796, %v800
      %v803 = vadd.f32 %v788, %v801
      %v804 = vadd.f32 %v789, %v801
      %v805 = vadd.f32 %v790, %v801
      %v806 = vadd.f32 %v791, %v801
      %v807 = vadd.f32 %v792, %v801
      %v808 = vadd.f32 %v793, %v801
      %v809 = vadd.f32 %v794, %v801
      %v810 = vadd.f32 %v795, %v801
      %v811 = vxor.u32 %v803, 2147483648
      %v812 = vxor.u32 %v804, 2147483648
      %v813 = vxor.u32 %v805, 2147483648
      %v814 = vxor.u32 %v806, 2147483648
      %v815 = vxor.u32 %v807, 2147483648
      %v816 = vxor.u32 %v808, 2147483648
      %v817 = vxor.u32 %v809, 2147483648
      %v818 = vxor.u32 %v810, 2147483648
      %v819 = vmul.f32 %v811, 1.442695
      %v820 = vpow.pop %v819
      %v821 = vmul.f32 %v812, 1.442695
      %v822 = vpow.pop %v821
      %v823 = vmul.f32 %v813, 1.442695
      %v824 = vpow.pop %v823
      %v825 = vmul.f32 %v814, 1.442695
      %v826 = vpow.pop %v825
      %v827 = vmul.f32 %v815, 1.442695
      %v828 = vpow.pop %v827
      %v829 = vmul.f32 %v816, 1.442695
      %v830 = vpow.pop %v829
      %v831 = vmul.f32 %v817, 1.442695
      %v832 = vpow.pop %v831
      %v833 = vmul.f32 %v818, 1.442695
      %v834 = vpow.pop %v833
      %v835 = vadd.f32 %v820, 1.0
      %v836 = vadd.f32 %v822, 1.0
      %v837 = vadd.f32 %v824, 1.0
      %v838 = vadd.f32 %v826, 1.0
      %v839 = vadd.f32 %v828, 1.0
      %v840 = vadd.f32 %v830, 1.0
      %v841 = vadd.f32 %v832, 1.0
      %v842 = vadd.f32 %v834, 1.0
      %v843 = vrcp.pop %v835
      %v844 = vmul.f32 1.0, %v843
      %v845 = vrcp.pop %v836
      %v846 = vmul.f32 1.0, %v845
      %v847 = vrcp.pop %v837
      %v848 = vmul.f32 1.0, %v847
      %v849 = vrcp.pop %v838
      %v850 = vmul.f32 1.0, %v849
      %v851 = vrcp.pop %v839
      %v852 = vmul.f32 1.0, %v851
      %v853 = vrcp.pop %v840
      %v854 = vmul.f32 1.0, %v853
      %v855 = vrcp.pop %v841
      %v856 = vmul.f32 1.0, %v855
      %v857 = vrcp.pop %v842
      %v858 = vmul.f32 1.0, %v857
      %vm859 = vcmp.gt.f32.partialorder %v803, 0.0
      %vm860 = vcmp.gt.f32.partialorder %v804, 0.0
      %vm861 = vcmp.gt.f32.partialorder %v805, 0.0
      %vm862 = vcmp.gt.f32.partialorder %v806, 0.0
      %vm863 = vcmp.gt.f32.partialorder %v807, 0.0
      %vm864 = vcmp.gt.f32.partialorder %v808, 0.0
      %vm865 = vcmp.gt.f32.partialorder %v809, 0.0
      %vm866 = vcmp.gt.f32.partialorder %v810, 0.0
      %v867 = vmul.f32 %v803, 0.2
      %v868 = vmul.f32 %v804, 0.2
      %v869 = vmul.f32 %v805, 0.2
      %v870 = vmul.f32 %v806, 0.2
      %v871 = vmul.f32 %v807, 0.2
      %v872 = vmul.f32 %v808, 0.2
      %v873 = vmul.f32 %v809, 0.2
      %v874 = vmul.f32 %v810, 0.2
      %v875 = vsel %vm859, %v803, %v867
      %v876 = vsel %vm860, %v804, %v868
      %v877 = vsel %vm861, %v805, %v869
      %v878 = vsel %vm862, %v806, %v870
      %v879 = vsel %vm863, %v807, %v871
      %v880 = vsel %vm864, %v808, %v872
      %v881 = vsel %vm865, %v809, %v873
      %v882 = vsel %vm866, %v810, %v874
      %884 = vset.pattern.permute.xlu0 16
      %885 = vperm.xlu0 %884, %v844
      %v886 = vpop.permute.xlu0 %885
      %889 = vset.pattern.permute.xlu0 16
      %890 = vperm.xlu0 %889, %v846
      %v891 = vpop.permute.xlu0 %890
      %894 = vset.pattern.permute.xlu0 16
      %895 = vperm.xlu0 %894, %v848
      %v896 = vpop.permute.xlu0 %895
      %899 = vset.pattern.permute.xlu0 16
      %900 = vperm.xlu0 %899, %v850
      %v901 = vpop.permute.xlu0 %900
      %904 = vset.pattern.permute.xlu0 16
      %905 = vperm.xlu0 %904, %v852
      %v906 = vpop.permute.xlu0 %905
      %909 = vset.pattern.permute.xlu0 16
      %910 = vperm.xlu0 %909, %v854
      %v911 = vpop.permute.xlu0 %910
      %914 = vset.pattern.permute.xlu0 16
      %915 = vperm.xlu0 %914, %v856
      %v916 = vpop.permute.xlu0 %915
      %919 = vset.pattern.permute.xlu0 16
      %920 = vperm.xlu0 %919, %v858
      %v921 = vpop.permute.xlu0 %920
      %v923 = vmul.f32 %v875, %v886
      %v924 = vmul.f32 %v876, %v891
      %v925 = vmul.f32 %v877, %v896
      %v926 = vmul.f32 %v878, %v901
      %v927 = vmul.f32 %v879, %v906
      %v928 = vmul.f32 %v880, %v911
      %v929 = vmul.f32 %v881, %v916
      %v930 = vmul.f32 %v882, %v921
      %v931 = vlaneseq
      %v932 = vand.u32 %v931, 127
      %vm933 = vcmp.lt.s32.totalorder %v932, 16
      %v934 = vsel %vm933, %v923, %v886
      %v935 = vsel %vm933, %v924, %v891
      %v936 = vsel %vm933, %v925, %v896
      %v937 = vsel %vm933, %v926, %v901
      %v938 = vsel %vm933, %v927, %v906
      %v939 = vsel %vm933, %v928, %v911
      %v940 = vsel %vm933, %v929, %v916
      %v941 = vsel %vm933, %v930, %v921
      %vm942 = vcmask 138240
      %943 = vst.msk [vmem:[%s246] sm:$0xff] %vm942, %v934
      %944 = vst.msk [vmem:[%s246 + $0x8] sm:$0xff] %vm942, %v935
      %945 = vst.msk [vmem:[%s246 + $0x10] sm:$0xff] %vm942, %v936
      %946 = vst.msk [vmem:[%s246 + $0x18] sm:$0xff] %vm942, %v937
      %947 = vst.msk [vmem:[%s246 + $0x20] sm:$0xff] %vm942, %v938
      %948 = vst.msk [vmem:[%s246 + $0x28] sm:$0xff] %vm942, %v939
      %949 = vst.msk [vmem:[%s246 + $0x30] sm:$0xff] %vm942, %v940
      %950 = vst.msk [vmem:[%s246 + $0x38] sm:$0xff] %vm942, %v941
      %s951 = smul.u32 8, %s16
      %p952 = scmp.lt.s32.totalorder %s951, 15
      %s953 = scalar_select %p952, %s951, 15
      %s954 = smul.addr %s953, 8
      %s955 = scalar_lea.vmem %s5, %s954
      // Predicated region
      $region41: #{object_encoder_v4_forward.14} parent=39 // pred_check
        %p956 = pneg %p149
      $region42: #{object_encoder_v4_forward.14} parent=39 // pred_check_branch
        %958 = sbr.rel (%p956) target = $region44
      $region43: #{object_encoder_v4_forward.14} parent=39 // pred_region
        %s959 = smul.u32 8, %s16
      $region44: #{object_encoder_v4_forward.14} parent=39 // pred_fallthru
        _
    $region40: #{object_encoder_v4_forward.14} parent=5 // pred_fallthru
      _
    %p960 = scmp.le.s32.totalorder 2, %s11
    // Predicated region
    $region45: #{object_encoder_v4_forward.14} parent=5 // pred_check
      %p961 = pneg %p960
    $region46: #{object_encoder_v4_forward.14} parent=5 // pred_check_branch
      %963 = sbr.rel (%p961) target = $region48
    $region47: #{object_encoder_v4_forward.14} parent=5 // pred_region
      %s964 = ssub.s32 %s11, 2
      // Predicated region
      $region49: #{object_encoder_v4_forward.14} parent=47 // pred_check
        %p965 = pneg %p155
      $region50: #{object_encoder_v4_forward.14} parent=47 // pred_check_branch
        %967 = sbr.rel (%p965) target = $region52
      $region51: #{object_encoder_v4_forward.14} parent=47 // pred_region
        %s968 = smul.u32 8, %s17
        %p969 = scmp.lt.s32.totalorder %s968, 15
        %s970 = scalar_select %p969, %s968, 15
        %s971 = smul.addr %s970, 8
        %s972 = scalar_lea.vmem %s5, %s971
      $region52: #{object_encoder_v4_forward.14} parent=47 // pred_fallthru
        _
    $region48: #{object_encoder_v4_forward.14} parent=5 // pred_fallthru
      _
  $region6: #{object_encoder_v4_forward.14} parent=0 // loop_footer
    %s15 = sadd.s32 1, %s11
  $region7: #{object_encoder_v4_forward.14} parent=0 // loop_footer_branch
    %10 = sbr.rel target = $region3
  $region8: #{object_encoder_v4_forward.14} parent=0 // loop_exit
    _

// kernel: object_encoder_v4_forward.18
$region0: #{object_encoder_v4_forward.18}
  #allocation0 [shape = 'u32[]', space=smem, size = 0x4, offset = 0x4, fixed_abs, tag = 'smem constant byte address 0x4 - core index']
  #allocation1 [shape = 'u32[144,128]{1,0:T(1,128)}', space=vmem, size = 0x12000, scoped, tag = 'internal scratch']
  %s0 = inlined_call_operand.vmem [shape: bf16[32,288], index: 0, kind: input, shape index: {}]
  %s1 = inlined_call_operand.vmem [shape: bf16[288,32], index: 1, kind: input, shape index: {}]
  %s2 = inlined_call_operand.vmem [shape: f32[1,32], index: 2, kind: input, shape index: {}]
  %s3 = inlined_call_operand.vmem [shape: bf16[32,32], index: 3, kind: input, shape index: {}]
  %s4 = inlined_call_operand.vmem [shape: bf16[32,32], index: 4, kind: output, shape index: {}]
  %s5 = sld [smem:[#allocation0]]
  $region26: #{object_encoder_v4_forward.18} parent=0
    _
  %s7 = ssub.s32 1, %s5
  %s8 = scalar_select 0, %s7, %s5
  // Predicated region
  $region2: #{object_encoder_v4_forward.18} parent=0 // pred_check
    _
  $region3: #{object_encoder_v4_forward.18} parent=0 // pred_check_branch
    %10 = sbr.rel (0) target = $region5
  $region4: #{object_encoder_v4_forward.18} parent=0 // pred_region
    _
  $region5: #{object_encoder_v4_forward.18} parent=0 // pred_fallthru
    _
  // Predicated region
  $region6: #{object_encoder_v4_forward.18} parent=0 // pred_check
    _
  $region7: #{object_encoder_v4_forward.18} parent=0 // pred_check_branch
    %12 = sbr.rel (0) target = $region9
  $region8: #{object_encoder_v4_forward.18} parent=0 // pred_region
    _
  $region9: #{object_encoder_v4_forward.18} parent=0 // pred_fallthru
    _
  // Predicated region
  $region10: #{object_encoder_v4_forward.18} parent=0 // pred_check
    _
  $region11: #{object_encoder_v4_forward.18} parent=0 // pred_check_branch
    %14 = sbr.rel (0) target = $region13
  $region12: #{object_encoder_v4_forward.18} parent=0 // pred_region
    _
  $region13: #{object_encoder_v4_forward.18} parent=0 // pred_fallthru
    _
  // Predicated region
  $region14: #{object_encoder_v4_forward.18} parent=0 // pred_check
    _
  $region15: #{object_encoder_v4_forward.18} parent=0 // pred_check_branch
    %16 = sbr.rel (0) target = $region17
  $region16: #{object_encoder_v4_forward.18} parent=0 // pred_region
    _
  $region17: #{object_encoder_v4_forward.18} parent=0 // pred_fallthru
    _
  %v18 = vld [vmem:[%s0] sm:$0xff]
  %v19 = vld [vmem:[%s0 + $0x8] sm:$0xf]
  %v20 = vld [vmem:[%s0 + $0xc] sm:$0xff]
  %v21 = vld [vmem:[%s0 + $0x14] sm:$0xf]
  %v22 = vld [vmem:[%s0 + $0x18] sm:$0xff]
  %v23 = vld [vmem:[%s0 + $0x20] sm:$0xf]
  %v24 = vld [vmem:[%s0 + $0x24] sm:$0xff]
  %v25 = vld [vmem:[%s0 + $0x2c] sm:$0xf]
  %v26 = vld [vmem:[%s1] sm:$0xf]
  %v27 = vld [vmem:[%s1 + $0x4] sm:$0xf]
  %v28 = vld [vmem:[%s1 + $0x8] sm:$0xf]
  %v29 = vld [vmem:[%s1 + $0xc] sm:$0xf]
  %v30 = vld [vmem:[%s1 + $0x10] sm:$0xf]
  %v31 = vld [vmem:[%s1 + $0x14] sm:$0xf]
  %v32 = vld [vmem:[%s1 + $0x18] sm:$0xf]
  %v33 = vld [vmem:[%s1 + $0x1c] sm:$0xf]
  %v34 = vld [vmem:[%s1 + $0x20] sm:$0xf]
  %v35 = vld [vmem:[%s1 + $0x24] sm:$0xf]
  %v36 = vld [vmem:[%s1 + $0x28] sm:$0xf]
  %v37 = vld [vmem:[%s1 + $0x2c] sm:$0xf]
  %v38 = vld [vmem:[%s1 + $0x30] sm:$0xf]
  %v39 = vld [vmem:[%s1 + $0x34] sm:$0xf]
  %v40 = vld [vmem:[%s1 + $0x38] sm:$0xf]
  %v41 = vld [vmem:[%s1 + $0x3c] sm:$0xf]
  %v42 = vld [vmem:[%s1 + $0x40] sm:$0xf]
  %v43 = vld [vmem:[%s1 + $0x44] sm:$0xf]
  %v44 = vld [vmem:[%s1 + $0x48] sm:$0xf]
  %v45 = vld [vmem:[%s1 + $0x4c] sm:$0xf]
  %v46 = vld [vmem:[%s1 + $0x50] sm:$0xf]
  %v47 = vld [vmem:[%s1 + $0x54] sm:$0xf]
  %v48 = vld [vmem:[%s1 + $0x58] sm:$0xf]
  %v49 = vld [vmem:[%s1 + $0x5c] sm:$0xf]
  %v50 = vld [vmem:[%s1 + $0x60] sm:$0xf]
  %v51 = vld [vmem:[%s1 + $0x64] sm:$0xf]
  %v52 = vld [vmem:[%s1 + $0x68] sm:$0xf]
  %v53 = vld [vmem:[%s1 + $0x6c] sm:$0xf]
  %v54 = vld [vmem:[%s1 + $0x70] sm:$0xf]
  %v55 = vld [vmem:[%s1 + $0x74] sm:$0xf]
  %v56 = vld [vmem:[%s1 + $0x78] sm:$0xf]
  %v57 = vld [vmem:[%s1 + $0x7c] sm:$0xf]
  %v58 = vld [vmem:[%s1 + $0x80] sm:$0xf]
  %v59 = vld [vmem:[%s1 + $0x84] sm:$0xf]
  %v60 = vld [vmem:[%s1 + $0x88] sm:$0xf]
  %v61 = vld [vmem:[%s1 + $0x8c] sm:$0xf]
  %v62 = vld [vmem:[%s2] sm:$0x1]
  %v64 = vlaneseq
  %v65 = vshrl.u32 %v64, 7
  %v66 = vsub.s32 0, %v65
  %v67 = vrot.slane %v62, %v66
  %v77 = vunpack.c.l.b16 %v18
  %v78 = vunpack.c.h.b16 %v18
  %v79 = vunpack.c.l.b16 %v19
  %v80 = vunpack.c.l.b16 %v20
  %v81 = vunpack.c.h.b16 %v20
  %v82 = vunpack.c.l.b16 %v21
  %v83 = vunpack.c.l.b16 %v22
  %v84 = vunpack.c.h.b16 %v22
  %v85 = vunpack.c.l.b16 %v23
  %v86 = vunpack.c.l.b16 %v24
  %v87 = vunpack.c.h.b16 %v24
  %v88 = vunpack.c.l.b16 %v25
  %v89 = vpack.c.b16 %v80, %v77
  %v90 = vpack.c.b16 %v81, %v78
  %v91 = vpack.c.b16 %v82, %v79
  %v92 = vpack.c.b16 %v86, %v83
  %v93 = vpack.c.b16 %v87, %v84
  %v94 = vpack.c.b16 %v88, %v85
  %v135 = vunpack.c.l.b16 %v26
  %v136 = vunpack.c.l.b16 %v27
  %v137 = vunpack.c.l.b16 %v28
  %v138 = vunpack.c.l.b16 %v29
  %v139 = vunpack.c.l.b16 %v30
  %v140 = vunpack.c.l.b16 %v31
  %v141 = vunpack.c.l.b16 %v32
  %v142 = vunpack.c.l.b16 %v33
  %v143 = vunpack.c.l.b16 %v34
  %v144 = vunpack.c.l.b16 %v35
  %v145 = vunpack.c.l.b16 %v36
  %v146 = vunpack.c.l.b16 %v37
  %v147 = vunpack.c.l.b16 %v38
  %v148 = vunpack.c.l.b16 %v39
  %v149 = vunpack.c.l.b16 %v40
  %v150 = vunpack.c.l.b16 %v41
  %v151 = vunpack.c.l.b16 %v42
  %v152 = vunpack.c.l.b16 %v43
  %v153 = vunpack.c.l.b16 %v44
  %v154 = vunpack.c.l.b16 %v45
  %v155 = vunpack.c.l.b16 %v46
  %v156 = vunpack.c.l.b16 %v47
  %v157 = vunpack.c.l.b16 %v48
  %v158 = vunpack.c.l.b16 %v49
  %v159 = vunpack.c.l.b16 %v50
  %v160 = vunpack.c.l.b16 %v51
  %v161 = vunpack.c.l.b16 %v52
  %v162 = vunpack.c.l.b16 %v53
  %v163 = vunpack.c.l.b16 %v54
  %v164 = vunpack.c.l.b16 %v55
  %v165 = vunpack.c.l.b16 %v56
  %v166 = vunpack.c.l.b16 %v57
  %v167 = vunpack.c.l.b16 %v58
  %v168 = vunpack.c.l.b16 %v59
  %v169 = vunpack.c.l.b16 %v60
  %v170 = vunpack.c.l.b16 %v61
  %v171 = vpack.c.b16 %v136, %v135
  %v172 = vpack.c.b16 %v138, %v137
  %v173 = vpack.c.b16 %v140, %v139
  %v174 = vpack.c.b16 %v142, %v141
  %v175 = vpack.c.b16 %v144, %v143
  %v176 = vpack.c.b16 %v146, %v145
  %v177 = vpack.c.b16 %v148, %v147
  %v178 = vpack.c.b16 %v150, %v149
  %v179 = vpack.c.b16 %v152, %v151
  %v180 = vpack.c.b16 %v154, %v153
  %v181 = vpack.c.b16 %v156, %v155
  %v182 = vpack.c.b16 %v158, %v157
  %v183 = vpack.c.b16 %v160, %v159
  %v184 = vpack.c.b16 %v162, %v161
  %v185 = vpack.c.b16 %v164, %v163
  %v186 = vpack.c.b16 %v166, %v165
  %v187 = vpack.c.b16 %v168, %v167
  %v188 = vpack.c.b16 %v170, %v169
  %vm207 = vcmask 261120
  %v209 = vsel %vm207, %v91, 0
  %v212 = vsel %vm207, %v94, 0
  %214 = vmatprep.subr.bf16.mxu0 0
  %215 = vmatpush1.bf16.msra.mxu0 %v171
  %216 = vmatprep.subr.bf16.mxu0 0
  %217 = vmatpush1.bf16.msra.mxu0 %v172
  %218 = vmatprep.subr.bf16.mxu0 0
  %219 = vmatpush1.bf16.msra.mxu0 %v173
  %220 = vmatprep.subr.bf16.mxu0 0
  %221 = vmatpush1.bf16.msra.mxu0 %v174
  %222 = vmatprep.subr.bf16.mxu0 0
  %223 = vmatpush1.bf16.msra.mxu0 %v175
  %224 = vmatprep.subr.bf16.mxu0 0
  %225 = vmatpush1.bf16.msra.mxu0 %v176
  %226 = vmatprep.subr.bf16.mxu0 0
  %227 = vmatpush1.bf16.msra.mxu0 %v177
  %228 = vmatprep.subr.bf16.mxu0 0
  %229 = vmatpush1.bf16.msra.mxu0 %v178
  %230 = vmatprep.subr.bf16.mxu0 0
  %231 = vmatpush1.bf16.msra.mxu0 %v179
  %232 = vmatprep.subr.bf16.mxu0 0
  %233 = vmatpush1.bf16.msra.mxu0 %v180
  %234 = vmatprep.subr.bf16.mxu0 0
  %235 = vmatpush1.bf16.msra.mxu0 %v181
  %236 = vmatprep.subr.bf16.mxu0 0
  %237 = vmatpush1.bf16.msra.mxu0 %v182
  %238 = vmatprep.subr.bf16.mxu0 0
  %239 = vmatpush1.bf16.msra.mxu0 %v183
  %240 = vmatprep.subr.bf16.mxu0 0
  %241 = vmatpush1.bf16.msra.mxu0 %v184
  %242 = vmatprep.subr.bf16.mxu0 0
  %243 = vmatpush1.bf16.msra.mxu0 %v185
  %244 = vmatprep.subr.bf16.mxu0 0
  %245 = vmatpush1.bf16.msra.mxu0 %v186
  %246 = vmatprep.mubr.bf16.mxu0 %v90
  %247 = vmatmul.mubr.bf16.gmra.mrb[0].mxu0 %v89
  %v248 = vpop.f32.mrb[0].mxu0
  %v249 = vadd.f32 %v67, %v248
  %v250 = vpop.f32.mrb[0].mxu0
  %v251 = vpop.f32.mrb[0].mxu0
  %v252 = vadd.f32 %v67, %v251
  %v253 = vpop.f32.mrb[0].mxu0
  %254 = vmatprep.mubr.bf16.mxu0 %v93
  %255 = vmatmul.mubr.bf16.gmra.mrb[0].mxu0 %v92
  %v256 = vpop.f32.mrb[0].mxu0
  %v257 = vadd.f32 %v67, %v256
  %v258 = vpop.f32.mrb[0].mxu0
  %v259 = vpop.f32.mrb[0].mxu0
  %v260 = vadd.f32 %v67, %v259
  %v261 = vpop.f32.mrb[0].mxu0
  %262 = vdwg.mxu0
  %263 = vmatprep.subr.bf16.mxu0 0
  %264 = vmatpush1.bf16.msra.mxu0 %v187
  %265 = vmatprep.subr.bf16.mxu0 0
  %266 = vmatpush1.bf16.msra.mxu0 %v188
  %267 = vmatprep.subr.bf16.mxu0 0
  %268 = vmatpush1.bf16.msra.mxu0 0
  %269 = vmatprep.subr.bf16.mxu0 0
  %270 = vmatpush1.bf16.msra.mxu0 0
  %271 = vmatprep.subr.bf16.mxu0 0
  %272 = vmatpush1.bf16.msra.mxu0 0
  %273 = vmatprep.subr.bf16.mxu0 0
  %274 = vmatpush1.bf16.msra.mxu0 0
  %275 = vmatprep.subr.bf16.mxu0 0
  %276 = vmatpush1.bf16.msra.mxu0 0
  %277 = vmatprep.subr.bf16.mxu0 0
  %278 = vmatpush1.bf16.msra.mxu0 0
  %279 = vmatprep.subr.bf16.mxu0 0
  %280 = vmatpush1.bf16.msra.mxu0 0
  %281 = vmatprep.subr.bf16.mxu0 0
  %282 = vmatpush1.bf16.msra.mxu0 0
  %283 = vmatprep.subr.bf16.mxu0 0
  %284 = vmatpush1.bf16.msra.mxu0 0
  %285 = vmatprep.subr.bf16.mxu0 0
  %286 = vmatpush1.bf16.msra.mxu0 0
  %287 = vmatprep.subr.bf16.mxu0 0
  %288 = vmatpush1.bf16.msra.mxu0 0
  %289 = vmatprep.subr.bf16.mxu0 0
  %290 = vmatpush1.bf16.msra.mxu0 0
  %291 = vmatprep.subr.bf16.mxu0 0
  %292 = vmatpush1.bf16.msra.mxu0 0
  %293 = vmatprep.subr.bf16.mxu0 0
  %294 = vmatpush1.bf16.msra.mxu0 0
  %295 = vmatprep.mubr.bf16.mxu0 0
  %296 = vmatmul.mubr.bf16.gmra.mrb[0].mxu0 %v209
  %v297 = vpop.f32.mrb[0].mxu0
  %v298 = vadd.f32 %v249, %v297
  %v299 = vpop.f32.mrb[0].mxu0
  %v300 = vpop.f32.mrb[0].mxu0
  %v301 = vadd.f32 %v252, %v300
  %v302 = vpop.f32.mrb[0].mxu0
  %303 = vmatprep.mubr.bf16.mxu0 0
  %304 = vmatmul.mubr.bf16.gmra.mrb[0].mxu0 %v212
  %v305 = vpop.f32.mrb[0].mxu0
  %v306 = vadd.f32 %v257, %v305
  %v307 = vpop.f32.mrb[0].mxu0
  %v308 = vpop.f32.mrb[0].mxu0
  %v309 = vadd.f32 %v260, %v308
  %v310 = vpop.f32.mrb[0].mxu0
  %311 = vdwg.mxu0
  %v312 = vld [vmem:[%s3] sm:$0xf]
  %v313 = vld [vmem:[%s3 + $0x4] sm:$0xf]
  %v314 = vld [vmem:[%s3 + $0x8] sm:$0xf]
  %v315 = vld [vmem:[%s3 + $0xc] sm:$0xf]
  %v316 = vunpack.c.l.bf16 %v312
  %v317 = vunpack.c.l.bf16 %v313
  %v318 = vunpack.c.l.bf16 %v314
  %v319 = vunpack.c.l.bf16 %v315
  %v320 = vadd.f32 %v298, %v316
  %v321 = vadd.f32 %v301, %v317
  %v322 = vadd.f32 %v306, %v318
  %v323 = vadd.f32 %v309, %v319
  %vm324 = vcmp.gt.f32.partialorder %v320, 0.0
  %vm325 = vcmp.gt.f32.partialorder %v321, 0.0
  %vm326 = vcmp.gt.f32.partialorder %v322, 0.0
  %vm327 = vcmp.gt.f32.partialorder %v323, 0.0
  %v328 = vmul.f32 %v320, 0.2
  %v329 = vmul.f32 %v321, 0.2
  %v330 = vmul.f32 %v322, 0.2
  %v331 = vmul.f32 %v323, 0.2
  %v332 = vsel %vm324, %v320, %v328
  %v333 = vsel %vm325, %v321, %v329
  %v334 = vsel %vm326, %v322, %v330
  %v335 = vsel %vm327, %v323, %v331
  %v336 = vpack.c.bf16 %v333, %v332
  %v337 = vpack.c.bf16 %v335, %v334
  %v340 = vunpack.c.l.b16 %v336
  %v341 = vunpack.c.h.b16 %v336
  %v342 = vunpack.c.l.b16 %v337
  %v343 = vunpack.c.h.b16 %v337
  %v344 = vpack.c.b16 %v340, %v340
  %v345 = vpack.c.b16 %v341, %v341
  %v346 = vpack.c.b16 %v342, %v342
  %v347 = vpack.c.b16 %v343, %v343
  %vm352 = vcmask 257024
  %353 = vst.msk [vmem:[%s4] sm:$0xf] %vm352, %v344
  %354 = vst.msk [vmem:[%s4 + $0x4] sm:$0xf] %vm352, %v345
  %355 = vst.msk [vmem:[%s4 + $0x8] sm:$0xf] %vm352, %v346
  %356 = vst.msk [vmem:[%s4 + $0xc] sm:$0xf] %vm352, %v347
  // Predicated region
  $region18: #{object_encoder_v4_forward.18} parent=0 // pred_check
    _
  $region19: #{object_encoder_v4_forward.18} parent=0 // pred_check_branch
    %358 = sbr.rel (0) target = $region21
  $region20: #{object_encoder_v4_forward.18} parent=0 // pred_region
    _
  $region21: #{object_encoder_v4_forward.18} parent=0 // pred_fallthru
    _
  // Predicated region
  $region22: #{object_encoder_v4_forward.18} parent=0 // pred_check
    _
  $region23: #{object_encoder_v4_forward.18} parent=0 // pred_check_branch
    %360 = sbr.rel (0) target = $region25
  $region24: #{object_encoder_v4_forward.18} parent=0 // pred_region
    _
  $region25: #{object_encoder_v4_forward.18} parent=0 // pred_fallthru
    _

// kernel: object_encoder_v4_forward.16
$region0: #{object_encoder_v4_forward.16}
  #allocation0 [shape = 'u32[]', space=smem, size = 0x4, offset = 0x4, fixed_abs, tag = 'smem constant byte address 0x4 - core index']
  #allocation1 [shape = 'u32[144,128]{1,0:T(1,128)}', space=vmem, size = 0x12000, scoped, tag = 'internal scratch']
  %s0 = inlined_call_operand.vmem [shape: bf16[32,304], index: 0, kind: input, shape index: {}]
  %s1 = inlined_call_operand.vmem [shape: bf16[304,32], index: 1, kind: input, shape index: {}]
  %s2 = inlined_call_operand.vmem [shape: f32[1,32], index: 2, kind: input, shape index: {}]
  %s3 = inlined_call_operand.vmem [shape: bf16[32,32], index: 3, kind: output, shape index: {}]
  %s4 = sld [smem:[#allocation0]]
  $region22: #{object_encoder_v4_forward.16} parent=0
    _
  %s6 = ssub.s32 1, %s4
  %s7 = scalar_select 0, %s6, %s4
  // Predicated region
  $region2: #{object_encoder_v4_forward.16} parent=0 // pred_check
    _
  $region3: #{object_encoder_v4_forward.16} parent=0 // pred_check_branch
    %9 = sbr.rel (0) target = $region5
  $region4: #{object_encoder_v4_forward.16} parent=0 // pred_region
    _
  $region5: #{object_encoder_v4_forward.16} parent=0 // pred_fallthru
    _
  // Predicated region
  $region6: #{object_encoder_v4_forward.16} parent=0 // pred_check
    _
  $region7: #{object_encoder_v4_forward.16} parent=0 // pred_check_branch
    %11 = sbr.rel (0) target = $region9
  $region8: #{object_encoder_v4_forward.16} parent=0 // pred_region
    _
  $region9: #{object_encoder_v4_forward.16} parent=0 // pred_fallthru
    _
  // Predicated region
  $region10: #{object_encoder_v4_forward.16} parent=0 // pred_check
    _
  $region11: #{object_encoder_v4_forward.16} parent=0 // pred_check_branch
    %13 = sbr.rel (0) target = $region13
  $region12: #{object_encoder_v4_forward.16} parent=0 // pred_region
    _
  $region13: #{object_encoder_v4_forward.16} parent=0 // pred_fallthru
    _
  %v15 = vld [vmem:[%s0] sm:$0xff]
  %v16 = vld [vmem:[%s0 + $0x8] sm:$0xf]
  %v17 = vld [vmem:[%s0 + $0xc] sm:$0xff]
  %v18 = vld [vmem:[%s0 + $0x14] sm:$0xf]
  %v19 = vld [vmem:[%s0 + $0x18] sm:$0xff]
  %v20 = vld [vmem:[%s0 + $0x20] sm:$0xf]
  %v21 = vld [vmem:[%s0 + $0x24] sm:$0xff]
  %v22 = vld [vmem:[%s0 + $0x2c] sm:$0xf]
  %v23 = vld [vmem:[%s1] sm:$0xf]
  %v24 = vld [vmem:[%s1 + $0x4] sm:$0xf]
  %v25 = vld [vmem:[%s1 + $0x8] sm:$0xf]
  %v26 = vld [vmem:[%s1 + $0xc] sm:$0xf]
  %v27 = vld [vmem:[%s1 + $0x10] sm:$0xf]
  %v28 = vld [vmem:[%s1 + $0x14] sm:$0xf]
  %v29 = vld [vmem:[%s1 + $0x18] sm:$0xf]
  %v30 = vld [vmem:[%s1 + $0x1c] sm:$0xf]
  %v31 = vld [vmem:[%s1 + $0x20] sm:$0xf]
  %v32 = vld [vmem:[%s1 + $0x24] sm:$0xf]
  %v33 = vld [vmem:[%s1 + $0x28] sm:$0xf]
  %v34 = vld [vmem:[%s1 + $0x2c] sm:$0xf]
  %v35 = vld [vmem:[%s1 + $0x30] sm:$0xf]
  %v36 = vld [vmem:[%s1 + $0x34] sm:$0xf]
  %v37 = vld [vmem:[%s1 + $0x38] sm:$0xf]
  %v38 = vld [vmem:[%s1 + $0x3c] sm:$0xf]
  %v39 = vld [vmem:[%s1 + $0x40] sm:$0xf]
  %v40 = vld [vmem:[%s1 + $0x44] sm:$0xf]
  %v41 = vld [vmem:[%s1 + $0x48] sm:$0xf]
  %v42 = vld [vmem:[%s1 + $0x4c] sm:$0xf]
  %v43 = vld [vmem:[%s1 + $0x50] sm:$0xf]
  %v44 = vld [vmem:[%s1 + $0x54] sm:$0xf]
  %v45 = vld [vmem:[%s1 + $0x58] sm:$0xf]
  %v46 = vld [vmem:[%s1 + $0x5c] sm:$0xf]
  %v47 = vld [vmem:[%s1 + $0x60] sm:$0xf]
  %v48 = vld [vmem:[%s1 + $0x64] sm:$0xf]
  %v49 = vld [vmem:[%s1 + $0x68] sm:$0xf]
  %v50 = vld [vmem:[%s1 + $0x6c] sm:$0xf]
  %v51 = vld [vmem:[%s1 + $0x70] sm:$0xf]
  %v52 = vld [vmem:[%s1 + $0x74] sm:$0xf]
  %v53 = vld [vmem:[%s1 + $0x78] sm:$0xf]
  %v54 = vld [vmem:[%s1 + $0x7c] sm:$0xf]
  %v55 = vld [vmem:[%s1 + $0x80] sm:$0xf]
  %v56 = vld [vmem:[%s1 + $0x84] sm:$0xf]
  %v57 = vld [vmem:[%s1 + $0x88] sm:$0xf]
  %v58 = vld [vmem:[%s1 + $0x8c] sm:$0xf]
  %v59 = vld [vmem:[%s1 + $0x90] sm:$0xf]
  %v60 = vld [vmem:[%s1 + $0x94] sm:$0xf]
  %v61 = vld [vmem:[%s2] sm:$0x1]
  %v63 = vlaneseq
  %v64 = vshrl.u32 %v63, 7
  %v65 = vsub.s32 0, %v64
  %v66 = vrot.slane %v61, %v65
  %v76 = vunpack.c.l.b16 %v15
  %v77 = vunpack.c.h.b16 %v15
  %v78 = vunpack.c.l.b16 %v16
  %v79 = vunpack.c.l.b16 %v17
  %v80 = vunpack.c.h.b16 %v17
  %v81 = vunpack.c.l.b16 %v18
  %v82 = vunpack.c.l.b16 %v19
  %v83 = vunpack.c.h.b16 %v19
  %v84 = vunpack.c.l.b16 %v20
  %v85 = vunpack.c.l.b16 %v21
  %v86 = vunpack.c.h.b16 %v21
  %v87 = vunpack.c.l.b16 %v22
  %v88 = vpack.c.b16 %v79, %v76
  %v89 = vpack.c.b16 %v80, %v77
  %v90 = vpack.c.b16 %v81, %v78
  %v91 = vpack.c.b16 %v85, %v82
  %v92 = vpack.c.b16 %v86, %v83
  %v93 = vpack.c.b16 %v87, %v84
  %v136 = vunpack.c.l.b16 %v23
  %v137 = vunpack.c.l.b16 %v24
  %v138 = vunpack.c.l.b16 %v25
  %v139 = vunpack.c.l.b16 %v26
  %v140 = vunpack.c.l.b16 %v27
  %v141 = vunpack.c.l.b16 %v28
  %v142 = vunpack.c.l.b16 %v29
  %v143 = vunpack.c.l.b16 %v30
  %v144 = vunpack.c.l.b16 %v31
  %v145 = vunpack.c.l.b16 %v32
  %v146 = vunpack.c.l.b16 %v33
  %v147 = vunpack.c.l.b16 %v34
  %v148 = vunpack.c.l.b16 %v35
  %v149 = vunpack.c.l.b16 %v36
  %v150 = vunpack.c.l.b16 %v37
  %v151 = vunpack.c.l.b16 %v38
  %v152 = vunpack.c.l.b16 %v39
  %v153 = vunpack.c.l.b16 %v40
  %v154 = vunpack.c.l.b16 %v41
  %v155 = vunpack.c.l.b16 %v42
  %v156 = vunpack.c.l.b16 %v43
  %v157 = vunpack.c.l.b16 %v44
  %v158 = vunpack.c.l.b16 %v45
  %v159 = vunpack.c.l.b16 %v46
  %v160 = vunpack.c.l.b16 %v47
  %v161 = vunpack.c.l.b16 %v48
  %v162 = vunpack.c.l.b16 %v49
  %v163 = vunpack.c.l.b16 %v50
  %v164 = vunpack.c.l.b16 %v51
  %v165 = vunpack.c.l.b16 %v52
  %v166 = vunpack.c.l.b16 %v53
  %v167 = vunpack.c.l.b16 %v54
  %v168 = vunpack.c.l.b16 %v55
  %v169 = vunpack.c.l.b16 %v56
  %v170 = vunpack.c.l.b16 %v57
  %v171 = vunpack.c.l.b16 %v58
  %v172 = vunpack.c.l.b16 %v59
  %v173 = vunpack.c.l.b16 %v60
  %v174 = vpack.c.b16 %v137, %v136
  %v175 = vpack.c.b16 %v139, %v138
  %v176 = vpack.c.b16 %v141, %v140
  %v177 = vpack.c.b16 %v143, %v142
  %v178 = vpack.c.b16 %v145, %v144
  %v179 = vpack.c.b16 %v147, %v146
  %v180 = vpack.c.b16 %v149, %v148
  %v181 = vpack.c.b16 %v151, %v150
  %v182 = vpack.c.b16 %v153, %v152
  %v183 = vpack.c.b16 %v155, %v154
  %v184 = vpack.c.b16 %v157, %v156
  %v185 = vpack.c.b16 %v159, %v158
  %v186 = vpack.c.b16 %v161, %v160
  %v187 = vpack.c.b16 %v163, %v162
  %v188 = vpack.c.b16 %v165, %v164
  %v189 = vpack.c.b16 %v167, %v166
  %v190 = vpack.c.b16 %v169, %v168
  %v191 = vpack.c.b16 %v171, %v170
  %v192 = vpack.c.b16 %v173, %v172
  %vm212 = vcmask 392192
  %v214 = vsel %vm212, %v90, 0
  %v217 = vsel %vm212, %v93, 0
  %219 = vmatprep.subr.bf16.mxu0 0
  %220 = vmatpush1.bf16.msra.mxu0 %v174
  %221 = vmatprep.subr.bf16.mxu0 0
  %222 = vmatpush1.bf16.msra.mxu0 %v175
  %223 = vmatprep.subr.bf16.mxu0 0
  %224 = vmatpush1.bf16.msra.mxu0 %v176
  %225 = vmatprep.subr.bf16.mxu0 0
  %226 = vmatpush1.bf16.msra.mxu0 %v177
  %227 = vmatprep.subr.bf16.mxu0 0
  %228 = vmatpush1.bf16.msra.mxu0 %v178
  %229 = vmatprep.subr.bf16.mxu0 0
  %230 = vmatpush1.bf16.msra.mxu0 %v179
  %231 = vmatprep.subr.bf16.mxu0 0
  %232 = vmatpush1.bf16.msra.mxu0 %v180
  %233 = vmatprep.subr.bf16.mxu0 0
  %234 = vmatpush1.bf16.msra.mxu0 %v181
  %235 = vmatprep.subr.bf16.mxu0 0
  %236 = vmatpush1.bf16.msra.mxu0 %v182
  %237 = vmatprep.subr.bf16.mxu0 0
  %238 = vmatpush1.bf16.msra.mxu0 %v183
  %239 = vmatprep.subr.bf16.mxu0 0
  %240 = vmatpush1.bf16.msra.mxu0 %v184
  %241 = vmatprep.subr.bf16.mxu0 0
  %242 = vmatpush1.bf16.msra.mxu0 %v185
  %243 = vmatprep.subr.bf16.mxu0 0
  %244 = vmatpush1.bf16.msra.mxu0 %v186
  %245 = vmatprep.subr.bf16.mxu0 0
  %246 = vmatpush1.bf16.msra.mxu0 %v187
  %247 = vmatprep.subr.bf16.mxu0 0
  %248 = vmatpush1.bf16.msra.mxu0 %v188
  %249 = vmatprep.subr.bf16.mxu0 0
  %250 = vmatpush1.bf16.msra.mxu0 %v189
  %251 = vmatprep.mubr.bf16.mxu0 %v89
  %252 = vmatmul.mubr.bf16.gmra.mrb[0].mxu0 %v88
  %v253 = vpop.f32.mrb[0].mxu0
  %v254 = vadd.f32 %v66, %v253
  %v255 = vpop.f32.mrb[0].mxu0
  %v256 = vpop.f32.mrb[0].mxu0
  %v257 = vadd.f32 %v66, %v256
  %v258 = vpop.f32.mrb[0].mxu0
  %259 = vmatprep.mubr.bf16.mxu0 %v92
  %260 = vmatmul.mubr.bf16.gmra.mrb[0].mxu0 %v91
  %v261 = vpop.f32.mrb[0].mxu0
  %v262 = vadd.f32 %v66, %v261
  %v263 = vpop.f32.mrb[0].mxu0
  %v264 = vpop.f32.mrb[0].mxu0
  %v265 = vadd.f32 %v66, %v264
  %v266 = vpop.f32.mrb[0].mxu0
  %267 = vdwg.mxu0
  %268 = vmatprep.subr.bf16.mxu0 0
  %269 = vmatpush1.bf16.msra.mxu0 %v190
  %270 = vmatprep.subr.bf16.mxu0 0
  %271 = vmatpush1.bf16.msra.mxu0 %v191
  %272 = vmatprep.subr.bf16.mxu0 0
  %273 = vmatpush1.bf16.msra.mxu0 %v192
  %274 = vmatprep.subr.bf16.mxu0 0
  %275 = vmatpush1.bf16.msra.mxu0 0
  %276 = vmatprep.subr.bf16.mxu0 0
  %277 = vmatpush1.bf16.msra.mxu0 0
  %278 = vmatprep.subr.bf16.mxu0 0
  %279 = vmatpush1.bf16.msra.mxu0 0
  %280 = vmatprep.subr.bf16.mxu0 0
  %281 = vmatpush1.bf16.msra.mxu0 0
  %282 = vmatprep.subr.bf16.mxu0 0
  %283 = vmatpush1.bf16.msra.mxu0 0
  %284 = vmatprep.subr.bf16.mxu0 0
  %285 = vmatpush1.bf16.msra.mxu0 0
  %286 = vmatprep.subr.bf16.mxu0 0
  %287 = vmatpush1.bf16.msra.mxu0 0
  %288 = vmatprep.subr.bf16.mxu0 0
  %289 = vmatpush1.bf16.msra.mxu0 0
  %290 = vmatprep.subr.bf16.mxu0 0
  %291 = vmatpush1.bf16.msra.mxu0 0
  %292 = vmatprep.subr.bf16.mxu0 0
  %293 = vmatpush1.bf16.msra.mxu0 0
  %294 = vmatprep.subr.bf16.mxu0 0
  %295 = vmatpush1.bf16.msra.mxu0 0
  %296 = vmatprep.subr.bf16.mxu0 0
  %297 = vmatpush1.bf16.msra.mxu0 0
  %298 = vmatprep.subr.bf16.mxu0 0
  %299 = vmatpush1.bf16.msra.mxu0 0
  %300 = vmatprep.mubr.bf16.mxu0 0
  %301 = vmatmul.mubr.bf16.gmra.mrb[0].mxu0 %v214
  %v302 = vpop.f32.mrb[0].mxu0
  %v303 = vadd.f32 %v254, %v302
  %v304 = vpop.f32.mrb[0].mxu0
  %v305 = vpop.f32.mrb[0].mxu0
  %v306 = vadd.f32 %v257, %v305
  %v307 = vpop.f32.mrb[0].mxu0
  %308 = vmatprep.mubr.bf16.mxu0 0
  %309 = vmatmul.mubr.bf16.gmra.mrb[0].mxu0 %v217
  %v310 = vpop.f32.mrb[0].mxu0
  %v311 = vadd.f32 %v262, %v310
  %v312 = vpop.f32.mrb[0].mxu0
  %v313 = vpop.f32.mrb[0].mxu0
  %v314 = vadd.f32 %v265, %v313
  %v315 = vpop.f32.mrb[0].mxu0
  %316 = vdwg.mxu0
  %vm317 = vcmp.gt.f32.partialorder %v303, 0.0
  %vm318 = vcmp.gt.f32.partialorder %v306, 0.0
  %vm319 = vcmp.gt.f32.partialorder %v311, 0.0
  %vm320 = vcmp.gt.f32.partialorder %v314, 0.0
  %v321 = vmul.f32 %v303, 0.2
  %v322 = vmul.f32 %v306, 0.2
  %v323 = vmul.f32 %v311, 0.2
  %v324 = vmul.f32 %v314, 0.2
  %v325 = vsel %vm317, %v303, %v321
  %v326 = vsel %vm318, %v306, %v322
  %v327 = vsel %vm319, %v311, %v323
  %v328 = vsel %vm320, %v314, %v324
  %v329 = vpack.c.bf16 %v326, %v325
  %v330 = vpack.c.bf16 %v328, %v327
  %v333 = vunpack.c.l.b16 %v329
  %v334 = vunpack.c.h.b16 %v329
  %v335 = vunpack.c.l.b16 %v330
  %v336 = vunpack.c.h.b16 %v330
  %v337 = vpack.c.b16 %v333, %v333
  %v338 = vpack.c.b16 %v334, %v334
  %v339 = vpack.c.b16 %v335, %v335
  %v340 = vpack.c.b16 %v336, %v336
  %vm345 = vcmask 257024
  %346 = vst.msk [vmem:[%s3] sm:$0xf] %vm345, %v337
  %347 = vst.msk [vmem:[%s3 + $0x4] sm:$0xf] %vm345, %v338
  %348 = vst.msk [vmem:[%s3 + $0x8] sm:$0xf] %vm345, %v339
  %349 = vst.msk [vmem:[%s3 + $0xc] sm:$0xf] %vm345, %v340
  // Predicated region
  $region14: #{object_encoder_v4_forward.16} parent=0 // pred_check
    _
  $region15: #{object_encoder_v4_forward.16} parent=0 // pred_check_branch
    %351 = sbr.rel (0) target = $region17
  $region16: #{object_encoder_v4_forward.16} parent=0 // pred_region
    _
  $region17: #{object_encoder_v4_forward.16} parent=0 // pred_fallthru
    _
  // Predicated region
  $region18: #{object_encoder_v4_forward.16} parent=0 // pred_check
    _
  $region19: #{object_encoder_v4_forward.16} parent=0 // pred_check_branch
    %353 = sbr.rel (0) target = $region21
  $region20: #{object_encoder_v4_forward.16} parent=0 // pred_region
    _
  $region21: #{object_encoder_v4_forward.16} parent=0 // pred_fallthru
    _

// kernel: object_encoder_v4_forward.17
$region0: #{object_encoder_v4_forward.17}
  #allocation0 [shape = 'u32[]', space=smem, size = 0x4, offset = 0x4, fixed_abs, tag = 'smem constant byte address 0x4 - core index']
  #allocation1 [shape = 'u32[144,128]{1,0:T(1,128)}', space=vmem, size = 0x12000, scoped, tag = 'internal scratch']
  %s0 = inlined_call_operand.vmem [shape: bf16[32,288], index: 0, kind: input, shape index: {}]
  %s1 = inlined_call_operand.vmem [shape: bf16[288,32], index: 1, kind: input, shape index: {}]
  %s2 = inlined_call_operand.vmem [shape: f32[1,32], index: 2, kind: input, shape index: {}]
  %s3 = inlined_call_operand.vmem [shape: bf16[32,32], index: 3, kind: output, shape index: {}]
  %s4 = sld [smem:[#allocation0]]
  $region22: #{object_encoder_v4_forward.17} parent=0
    _
  %s6 = ssub.s32 1, %s4
  %s7 = scalar_select 0, %s6, %s4
  // Predicated region
  $region2: #{object_encoder_v4_forward.17} parent=0 // pred_check
    _
  $region3: #{object_encoder_v4_forward.17} parent=0 // pred_check_branch
    %9 = sbr.rel (0) target = $region5
  $region4: #{object_encoder_v4_forward.17} parent=0 // pred_region
    _
  $region5: #{object_encoder_v4_forward.17} parent=0 // pred_fallthru
    _
  // Predicated region
  $region6: #{object_encoder_v4_forward.17} parent=0 // pred_check
    _
  $region7: #{object_encoder_v4_forward.17} parent=0 // pred_check_branch
    %11 = sbr.rel (0) target = $region9
  $region8: #{object_encoder_v4_forward.17} parent=0 // pred_region
    _
  $region9: #{object_encoder_v4_forward.17} parent=0 // pred_fallthru
    _
  // Predicated region
  $region10: #{object_encoder_v4_forward.17} parent=0 // pred_check
    _
  $region11: #{object_encoder_v4_forward.17} parent=0 // pred_check_branch
    %13 = sbr.rel (0) target = $region13
  $region12: #{object_encoder_v4_forward.17} parent=0 // pred_region
    _
  $region13: #{object_encoder_v4_forward.17} parent=0 // pred_fallthru
    _
  %v15 = vld [vmem:[%s0] sm:$0xff]
  %v16 = vld [vmem:[%s0 + $0x8] sm:$0xf]
  %v17 = vld [vmem:[%s0 + $0xc] sm:$0xff]
  %v18 = vld [vmem:[%s0 + $0x14] sm:$0xf]
  %v19 = vld [vmem:[%s0 + $0x18] sm:$0xff]
  %v20 = vld [vmem:[%s0 + $0x20] sm:$0xf]
  %v21 = vld [vmem:[%s0 + $0x24] sm:$0xff]
  %v22 = vld [vmem:[%s0 + $0x2c] sm:$0xf]
  %v23 = vld [vmem:[%s1] sm:$0xf]
  %v24 = vld [vmem:[%s1 + $0x4] sm:$0xf]
  %v25 = vld [vmem:[%s1 + $0x8] sm:$0xf]
  %v26 = vld [vmem:[%s1 + $0xc] sm:$0xf]
  %v27 = vld [vmem:[%s1 + $0x10] sm:$0xf]
  %v28 = vld [vmem:[%s1 + $0x14] sm:$0xf]
  %v29 = vld [vmem:[%s1 + $0x18] sm:$0xf]
  %v30 = vld [vmem:[%s1 + $0x1c] sm:$0xf]
  %v31 = vld [vmem:[%s1 + $0x20] sm:$0xf]
  %v32 = vld [vmem:[%s1 + $0x24] sm:$0xf]
  %v33 = vld [vmem:[%s1 + $0x28] sm:$0xf]
  %v34 = vld [vmem:[%s1 + $0x2c] sm:$0xf]
  %v35 = vld [vmem:[%s1 + $0x30] sm:$0xf]
  %v36 = vld [vmem:[%s1 + $0x34] sm:$0xf]
  %v37 = vld [vmem:[%s1 + $0x38] sm:$0xf]
  %v38 = vld [vmem:[%s1 + $0x3c] sm:$0xf]
  %v39 = vld [vmem:[%s1 + $0x40] sm:$0xf]
  %v40 = vld [vmem:[%s1 + $0x44] sm:$0xf]
  %v41 = vld [vmem:[%s1 + $0x48] sm:$0xf]
  %v42 = vld [vmem:[%s1 + $0x4c] sm:$0xf]
  %v43 = vld [vmem:[%s1 + $0x50] sm:$0xf]
  %v44 = vld [vmem:[%s1 + $0x54] sm:$0xf]
  %v45 = vld [vmem:[%s1 + $0x58] sm:$0xf]
  %v46 = vld [vmem:[%s1 + $0x5c] sm:$0xf]
  %v47 = vld [vmem:[%s1 + $0x60] sm:$0xf]
  %v48 = vld [vmem:[%s1 + $0x64] sm:$0xf]
  %v49 = vld [vmem:[%s1 + $0x68] sm:$0xf]
  %v50 = vld [vmem:[%s1 + $0x6c] sm:$0xf]
  %v51 = vld [vmem:[%s1 + $0x70] sm:$0xf]
  %v52 = vld [vmem:[%s1 + $0x74] sm:$0xf]
  %v53 = vld [vmem:[%s1 + $0x78] sm:$0xf]
  %v54 = vld [vmem:[%s1 + $0x7c] sm:$0xf]
  %v55 = vld [vmem:[%s1 + $0x80] sm:$0xf]
  %v56 = vld [vmem:[%s1 + $0x84] sm:$0xf]
  %v57 = vld [vmem:[%s1 + $0x88] sm:$0xf]
  %v58 = vld [vmem:[%s1 + $0x8c] sm:$0xf]
  %v59 = vld [vmem:[%s2] sm:$0x1]
  %v61 = vlaneseq
  %v62 = vshrl.u32 %v61, 7
  %v63 = vsub.s32 0, %v62
  %v64 = vrot.slane %v59, %v63
  %v74 = vunpack.c.l.b16 %v15
  %v75 = vunpack.c.h.b16 %v15
  %v76 = vunpack.c.l.b16 %v16
  %v77 = vunpack.c.l.b16 %v17
  %v78 = vunpack.c.h.b16 %v17
  %v79 = vunpack.c.l.b16 %v18
  %v80 = vunpack.c.l.b16 %v19
  %v81 = vunpack.c.h.b16 %v19
  %v82 = vunpack.c.l.b16 %v20
  %v83 = vunpack.c.l.b16 %v21
  %v84 = vunpack.c.h.b16 %v21
  %v85 = vunpack.c.l.b16 %v22
  %v86 = vpack.c.b16 %v77, %v74
  %v87 = vpack.c.b16 %v78, %v75
  %v88 = vpack.c.b16 %v79, %v76
  %v89 = vpack.c.b16 %v83, %v80
  %v90 = vpack.c.b16 %v84, %v81
  %v91 = vpack.c.b16 %v85, %v82
  %v132 = vunpack.c.l.b16 %v23
  %v133 = vunpack.c.l.b16 %v24
  %v134 = vunpack.c.l.b16 %v25
  %v135 = vunpack.c.l.b16 %v26
  %v136 = vunpack.c.l.b16 %v27
  %v137 = vunpack.c.l.b16 %v28
  %v138 = vunpack.c.l.b16 %v29
  %v139 = vunpack.c.l.b16 %v30
  %v140 = vunpack.c.l.b16 %v31
  %v141 = vunpack.c.l.b16 %v32
  %v142 = vunpack.c.l.b16 %v33
  %v143 = vunpack.c.l.b16 %v34
  %v144 = vunpack.c.l.b16 %v35
  %v145 = vunpack.c.l.b16 %v36
  %v146 = vunpack.c.l.b16 %v37
  %v147 = vunpack.c.l.b16 %v38
  %v148 = vunpack.c.l.b16 %v39
  %v149 = vunpack.c.l.b16 %v40
  %v150 = vunpack.c.l.b16 %v41
  %v151 = vunpack.c.l.b16 %v42
  %v152 = vunpack.c.l.b16 %v43
  %v153 = vunpack.c.l.b16 %v44
  %v154 = vunpack.c.l.b16 %v45
  %v155 = vunpack.c.l.b16 %v46
  %v156 = vunpack.c.l.b16 %v47
  %v157 = vunpack.c.l.b16 %v48
  %v158 = vunpack.c.l.b16 %v49
  %v159 = vunpack.c.l.b16 %v50
  %v160 = vunpack.c.l.b16 %v51
  %v161 = vunpack.c.l.b16 %v52
  %v162 = vunpack.c.l.b16 %v53
  %v163 = vunpack.c.l.b16 %v54
  %v164 = vunpack.c.l.b16 %v55
  %v165 = vunpack.c.l.b16 %v56
  %v166 = vunpack.c.l.b16 %v57
  %v167 = vunpack.c.l.b16 %v58
  %v168 = vpack.c.b16 %v133, %v132
  %v169 = vpack.c.b16 %v135, %v134
  %v170 = vpack.c.b16 %v137, %v136
  %v171 = vpack.c.b16 %v139, %v138
  %v172 = vpack.c.b16 %v141, %v140
  %v173 = vpack.c.b16 %v143, %v142
  %v174 = vpack.c.b16 %v145, %v144
  %v175 = vpack.c.b16 %v147, %v146
  %v176 = vpack.c.b16 %v149, %v148
  %v177 = vpack.c.b16 %v151, %v150
  %v178 = vpack.c.b16 %v153, %v152
  %v179 = vpack.c.b16 %v155, %v154
  %v180 = vpack.c.b16 %v157, %v156
  %v181 = vpack.c.b16 %v159, %v158
  %v182 = vpack.c.b16 %v161, %v160
  %v183 = vpack.c.b16 %v163, %v162
  %v184 = vpack.c.b16 %v165, %v164
  %v185 = vpack.c.b16 %v167, %v166
  %vm204 = vcmask 261120
  %v206 = vsel %vm204, %v88, 0
  %v209 = vsel %vm204, %v91, 0
  %211 = vmatprep.subr.bf16.mxu0 0
  %212 = vmatpush1.bf16.msra.mxu0 %v168
  %213 = vmatprep.subr.bf16.mxu0 0
  %214 = vmatpush1.bf16.msra.mxu0 %v169
  %215 = vmatprep.subr.bf16.mxu0 0
  %216 = vmatpush1.bf16.msra.mxu0 %v170
  %217 = vmatprep.subr.bf16.mxu0 0
  %218 = vmatpush1.bf16.msra.mxu0 %v171
  %219 = vmatprep.subr.bf16.mxu0 0
  %220 = vmatpush1.bf16.msra.mxu0 %v172
  %221 = vmatprep.subr.bf16.mxu0 0
  %222 = vmatpush1.bf16.msra.mxu0 %v173
  %223 = vmatprep.subr.bf16.mxu0 0
  %224 = vmatpush1.bf16.msra.mxu0 %v174
  %225 = vmatprep.subr.bf16.mxu0 0
  %226 = vmatpush1.bf16.msra.mxu0 %v175
  %227 = vmatprep.subr.bf16.mxu0 0
  %228 = vmatpush1.bf16.msra.mxu0 %v176
  %229 = vmatprep.subr.bf16.mxu0 0
  %230 = vmatpush1.bf16.msra.mxu0 %v177
  %231 = vmatprep.subr.bf16.mxu0 0
  %232 = vmatpush1.bf16.msra.mxu0 %v178
  %233 = vmatprep.subr.bf16.mxu0 0
  %234 = vmatpush1.bf16.msra.mxu0 %v179
  %235 = vmatprep.subr.bf16.mxu0 0
  %236 = vmatpush1.bf16.msra.mxu0 %v180
  %237 = vmatprep.subr.bf16.mxu0 0
  %238 = vmatpush1.bf16.msra.mxu0 %v181
  %239 = vmatprep.subr.bf16.mxu0 0
  %240 = vmatpush1.bf16.msra.mxu0 %v182
  %241 = vmatprep.subr.bf16.mxu0 0
  %242 = vmatpush1.bf16.msra.mxu0 %v183
  %243 = vmatprep.mubr.bf16.mxu0 %v87
  %244 = vmatmul.mubr.bf16.gmra.mrb[0].mxu0 %v86
  %v245 = vpop.f32.mrb[0].mxu0
  %v246 = vadd.f32 %v64, %v245
  %v247 = vpop.f32.mrb[0].mxu0
  %v248 = vpop.f32.mrb[0].mxu0
  %v249 = vadd.f32 %v64, %v248
  %v250 = vpop.f32.mrb[0].mxu0
  %251 = vmatprep.mubr.bf16.mxu0 %v90
  %252 = vmatmul.mubr.bf16.gmra.mrb[0].mxu0 %v89
  %v253 = vpop.f32.mrb[0].mxu0
  %v254 = vadd.f32 %v64, %v253
  %v255 = vpop.f32.mrb[0].mxu0
  %v256 = vpop.f32.mrb[0].mxu0
  %v257 = vadd.f32 %v64, %v256
  %v258 = vpop.f32.mrb[0].mxu0
  %259 = vdwg.mxu0
  %260 = vmatprep.subr.bf16.mxu0 0
  %261 = vmatpush1.bf16.msra.mxu0 %v184
  %262 = vmatprep.subr.bf16.mxu0 0
  %263 = vmatpush1.bf16.msra.mxu0 %v185
  %264 = vmatprep.subr.bf16.mxu0 0
  %265 = vmatpush1.bf16.msra.mxu0 0
  %266 = vmatprep.subr.bf16.mxu0 0
  %267 = vmatpush1.bf16.msra.mxu0 0
  %268 = vmatprep.subr.bf16.mxu0 0
  %269 = vmatpush1.bf16.msra.mxu0 0
  %270 = vmatprep.subr.bf16.mxu0 0
  %271 = vmatpush1.bf16.msra.mxu0 0
  %272 = vmatprep.subr.bf16.mxu0 0
  %273 = vmatpush1.bf16.msra.mxu0 0
  %274 = vmatprep.subr.bf16.mxu0 0
  %275 = vmatpush1.bf16.msra.mxu0 0
  %276 = vmatprep.subr.bf16.mxu0 0
  %277 = vmatpush1.bf16.msra.mxu0 0
  %278 = vmatprep.subr.bf16.mxu0 0
  %279 = vmatpush1.bf16.msra.mxu0 0
  %280 = vmatprep.subr.bf16.mxu0 0
  %281 = vmatpush1.bf16.msra.mxu0 0
  %282 = vmatprep.subr.bf16.mxu0 0
  %283 = vmatpush1.bf16.msra.mxu0 0
  %284 = vmatprep.subr.bf16.mxu0 0
  %285 = vmatpush1.bf16.msra.mxu0 0
  %286 = vmatprep.subr.bf16.mxu0 0
  %287 = vmatpush1.bf16.msra.mxu0 0
  %288 = vmatprep.subr.bf16.mxu0 0
  %289 = vmatpush1.bf16.msra.mxu0 0
  %290 = vmatprep.subr.bf16.mxu0 0
  %291 = vmatpush1.bf16.msra.mxu0 0
  %292 = vmatprep.mubr.bf16.mxu0 0
  %293 = vmatmul.mubr.bf16.gmra.mrb[0].mxu0 %v206
  %v294 = vpop.f32.mrb[0].mxu0
  %v295 = vadd.f32 %v246, %v294
  %v296 = vpop.f32.mrb[0].mxu0
  %v297 = vpop.f32.mrb[0].mxu0
  %v298 = vadd.f32 %v249, %v297
  %v299 = vpop.f32.mrb[0].mxu0
  %300 = vmatprep.mubr.bf16.mxu0 0
  %301 = vmatmul.mubr.bf16.gmra.mrb[0].mxu0 %v209
  %v302 = vpop.f32.mrb[0].mxu0
  %v303 = vadd.f32 %v254, %v302
  %v304 = vpop.f32.mrb[0].mxu0
  %v305 = vpop.f32.mrb[0].mxu0
  %v306 = vadd.f32 %v257, %v305
  %v307 = vpop.f32.mrb[0].mxu0
  %308 = vdwg.mxu0
  %vm309 = vcmp.gt.f32.partialorder %v295, 0.0
  %vm310 = vcmp.gt.f32.partialorder %v298, 0.0
  %vm311 = vcmp.gt.f32.partialorder %v303, 0.0
  %vm312 = vcmp.gt.f32.partialorder %v306, 0.0
  %v313 = vmul.f32 %v295, 0.2
  %v314 = vmul.f32 %v298, 0.2
  %v315 = vmul.f32 %v303, 0.2
  %v316 = vmul.f32 %v306, 0.2
  %v317 = vsel %vm309, %v295, %v313
  %v318 = vsel %vm310, %v298, %v314
  %v319 = vsel %vm311, %v303, %v315
  %v320 = vsel %vm312, %v306, %v316
  %v321 = vpack.c.bf16 %v318, %v317
  %v322 = vpack.c.bf16 %v320, %v319
  %v325 = vunpack.c.l.b16 %v321
  %v326 = vunpack.c.h.b16 %v321
  %v327 = vunpack.c.l.b16 %v322
  %v328 = vunpack.c.h.b16 %v322
  %v329 = vpack.c.b16 %v325, %v325
  %v330 = vpack.c.b16 %v326, %v326
  %v331 = vpack.c.b16 %v327, %v327
  %v332 = vpack.c.b16 %v328, %v328
  %vm337 = vcmask 257024
  %338 = vst.msk [vmem:[%s3] sm:$0xf] %vm337, %v329
  %339 = vst.msk [vmem:[%s3 + $0x4] sm:$0xf] %vm337, %v330
  %340 = vst.msk [vmem:[%s3 + $0x8] sm:$0xf] %vm337, %v331
  %341 = vst.msk [vmem:[%s3 + $0xc] sm:$0xf] %vm337, %v332
  // Predicated region
  $region14: #{object_encoder_v4_forward.17} parent=0 // pred_check
    _
  $region15: #{object_encoder_v4_forward.17} parent=0 // pred_check_branch
    %343 = sbr.rel (0) target = $region17
  $region16: #{object_encoder_v4_forward.17} parent=0 // pred_region
    _
  $region17: #{object_encoder_v4_forward.17} parent=0 // pred_fallthru
    _
  // Predicated region
  $region18: #{object_encoder_v4_forward.17} parent=0 // pred_check
    _
  $region19: #{object_encoder_v4_forward.17} parent=0 // pred_check_branch
    %345 = sbr.rel (0) target = $region21
  $region20: #{object_encoder_v4_forward.17} parent=0 // pred_region
    _
  $region21: #{object_encoder_v4_forward.17} parent=0 // pred_fallthru
    _

// kernel: object_encoder_v4_forward.19
$region0: #{object_encoder_v4_forward.19}
  #allocation0 [shape = 'u32[]', space=smem, size = 0x4, offset = 0x4, fixed_abs, tag = 'smem constant byte address 0x4 - core index']
  #allocation1 [shape = 'u32[144,128]{1,0:T(1,128)}', space=vmem, size = 0x12000, scoped, tag = 'internal scratch']
  %s0 = inlined_call_operand.vmem [shape: bf16[8,288], index: 0, kind: input, shape index: {}]
  %s1 = inlined_call_operand.vmem [shape: bf16[288,64], index: 1, kind: input, shape index: {}]
  %s2 = inlined_call_operand.vmem [shape: f32[1,64], index: 2, kind: input, shape index: {}]
  %s3 = inlined_call_operand.vmem [shape: bf16[8,64], index: 3, kind: output, shape index: {}]
  %s4 = sld [smem:[#allocation0]]
  $region22: #{object_encoder_v4_forward.19} parent=0
    _
  %s6 = ssub.s32 1, %s4
  %s7 = scalar_select 0, %s6, %s4
  // Predicated region
  $region2: #{object_encoder_v4_forward.19} parent=0 // pred_check
    _
  $region3: #{object_encoder_v4_forward.19} parent=0 // pred_check_branch
    %9 = sbr.rel (0) target = $region5
  $region4: #{object_encoder_v4_forward.19} parent=0 // pred_region
    _
  $region5: #{object_encoder_v4_forward.19} parent=0 // pred_fallthru
    _
  // Predicated region
  $region6: #{object_encoder_v4_forward.19} parent=0 // pred_check
    _
  $region7: #{object_encoder_v4_forward.19} parent=0 // pred_check_branch
    %11 = sbr.rel (0) target = $region9
  $region8: #{object_encoder_v4_forward.19} parent=0 // pred_region
    _
  $region9: #{object_encoder_v4_forward.19} parent=0 // pred_fallthru
    _
  // Predicated region
  $region10: #{object_encoder_v4_forward.19} parent=0 // pred_check
    _
  $region11: #{object_encoder_v4_forward.19} parent=0 // pred_check_branch
    %13 = sbr.rel (0) target = $region13
  $region12: #{object_encoder_v4_forward.19} parent=0 // pred_region
    _
  $region13: #{object_encoder_v4_forward.19} parent=0 // pred_fallthru
    _
  %v15 = vld [vmem:[%s0] sm:$0xff]
  %v16 = vld [vmem:[%s0 + $0x8] sm:$0xf]
  %v17 = vld [vmem:[%s1] sm:$0xf]
  %v18 = vld [vmem:[%s1 + $0x4] sm:$0xf]
  %v19 = vld [vmem:[%s1 + $0x8] sm:$0xf]
  %v20 = vld [vmem:[%s1 + $0xc] sm:$0xf]
  %v21 = vld [vmem:[%s1 + $0x10] sm:$0xf]
  %v22 = vld [vmem:[%s1 + $0x14] sm:$0xf]
  %v23 = vld [vmem:[%s1 + $0x18] sm:$0xf]
  %v24 = vld [vmem:[%s1 + $0x1c] sm:$0xf]
  %v25 = vld [vmem:[%s1 + $0x20] sm:$0xf]
  %v26 = vld [vmem:[%s1 + $0x24] sm:$0xf]
  %v27 = vld [vmem:[%s1 + $0x28] sm:$0xf]
  %v28 = vld [vmem:[%s1 + $0x2c] sm:$0xf]
  %v29 = vld [vmem:[%s1 + $0x30] sm:$0xf]
  %v30 = vld [vmem:[%s1 + $0x34] sm:$0xf]
  %v31 = vld [vmem:[%s1 + $0x38] sm:$0xf]
  %v32 = vld [vmem:[%s1 + $0x3c] sm:$0xf]
  %v33 = vld [vmem:[%s1 + $0x40] sm:$0xf]
  %v34 = vld [vmem:[%s1 + $0x44] sm:$0xf]
  %v35 = vld [vmem:[%s1 + $0x48] sm:$0xf]
  %v36 = vld [vmem:[%s1 + $0x4c] sm:$0xf]
  %v37 = vld [vmem:[%s1 + $0x50] sm:$0xf]
  %v38 = vld [vmem:[%s1 + $0x54] sm:$0xf]
  %v39 = vld [vmem:[%s1 + $0x58] sm:$0xf]
  %v40 = vld [vmem:[%s1 + $0x5c] sm:$0xf]
  %v41 = vld [vmem:[%s1 + $0x60] sm:$0xf]
  %v42 = vld [vmem:[%s1 + $0x64] sm:$0xf]
  %v43 = vld [vmem:[%s1 + $0x68] sm:$0xf]
  %v44 = vld [vmem:[%s1 + $0x6c] sm:$0xf]
  %v45 = vld [vmem:[%s1 + $0x70] sm:$0xf]
  %v46 = vld [vmem:[%s1 + $0x74] sm:$0xf]
  %v47 = vld [vmem:[%s1 + $0x78] sm:$0xf]
  %v48 = vld [vmem:[%s1 + $0x7c] sm:$0xf]
  %v49 = vld [vmem:[%s1 + $0x80] sm:$0xf]
  %v50 = vld [vmem:[%s1 + $0x84] sm:$0xf]
  %v51 = vld [vmem:[%s1 + $0x88] sm:$0xf]
  %v52 = vld [vmem:[%s1 + $0x8c] sm:$0xf]
  %v53 = vld [vmem:[%s2] sm:$0x1]
  %v55 = vlaneseq
  %v56 = vshrl.u32 %v55, 7
  %v57 = vsub.s32 0, %v56
  %v58 = vrot.slane %v53, %v57
  %v62 = vunpack.c.l.b16 %v15
  %v63 = vunpack.c.h.b16 %v15
  %v64 = vunpack.c.l.b16 %v16
  %v65 = vpack.c.b16 %v62, %v62
  %v66 = vpack.c.b16 %v63, %v63
  %v67 = vpack.c.b16 %v64, %v64
  %v106 = vunpack.c.l.b16 %v17
  %v107 = vunpack.c.l.b16 %v18
  %v108 = vunpack.c.l.b16 %v19
  %v109 = vunpack.c.l.b16 %v20
  %v110 = vunpack.c.l.b16 %v21
  %v111 = vunpack.c.l.b16 %v22
  %v112 = vunpack.c.l.b16 %v23
  %v113 = vunpack.c.l.b16 %v24
  %v114 = vunpack.c.l.b16 %v25
  %v115 = vunpack.c.l.b16 %v26
  %v116 = vunpack.c.l.b16 %v27
  %v117 = vunpack.c.l.b16 %v28
  %v118 = vunpack.c.l.b16 %v29
  %v119 = vunpack.c.l.b16 %v30
  %v120 = vunpack.c.l.b16 %v31
  %v121 = vunpack.c.l.b16 %v32
  %v122 = vunpack.c.l.b16 %v33
  %v123 = vunpack.c.l.b16 %v34
  %v124 = vunpack.c.l.b16 %v35
  %v125 = vunpack.c.l.b16 %v36
  %v126 = vunpack.c.l.b16 %v37
  %v127 = vunpack.c.l.b16 %v38
  %v128 = vunpack.c.l.b16 %v39
  %v129 = vunpack.c.l.b16 %v40
  %v130 = vunpack.c.l.b16 %v41
  %v131 = vunpack.c.l.b16 %v42
  %v132 = vunpack.c.l.b16 %v43
  %v133 = vunpack.c.l.b16 %v44
  %v134 = vunpack.c.l.b16 %v45
  %v135 = vunpack.c.l.b16 %v46
  %v136 = vunpack.c.l.b16 %v47
  %v137 = vunpack.c.l.b16 %v48
  %v138 = vunpack.c.l.b16 %v49
  %v139 = vunpack.c.l.b16 %v50
  %v140 = vunpack.c.l.b16 %v51
  %v141 = vunpack.c.l.b16 %v52
  %v142 = vpack.c.b16 %v107, %v106
  %v143 = vpack.c.b16 %v109, %v108
  %v144 = vpack.c.b16 %v111, %v110
  %v145 = vpack.c.b16 %v113, %v112
  %v146 = vpack.c.b16 %v115, %v114
  %v147 = vpack.c.b16 %v117, %v116
  %v148 = vpack.c.b16 %v119, %v118
  %v149 = vpack.c.b16 %v121, %v120
  %v150 = vpack.c.b16 %v123, %v122
  %v151 = vpack.c.b16 %v125, %v124
  %v152 = vpack.c.b16 %v127, %v126
  %v153 = vpack.c.b16 %v129, %v128
  %v154 = vpack.c.b16 %v131, %v130
  %v155 = vpack.c.b16 %v133, %v132
  %v156 = vpack.c.b16 %v135, %v134
  %v157 = vpack.c.b16 %v137, %v136
  %v158 = vpack.c.b16 %v139, %v138
  %v159 = vpack.c.b16 %v141, %v140
  %vm178 = vcmask 261120
  %v180 = vsel %vm178, %v67, 0
  %182 = vmatprep.subr.bf16.mxu0 0
  %183 = vmatpush1.bf16.msra.mxu0 %v142
  %184 = vmatprep.subr.bf16.mxu0 0
  %185 = vmatpush1.bf16.msra.mxu0 %v143
  %186 = vmatprep.subr.bf16.mxu0 0
  %187 = vmatpush1.bf16.msra.mxu0 %v144
  %188 = vmatprep.subr.bf16.mxu0 0
  %189 = vmatpush1.bf16.msra.mxu0 %v145
  %190 = vmatprep.subr.bf16.mxu0 0
  %191 = vmatpush1.bf16.msra.mxu0 %v146
  %192 = vmatprep.subr.bf16.mxu0 0
  %193 = vmatpush1.bf16.msra.mxu0 %v147
  %194 = vmatprep.subr.bf16.mxu0 0
  %195 = vmatpush1.bf16.msra.mxu0 %v148
  %196 = vmatprep.subr.bf16.mxu0 0
  %197 = vmatpush1.bf16.msra.mxu0 %v149
  %198 = vmatprep.subr.bf16.mxu0 0
  %199 = vmatpush1.bf16.msra.mxu0 %v150
  %200 = vmatprep.subr.bf16.mxu0 0
  %201 = vmatpush1.bf16.msra.mxu0 %v151
  %202 = vmatprep.subr.bf16.mxu0 0
  %203 = vmatpush1.bf16.msra.mxu0 %v152
  %204 = vmatprep.subr.bf16.mxu0 0
  %205 = vmatpush1.bf16.msra.mxu0 %v153
  %206 = vmatprep.subr.bf16.mxu0 0
  %207 = vmatpush1.bf16.msra.mxu0 %v154
  %208 = vmatprep.subr.bf16.mxu0 0
  %209 = vmatpush1.bf16.msra.mxu0 %v155
  %210 = vmatprep.subr.bf16.mxu0 0
  %211 = vmatpush1.bf16.msra.mxu0 %v156
  %212 = vmatprep.subr.bf16.mxu0 0
  %213 = vmatpush1.bf16.msra.mxu0 %v157
  %214 = vmatprep.mubr.bf16.mxu0 %v66
  %215 = vmatmul.mubr.bf16.gmra.mrb[0].mxu0 %v65
  %v216 = vpop.f32.mrb[0].mxu0
  %v217 = vadd.f32 %v58, %v216
  %v218 = vpop.f32.mrb[0].mxu0
  %v219 = vpop.f32.mrb[0].mxu0
  %v220 = vpop.f32.mrb[0].mxu0
  %221 = vdwg.mxu0
  %222 = vmatprep.subr.bf16.mxu0 0
  %223 = vmatpush1.bf16.msra.mxu0 %v158
  %224 = vmatprep.subr.bf16.mxu0 0
  %225 = vmatpush1.bf16.msra.mxu0 %v159
  %226 = vmatprep.subr.bf16.mxu0 0
  %227 = vmatpush1.bf16.msra.mxu0 0
  %228 = vmatprep.subr.bf16.mxu0 0
  %229 = vmatpush1.bf16.msra.mxu0 0
  %230 = vmatprep.subr.bf16.mxu0 0
  %231 = vmatpush1.bf16.msra.mxu0 0
  %232 = vmatprep.subr.bf16.mxu0 0
  %233 = vmatpush1.bf16.msra.mxu0 0
  %234 = vmatprep.subr.bf16.mxu0 0
  %235 = vmatpush1.bf16.msra.mxu0 0
  %236 = vmatprep.subr.bf16.mxu0 0
  %237 = vmatpush1.bf16.msra.mxu0 0
  %238 = vmatprep.subr.bf16.mxu0 0
  %239 = vmatpush1.bf16.msra.mxu0 0
  %240 = vmatprep.subr.bf16.mxu0 0
  %241 = vmatpush1.bf16.msra.mxu0 0
  %242 = vmatprep.subr.bf16.mxu0 0
  %243 = vmatpush1.bf16.msra.mxu0 0
  %244 = vmatprep.subr.bf16.mxu0 0
  %245 = vmatpush1.bf16.msra.mxu0 0
  %246 = vmatprep.subr.bf16.mxu0 0
  %247 = vmatpush1.bf16.msra.mxu0 0
  %248 = vmatprep.subr.bf16.mxu0 0
  %249 = vmatpush1.bf16.msra.mxu0 0
  %250 = vmatprep.subr.bf16.mxu0 0
  %251 = vmatpush1.bf16.msra.mxu0 0
  %252 = vmatprep.subr.bf16.mxu0 0
  %253 = vmatpush1.bf16.msra.mxu0 0
  %254 = vmatprep.mubr.bf16.mxu0 0
  %255 = vmatmul.mubr.bf16.gmra.mrb[0].mxu0 %v180
  %v256 = vpop.f32.mrb[0].mxu0
  %v257 = vadd.f32 %v217, %v256
  %v258 = vpop.f32.mrb[0].mxu0
  %v259 = vpop.f32.mrb[0].mxu0
  %v260 = vpop.f32.mrb[0].mxu0
  %261 = vdwg.mxu0
  %vm262 = vcmp.gt.f32.partialorder %v257, 0.0
  %v263 = vmul.f32 %v257, 0.2
  %v264 = vsel %vm262, %v257, %v263
  %v265 = vpack.c.bf16 %v264, %v264
  %vm266 = vcmask 519168
  %267 = vst.msk [vmem:[%s3] sm:$0xf] %vm266, %v265
  // Predicated region
  $region14: #{object_encoder_v4_forward.19} parent=0 // pred_check
    _
  $region15: #{object_encoder_v4_forward.19} parent=0 // pred_check_branch
    %269 = sbr.rel (0) target = $region17
  $region16: #{object_encoder_v4_forward.19} parent=0 // pred_region
    _
  $region17: #{object_encoder_v4_forward.19} parent=0 // pred_fallthru
    _
  // Predicated region
  $region18: #{object_encoder_v4_forward.19} parent=0 // pred_check
    _
  $region19: #{object_encoder_v4_forward.19} parent=0 // pred_check_branch
    %271 = sbr.rel (0) target = $region21
  $region20: #{object_encoder_v4_forward.19} parent=0 // pred_region
    _
  $region21: #{object_encoder_v4_forward.19} parent=0 // pred_fallthru
    _

// kernel: object_encoder_v4_forward.22
$region0: #{object_encoder_v4_forward.22}
  #allocation0 [shape = 'u32[]', space=smem, size = 0x4, offset = 0x4, fixed_abs, tag = 'smem constant byte address 0x4 - core index']
  #allocation1 [shape = 'u32[144,128]{1,0:T(1,128)}', space=vmem, size = 0x12000, scoped, tag = 'internal scratch']
  %s0 = inlined_call_operand.vmem [shape: bf16[8,576], index: 0, kind: input, shape index: {}]
  %s1 = inlined_call_operand.vmem [shape: bf16[576,64], index: 1, kind: input, shape index: {}]
  %s2 = inlined_call_operand.vmem [shape: f32[1,64], index: 2, kind: input, shape index: {}]
  %s3 = inlined_call_operand.vmem [shape: bf16[8,64], index: 3, kind: input, shape index: {}]
  %s4 = inlined_call_operand.vmem [shape: bf16[8,64], index: 4, kind: output, shape index: {}]
  %s5 = sld [smem:[#allocation0]]
  $region26: #{object_encoder_v4_forward.22} parent=0
    _
  %s7 = ssub.s32 1, %s5
  %s8 = scalar_select 0, %s7, %s5
  // Predicated region
  $region2: #{object_encoder_v4_forward.22} parent=0 // pred_check
    _
  $region3: #{object_encoder_v4_forward.22} parent=0 // pred_check_branch
    %10 = sbr.rel (0) target = $region5
  $region4: #{object_encoder_v4_forward.22} parent=0 // pred_region
    _
  $region5: #{object_encoder_v4_forward.22} parent=0 // pred_fallthru
    _
  // Predicated region
  $region6: #{object_encoder_v4_forward.22} parent=0 // pred_check
    _
  $region7: #{object_encoder_v4_forward.22} parent=0 // pred_check_branch
    %12 = sbr.rel (0) target = $region9
  $region8: #{object_encoder_v4_forward.22} parent=0 // pred_region
    _
  $region9: #{object_encoder_v4_forward.22} parent=0 // pred_fallthru
    _
  // Predicated region
  $region10: #{object_encoder_v4_forward.22} parent=0 // pred_check
    _
  $region11: #{object_encoder_v4_forward.22} parent=0 // pred_check_branch
    %14 = sbr.rel (0) target = $region13
  $region12: #{object_encoder_v4_forward.22} parent=0 // pred_region
    _
  $region13: #{object_encoder_v4_forward.22} parent=0 // pred_fallthru
    _
  // Predicated region
  $region14: #{object_encoder_v4_forward.22} parent=0 // pred_check
    _
  $region15: #{object_encoder_v4_forward.22} parent=0 // pred_check_branch
    %16 = sbr.rel (0) target = $region17
  $region16: #{object_encoder_v4_forward.22} parent=0 // pred_region
    _
  $region17: #{object_encoder_v4_forward.22} parent=0 // pred_fallthru
    _
  %v18 = vld [vmem:[%s0] sm:$0xff]
  %v19 = vld [vmem:[%s0 + $0x8] sm:$0xff]
  %v20 = vld [vmem:[%s0 + $0x10] sm:$0xf]
  %v21 = vld [vmem:[%s1] sm:$0xf]
  %v22 = vld [vmem:[%s1 + $0x4] sm:$0xf]
  %v23 = vld [vmem:[%s1 + $0x8] sm:$0xf]
  %v24 = vld [vmem:[%s1 + $0xc] sm:$0xf]
  %v25 = vld [vmem:[%s1 + $0x10] sm:$0xf]
  %v26 = vld [vmem:[%s1 + $0x14] sm:$0xf]
  %v27 = vld [vmem:[%s1 + $0x18] sm:$0xf]
  %v28 = vld [vmem:[%s1 + $0x1c] sm:$0xf]
  %v29 = vld [vmem:[%s1 + $0x20] sm:$0xf]
  %v30 = vld [vmem:[%s1 + $0x24] sm:$0xf]
  %v31 = vld [vmem:[%s1 + $0x28] sm:$0xf]
  %v32 = vld [vmem:[%s1 + $0x2c] sm:$0xf]
  %v33 = vld [vmem:[%s1 + $0x30] sm:$0xf]
  %v34 = vld [vmem:[%s1 + $0x34] sm:$0xf]
  %v35 = vld [vmem:[%s1 + $0x38] sm:$0xf]
  %v36 = vld [vmem:[%s1 + $0x3c] sm:$0xf]
  %v37 = vld [vmem:[%s1 + $0x40] sm:$0xf]
  %v38 = vld [vmem:[%s1 + $0x44] sm:$0xf]
  %v39 = vld [vmem:[%s1 + $0x48] sm:$0xf]
  %v40 = vld [vmem:[%s1 + $0x4c] sm:$0xf]
  %v41 = vld [vmem:[%s1 + $0x50] sm:$0xf]
  %v42 = vld [vmem:[%s1 + $0x54] sm:$0xf]
  %v43 = vld [vmem:[%s1 + $0x58] sm:$0xf]
  %v44 = vld [vmem:[%s1 + $0x5c] sm:$0xf]
  %v45 = vld [vmem:[%s1 + $0x60] sm:$0xf]
  %v46 = vld [vmem:[%s1 + $0x64] sm:$0xf]
  %v47 = vld [vmem:[%s1 + $0x68] sm:$0xf]
  %v48 = vld [vmem:[%s1 + $0x6c] sm:$0xf]
  %v49 = vld [vmem:[%s1 + $0x70] sm:$0xf]
  %v50 = vld [vmem:[%s1 + $0x74] sm:$0xf]
  %v51 = vld [vmem:[%s1 + $0x78] sm:$0xf]
  %v52 = vld [vmem:[%s1 + $0x7c] sm:$0xf]
  %v53 = vld [vmem:[%s1 + $0x80] sm:$0xf]
  %v54 = vld [vmem:[%s1 + $0x84] sm:$0xf]
  %v55 = vld [vmem:[%s1 + $0x88] sm:$0xf]
  %v56 = vld [vmem:[%s1 + $0x8c] sm:$0xf]
  %v57 = vld [vmem:[%s1 + $0x90] sm:$0xf]
  %v58 = vld [vmem:[%s1 + $0x94] sm:$0xf]
  %v59 = vld [vmem:[%s1 + $0x98] sm:$0xf]
  %v60 = vld [vmem:[%s1 + $0x9c] sm:$0xf]
  %v61 = vld [vmem:[%s1 + $0xa0] sm:$0xf]
  %v62 = vld [vmem:[%s1 + $0xa4] sm:$0xf]
  %v63 = vld [vmem:[%s1 + $0xa8] sm:$0xf]
  %v64 = vld [vmem:[%s1 + $0xac] sm:$0xf]
  %v65 = vld [vmem:[%s1 + $0xb0] sm:$0xf]
  %v66 = vld [vmem:[%s1 + $0xb4] sm:$0xf]
  %v67 = vld [vmem:[%s1 + $0xb8] sm:$0xf]
  %v68 = vld [vmem:[%s1 + $0xbc] sm:$0xf]
  %v69 = vld [vmem:[%s1 + $0xc0] sm:$0xf]
  %v70 = vld [vmem:[%s1 + $0xc4] sm:$0xf]
  %v71 = vld [vmem:[%s1 + $0xc8] sm:$0xf]
  %v72 = vld [vmem:[%s1 + $0xcc] sm:$0xf]
  %v73 = vld [vmem:[%s1 + $0xd0] sm:$0xf]
  %v74 = vld [vmem:[%s1 + $0xd4] sm:$0xf]
  %v75 = vld [vmem:[%s1 + $0xd8] sm:$0xf]
  %v76 = vld [vmem:[%s1 + $0xdc] sm:$0xf]
  %v77 = vld [vmem:[%s1 + $0xe0] sm:$0xf]
  %v78 = vld [vmem:[%s1 + $0xe4] sm:$0xf]
  %v79 = vld [vmem:[%s1 + $0xe8] sm:$0xf]
  %v80 = vld [vmem:[%s1 + $0xec] sm:$0xf]
  %v81 = vld [vmem:[%s1 + $0xf0] sm:$0xf]
  %v82 = vld [vmem:[%s1 + $0xf4] sm:$0xf]
  %v83 = vld [vmem:[%s1 + $0xf8] sm:$0xf]
  %v84 = vld [vmem:[%s1 + $0xfc] sm:$0xf]
  %v85 = vld [vmem:[%s1 + $0x100] sm:$0xf]
  %v86 = vld [vmem:[%s1 + $0x104] sm:$0xf]
  %v87 = vld [vmem:[%s1 + $0x108] sm:$0xf]
  %v88 = vld [vmem:[%s1 + $0x10c] sm:$0xf]
  %v89 = vld [vmem:[%s1 + $0x110] sm:$0xf]
  %v90 = vld [vmem:[%s1 + $0x114] sm:$0xf]
  %v91 = vld [vmem:[%s1 + $0x118] sm:$0xf]
  %v92 = vld [vmem:[%s1 + $0x11c] sm:$0xf]
  %v93 = vld [vmem:[%s2] sm:$0x1]
  %v95 = vlaneseq
  %v96 = vshrl.u32 %v95, 7
  %v97 = vsub.s32 0, %v96
  %v98 = vrot.slane %v93, %v97
  %v103 = vunpack.c.l.b16 %v18
  %v104 = vunpack.c.h.b16 %v18
  %v105 = vunpack.c.l.b16 %v19
  %v106 = vunpack.c.h.b16 %v19
  %v107 = vunpack.c.l.b16 %v20
  %v108 = vpack.c.b16 %v103, %v103
  %v109 = vpack.c.b16 %v104, %v104
  %v110 = vpack.c.b16 %v105, %v105
  %v111 = vpack.c.b16 %v106, %v106
  %v112 = vpack.c.b16 %v107, %v107
  %v189 = vunpack.c.l.b16 %v21
  %v190 = vunpack.c.l.b16 %v22
  %v191 = vunpack.c.l.b16 %v23
  %v192 = vunpack.c.l.b16 %v24
  %v193 = vunpack.c.l.b16 %v25
  %v194 = vunpack.c.l.b16 %v26
  %v195 = vunpack.c.l.b16 %v27
  %v196 = vunpack.c.l.b16 %v28
  %v197 = vunpack.c.l.b16 %v29
  %v198 = vunpack.c.l.b16 %v30
  %v199 = vunpack.c.l.b16 %v31
  %v200 = vunpack.c.l.b16 %v32
  %v201 = vunpack.c.l.b16 %v33
  %v202 = vunpack.c.l.b16 %v34
  %v203 = vunpack.c.l.b16 %v35
  %v204 = vunpack.c.l.b16 %v36
  %v205 = vunpack.c.l.b16 %v37
  %v206 = vunpack.c.l.b16 %v38
  %v207 = vunpack.c.l.b16 %v39
  %v208 = vunpack.c.l.b16 %v40
  %v209 = vunpack.c.l.b16 %v41
  %v210 = vunpack.c.l.b16 %v42
  %v211 = vunpack.c.l.b16 %v43
  %v212 = vunpack.c.l.b16 %v44
  %v213 = vunpack.c.l.b16 %v45
  %v214 = vunpack.c.l.b16 %v46
  %v215 = vunpack.c.l.b16 %v47
  %v216 = vunpack.c.l.b16 %v48
  %v217 = vunpack.c.l.b16 %v49
  %v218 = vunpack.c.l.b16 %v50
  %v219 = vunpack.c.l.b16 %v51
  %v220 = vunpack.c.l.b16 %v52
  %v221 = vunpack.c.l.b16 %v53
  %v222 = vunpack.c.l.b16 %v54
  %v223 = vunpack.c.l.b16 %v55
  %v224 = vunpack.c.l.b16 %v56
  %v225 = vunpack.c.l.b16 %v57
  %v226 = vunpack.c.l.b16 %v58
  %v227 = vunpack.c.l.b16 %v59
  %v228 = vunpack.c.l.b16 %v60
  %v229 = vunpack.c.l.b16 %v61
  %v230 = vunpack.c.l.b16 %v62
  %v231 = vunpack.c.l.b16 %v63
  %v232 = vunpack.c.l.b16 %v64
  %v233 = vunpack.c.l.b16 %v65
  %v234 = vunpack.c.l.b16 %v66
  %v235 = vunpack.c.l.b16 %v67
  %v236 = vunpack.c.l.b16 %v68
  %v237 = vunpack.c.l.b16 %v69
  %v238 = vunpack.c.l.b16 %v70
  %v239 = vunpack.c.l.b16 %v71
  %v240 = vunpack.c.l.b16 %v72
  %v241 = vunpack.c.l.b16 %v73
  %v242 = vunpack.c.l.b16 %v74
  %v243 = vunpack.c.l.b16 %v75
  %v244 = vunpack.c.l.b16 %v76
  %v245 = vunpack.c.l.b16 %v77
  %v246 = vunpack.c.l.b16 %v78
  %v247 = vunpack.c.l.b16 %v79
  %v248 = vunpack.c.l.b16 %v80
  %v249 = vunpack.c.l.b16 %v81
  %v250 = vunpack.c.l.b16 %v82
  %v251 = vunpack.c.l.b16 %v83
  %v252 = vunpack.c.l.b16 %v84
  %v253 = vunpack.c.l.b16 %v85
  %v254 = vunpack.c.l.b16 %v86
  %v255 = vunpack.c.l.b16 %v87
  %v256 = vunpack.c.l.b16 %v88
  %v257 = vunpack.c.l.b16 %v89
  %v258 = vunpack.c.l.b16 %v90
  %v259 = vunpack.c.l.b16 %v91
  %v260 = vunpack.c.l.b16 %v92
  %v261 = vpack.c.b16 %v190, %v189
  %v262 = vpack.c.b16 %v192, %v191
  %v263 = vpack.c.b16 %v194, %v193
  %v264 = vpack.c.b16 %v196, %v195
  %v265 = vpack.c.b16 %v198, %v197
  %v266 = vpack.c.b16 %v200, %v199
  %v267 = vpack.c.b16 %v202, %v201
  %v268 = vpack.c.b16 %v204, %v203
  %v269 = vpack.c.b16 %v206, %v205
  %v270 = vpack.c.b16 %v208, %v207
  %v271 = vpack.c.b16 %v210, %v209
  %v272 = vpack.c.b16 %v212, %v211
  %v273 = vpack.c.b16 %v214, %v213
  %v274 = vpack.c.b16 %v216, %v215
  %v275 = vpack.c.b16 %v218, %v217
  %v276 = vpack.c.b16 %v220, %v219
  %v277 = vpack.c.b16 %v222, %v221
  %v278 = vpack.c.b16 %v224, %v223
  %v279 = vpack.c.b16 %v226, %v225
  %v280 = vpack.c.b16 %v228, %v227
  %v281 = vpack.c.b16 %v230, %v229
  %v282 = vpack.c.b16 %v232, %v231
  %v283 = vpack.c.b16 %v234, %v233
  %v284 = vpack.c.b16 %v236, %v235
  %v285 = vpack.c.b16 %v238, %v237
  %v286 = vpack.c.b16 %v240, %v239
  %v287 = vpack.c.b16 %v242, %v241
  %v288 = vpack.c.b16 %v244, %v243
  %v289 = vpack.c.b16 %v246, %v245
  %v290 = vpack.c.b16 %v248, %v247
  %v291 = vpack.c.b16 %v250, %v249
  %v292 = vpack.c.b16 %v252, %v251
  %v293 = vpack.c.b16 %v254, %v253
  %v294 = vpack.c.b16 %v256, %v255
  %v295 = vpack.c.b16 %v258, %v257
  %v296 = vpack.c.b16 %v260, %v259
  %vm333 = vcmask 523264
  %v335 = vsel %vm333, %v112, 0
  %337 = vmatprep.subr.bf16.mxu0 0
  %338 = vmatpush1.bf16.msra.mxu0 %v261
  %339 = vmatprep.subr.bf16.mxu0 0
  %340 = vmatpush1.bf16.msra.mxu0 %v262
  %341 = vmatprep.subr.bf16.mxu0 0
  %342 = vmatpush1.bf16.msra.mxu0 %v263
  %343 = vmatprep.subr.bf16.mxu0 0
  %344 = vmatpush1.bf16.msra.mxu0 %v264
  %345 = vmatprep.subr.bf16.mxu0 0
  %346 = vmatpush1.bf16.msra.mxu0 %v265
  %347 = vmatprep.subr.bf16.mxu0 0
  %348 = vmatpush1.bf16.msra.mxu0 %v266
  %349 = vmatprep.subr.bf16.mxu0 0
  %350 = vmatpush1.bf16.msra.mxu0 %v267
  %351 = vmatprep.subr.bf16.mxu0 0
  %352 = vmatpush1.bf16.msra.mxu0 %v268
  %353 = vmatprep.subr.bf16.mxu0 0
  %354 = vmatpush1.bf16.msra.mxu0 %v269
  %355 = vmatprep.subr.bf16.mxu0 0
  %356 = vmatpush1.bf16.msra.mxu0 %v270
  %357 = vmatprep.subr.bf16.mxu0 0
  %358 = vmatpush1.bf16.msra.mxu0 %v271
  %359 = vmatprep.subr.bf16.mxu0 0
  %360 = vmatpush1.bf16.msra.mxu0 %v272
  %361 = vmatprep.subr.bf16.mxu0 0
  %362 = vmatpush1.bf16.msra.mxu0 %v273
  %363 = vmatprep.subr.bf16.mxu0 0
  %364 = vmatpush1.bf16.msra.mxu0 %v274
  %365 = vmatprep.subr.bf16.mxu0 0
  %366 = vmatpush1.bf16.msra.mxu0 %v275
  %367 = vmatprep.subr.bf16.mxu0 0
  %368 = vmatpush1.bf16.msra.mxu0 %v276
  %369 = vmatprep.mubr.bf16.mxu0 %v109
  %370 = vmatmul.mubr.bf16.gmra.mrb[0].mxu0 %v108
  %v371 = vpop.f32.mrb[0].mxu0
  %v372 = vadd.f32 %v98, %v371
  %v373 = vpop.f32.mrb[0].mxu0
  %v374 = vpop.f32.mrb[0].mxu0
  %v375 = vpop.f32.mrb[0].mxu0
  %376 = vdwg.mxu0
  %377 = vmatprep.subr.bf16.mxu0 0
  %378 = vmatpush1.bf16.msra.mxu0 %v277
  %379 = vmatprep.subr.bf16.mxu0 0
  %380 = vmatpush1.bf16.msra.mxu0 %v278
  %381 = vmatprep.subr.bf16.mxu0 0
  %382 = vmatpush1.bf16.msra.mxu0 %v279
  %383 = vmatprep.subr.bf16.mxu0 0
  %384 = vmatpush1.bf16.msra.mxu0 %v280
  %385 = vmatprep.subr.bf16.mxu0 0
  %386 = vmatpush1.bf16.msra.mxu0 %v281
  %387 = vmatprep.subr.bf16.mxu0 0
  %388 = vmatpush1.bf16.msra.mxu0 %v282
  %389 = vmatprep.subr.bf16.mxu0 0
  %390 = vmatpush1.bf16.msra.mxu0 %v283
  %391 = vmatprep.subr.bf16.mxu0 0
  %392 = vmatpush1.bf16.msra.mxu0 %v284
  %393 = vmatprep.subr.bf16.mxu0 0
  %394 = vmatpush1.bf16.msra.mxu0 %v285
  %395 = vmatprep.subr.bf16.mxu0 0
  %396 = vmatpush1.bf16.msra.mxu0 %v286
  %397 = vmatprep.subr.bf16.mxu0 0
  %398 = vmatpush1.bf16.msra.mxu0 %v287
  %399 = vmatprep.subr.bf16.mxu0 0
  %400 = vmatpush1.bf16.msra.mxu0 %v288
  %401 = vmatprep.subr.bf16.mxu0 0
  %402 = vmatpush1.bf16.msra.mxu0 %v289
  %403 = vmatprep.subr.bf16.mxu0 0
  %404 = vmatpush1.bf16.msra.mxu0 %v290
  %405 = vmatprep.subr.bf16.mxu0 0
  %406 = vmatpush1.bf16.msra.mxu0 %v291
  %407 = vmatprep.subr.bf16.mxu0 0
  %408 = vmatpush1.bf16.msra.mxu0 %v292
  %409 = vmatprep.mubr.bf16.mxu0 %v111
  %410 = vmatmul.mubr.bf16.gmra.mrb[0].mxu0 %v110
  %v411 = vpop.f32.mrb[0].mxu0
  %v412 = vadd.f32 %v372, %v411
  %v413 = vpop.f32.mrb[0].mxu0
  %v414 = vpop.f32.mrb[0].mxu0
  %v415 = vpop.f32.mrb[0].mxu0
  %416 = vdwg.mxu0
  %417 = vmatprep.subr.bf16.mxu0 0
  %418 = vmatpush1.bf16.msra.mxu0 %v293
  %419 = vmatprep.subr.bf16.mxu0 0
  %420 = vmatpush1.bf16.msra.mxu0 %v294
  %421 = vmatprep.subr.bf16.mxu0 0
  %422 = vmatpush1.bf16.msra.mxu0 %v295
  %423 = vmatprep.subr.bf16.mxu0 0
  %424 = vmatpush1.bf16.msra.mxu0 %v296
  %425 = vmatprep.subr.bf16.mxu0 0
  %426 = vmatpush1.bf16.msra.mxu0 0
  %427 = vmatprep.subr.bf16.mxu0 0
  %428 = vmatpush1.bf16.msra.mxu0 0
  %429 = vmatprep.subr.bf16.mxu0 0
  %430 = vmatpush1.bf16.msra.mxu0 0
  %431 = vmatprep.subr.bf16.mxu0 0
  %432 = vmatpush1.bf16.msra.mxu0 0
  %433 = vmatprep.subr.bf16.mxu0 0
  %434 = vmatpush1.bf16.msra.mxu0 0
  %435 = vmatprep.subr.bf16.mxu0 0
  %436 = vmatpush1.bf16.msra.mxu0 0
  %437 = vmatprep.subr.bf16.mxu0 0
  %438 = vmatpush1.bf16.msra.mxu0 0
  %439 = vmatprep.subr.bf16.mxu0 0
  %440 = vmatpush1.bf16.msra.mxu0 0
  %441 = vmatprep.subr.bf16.mxu0 0
  %442 = vmatpush1.bf16.msra.mxu0 0
  %443 = vmatprep.subr.bf16.mxu0 0
  %444 = vmatpush1.bf16.msra.mxu0 0
  %445 = vmatprep.subr.bf16.mxu0 0
  %446 = vmatpush1.bf16.msra.mxu0 0
  %447 = vmatprep.subr.bf16.mxu0 0
  %448 = vmatpush1.bf16.msra.mxu0 0
  %449 = vmatprep.mubr.bf16.mxu0 0
  %450 = vmatmul.mubr.bf16.gmra.mrb[0].mxu0 %v335
  %v451 = vpop.f32.mrb[0].mxu0
  %v452 = vadd.f32 %v412, %v451
  %v453 = vpop.f32.mrb[0].mxu0
  %v454 = vpop.f32.mrb[0].mxu0
  %v455 = vpop.f32.mrb[0].mxu0
  %456 = vdwg.mxu0
  %v457 = vld [vmem:[%s3] sm:$0xf]
  %v458 = vunpack.c.l.bf16 %v457
  %v459 = vadd.f32 %v452, %v458
  %vm460 = vcmp.gt.f32.partialorder %v459, 0.0
  %v461 = vmul.f32 %v459, 0.2
  %v462 = vsel %vm460, %v459, %v461
  %v463 = vpack.c.bf16 %v462, %v462
  %vm464 = vcmask 519168
  %465 = vst.msk [vmem:[%s4] sm:$0xf] %vm464, %v463
  // Predicated region
  $region18: #{object_encoder_v4_forward.22} parent=0 // pred_check
    _
  $region19: #{object_encoder_v4_forward.22} parent=0 // pred_check_branch
    %467 = sbr.rel (0) target = $region21
  $region20: #{object_encoder_v4_forward.22} parent=0 // pred_region
    _
  $region21: #{object_encoder_v4_forward.22} parent=0 // pred_fallthru
    _
  // Predicated region
  $region22: #{object_encoder_v4_forward.22} parent=0 // pred_check
    _
  $region23: #{object_encoder_v4_forward.22} parent=0 // pred_check_branch
    %469 = sbr.rel (0) target = $region25
  $region24: #{object_encoder_v4_forward.22} parent=0 // pred_region
    _
  $region25: #{object_encoder_v4_forward.22} parent=0 // pred_fallthru
    _

// kernel: object_encoder_v4_forward.20
$region0: #{object_encoder_v4_forward.20}
  #allocation0 [shape = 'u32[]', space=smem, size = 0x4, offset = 0x4, fixed_abs, tag = 'smem constant byte address 0x4 - core index']
  #allocation1 [shape = 'u32[144,128]{1,0:T(1,128)}', space=vmem, size = 0x12000, scoped, tag = 'internal scratch']
  %s0 = inlined_call_operand.vmem [shape: bf16[8,608], index: 0, kind: input, shape index: {}]
  %s1 = inlined_call_operand.vmem [shape: bf16[608,64], index: 1, kind: input, shape index: {}]
  %s2 = inlined_call_operand.vmem [shape: f32[1,64], index: 2, kind: input, shape index: {}]
  %s3 = inlined_call_operand.vmem [shape: bf16[8,64], index: 3, kind: output, shape index: {}]
  %s4 = sld [smem:[#allocation0]]
  $region22: #{object_encoder_v4_forward.20} parent=0
    _
  %s6 = ssub.s32 1, %s4
  %s7 = scalar_select 0, %s6, %s4
  // Predicated region
  $region2: #{object_encoder_v4_forward.20} parent=0 // pred_check
    _
  $region3: #{object_encoder_v4_forward.20} parent=0 // pred_check_branch
    %9 = sbr.rel (0) target = $region5
  $region4: #{object_encoder_v4_forward.20} parent=0 // pred_region
    _
  $region5: #{object_encoder_v4_forward.20} parent=0 // pred_fallthru
    _
  // Predicated region
  $region6: #{object_encoder_v4_forward.20} parent=0 // pred_check
    _
  $region7: #{object_encoder_v4_forward.20} parent=0 // pred_check_branch
    %11 = sbr.rel (0) target = $region9
  $region8: #{object_encoder_v4_forward.20} parent=0 // pred_region
    _
  $region9: #{object_encoder_v4_forward.20} parent=0 // pred_fallthru
    _
  // Predicated region
  $region10: #{object_encoder_v4_forward.20} parent=0 // pred_check
    _
  $region11: #{object_encoder_v4_forward.20} parent=0 // pred_check_branch
    %13 = sbr.rel (0) target = $region13
  $region12: #{object_encoder_v4_forward.20} parent=0 // pred_region
    _
  $region13: #{object_encoder_v4_forward.20} parent=0 // pred_fallthru
    _
  %v15 = vld [vmem:[%s0] sm:$0xff]
  %v16 = vld [vmem:[%s0 + $0x8] sm:$0xff]
  %v17 = vld [vmem:[%s0 + $0x10] sm:$0xf]
  %v18 = vld [vmem:[%s1] sm:$0xf]
  %v19 = vld [vmem:[%s1 + $0x4] sm:$0xf]
  %v20 = vld [vmem:[%s1 + $0x8] sm:$0xf]
  %v21 = vld [vmem:[%s1 + $0xc] sm:$0xf]
  %v22 = vld [vmem:[%s1 + $0x10] sm:$0xf]
  %v23 = vld [vmem:[%s1 + $0x14] sm:$0xf]
  %v24 = vld [vmem:[%s1 + $0x18] sm:$0xf]
  %v25 = vld [vmem:[%s1 + $0x1c] sm:$0xf]
  %v26 = vld [vmem:[%s1 + $0x20] sm:$0xf]
  %v27 = vld [vmem:[%s1 + $0x24] sm:$0xf]
  %v28 = vld [vmem:[%s1 + $0x28] sm:$0xf]
  %v29 = vld [vmem:[%s1 + $0x2c] sm:$0xf]
  %v30 = vld [vmem:[%s1 + $0x30] sm:$0xf]
  %v31 = vld [vmem:[%s1 + $0x34] sm:$0xf]
  %v32 = vld [vmem:[%s1 + $0x38] sm:$0xf]
  %v33 = vld [vmem:[%s1 + $0x3c] sm:$0xf]
  %v34 = vld [vmem:[%s1 + $0x40] sm:$0xf]
  %v35 = vld [vmem:[%s1 + $0x44] sm:$0xf]
  %v36 = vld [vmem:[%s1 + $0x48] sm:$0xf]
  %v37 = vld [vmem:[%s1 + $0x4c] sm:$0xf]
  %v38 = vld [vmem:[%s1 + $0x50] sm:$0xf]
  %v39 = vld [vmem:[%s1 + $0x54] sm:$0xf]
  %v40 = vld [vmem:[%s1 + $0x58] sm:$0xf]
  %v41 = vld [vmem:[%s1 + $0x5c] sm:$0xf]
  %v42 = vld [vmem:[%s1 + $0x60] sm:$0xf]
  %v43 = vld [vmem:[%s1 + $0x64] sm:$0xf]
  %v44 = vld [vmem:[%s1 + $0x68] sm:$0xf]
  %v45 = vld [vmem:[%s1 + $0x6c] sm:$0xf]
  %v46 = vld [vmem:[%s1 + $0x70] sm:$0xf]
  %v47 = vld [vmem:[%s1 + $0x74] sm:$0xf]
  %v48 = vld [vmem:[%s1 + $0x78] sm:$0xf]
  %v49 = vld [vmem:[%s1 + $0x7c] sm:$0xf]
  %v50 = vld [vmem:[%s1 + $0x80] sm:$0xf]
  %v51 = vld [vmem:[%s1 + $0x84] sm:$0xf]
  %v52 = vld [vmem:[%s1 + $0x88] sm:$0xf]
  %v53 = vld [vmem:[%s1 + $0x8c] sm:$0xf]
  %v54 = vld [vmem:[%s1 + $0x90] sm:$0xf]
  %v55 = vld [vmem:[%s1 + $0x94] sm:$0xf]
  %v56 = vld [vmem:[%s1 + $0x98] sm:$0xf]
  %v57 = vld [vmem:[%s1 + $0x9c] sm:$0xf]
  %v58 = vld [vmem:[%s1 + $0xa0] sm:$0xf]
  %v59 = vld [vmem:[%s1 + $0xa4] sm:$0xf]
  %v60 = vld [vmem:[%s1 + $0xa8] sm:$0xf]
  %v61 = vld [vmem:[%s1 + $0xac] sm:$0xf]
  %v62 = vld [vmem:[%s1 + $0xb0] sm:$0xf]
  %v63 = vld [vmem:[%s1 + $0xb4] sm:$0xf]
  %v64 = vld [vmem:[%s1 + $0xb8] sm:$0xf]
  %v65 = vld [vmem:[%s1 + $0xbc] sm:$0xf]
  %v66 = vld [vmem:[%s1 + $0xc0] sm:$0xf]
  %v67 = vld [vmem:[%s1 + $0xc4] sm:$0xf]
  %v68 = vld [vmem:[%s1 + $0xc8] sm:$0xf]
  %v69 = vld [vmem:[%s1 + $0xcc] sm:$0xf]
  %v70 = vld [vmem:[%s1 + $0xd0] sm:$0xf]
  %v71 = vld [vmem:[%s1 + $0xd4] sm:$0xf]
  %v72 = vld [vmem:[%s1 + $0xd8] sm:$0xf]
  %v73 = vld [vmem:[%s1 + $0xdc] sm:$0xf]
  %v74 = vld [vmem:[%s1 + $0xe0] sm:$0xf]
  %v75 = vld [vmem:[%s1 + $0xe4] sm:$0xf]
  %v76 = vld [vmem:[%s1 + $0xe8] sm:$0xf]
  %v77 = vld [vmem:[%s1 + $0xec] sm:$0xf]
  %v78 = vld [vmem:[%s1 + $0xf0] sm:$0xf]
  %v79 = vld [vmem:[%s1 + $0xf4] sm:$0xf]
  %v80 = vld [vmem:[%s1 + $0xf8] sm:$0xf]
  %v81 = vld [vmem:[%s1 + $0xfc] sm:$0xf]
  %v82 = vld [vmem:[%s1 + $0x100] sm:$0xf]
  %v83 = vld [vmem:[%s1 + $0x104] sm:$0xf]
  %v84 = vld [vmem:[%s1 + $0x108] sm:$0xf]
  %v85 = vld [vmem:[%s1 + $0x10c] sm:$0xf]
  %v86 = vld [vmem:[%s1 + $0x110] sm:$0xf]
  %v87 = vld [vmem:[%s1 + $0x114] sm:$0xf]
  %v88 = vld [vmem:[%s1 + $0x118] sm:$0xf]
  %v89 = vld [vmem:[%s1 + $0x11c] sm:$0xf]
  %v90 = vld [vmem:[%s1 + $0x120] sm:$0xf]
  %v91 = vld [vmem:[%s1 + $0x124] sm:$0xf]
  %v92 = vld [vmem:[%s1 + $0x128] sm:$0xf]
  %v93 = vld [vmem:[%s1 + $0x12c] sm:$0xf]
  %v94 = vld [vmem:[%s2] sm:$0x1]
  %v96 = vlaneseq
  %v97 = vshrl.u32 %v96, 7
  %v98 = vsub.s32 0, %v97
  %v99 = vrot.slane %v94, %v98
  %v104 = vunpack.c.l.b16 %v15
  %v105 = vunpack.c.h.b16 %v15
  %v106 = vunpack.c.l.b16 %v16
  %v107 = vunpack.c.h.b16 %v16
  %v108 = vunpack.c.l.b16 %v17
  %v109 = vpack.c.b16 %v104, %v104
  %v110 = vpack.c.b16 %v105, %v105
  %v111 = vpack.c.b16 %v106, %v106
  %v112 = vpack.c.b16 %v107, %v107
  %v113 = vpack.c.b16 %v108, %v108
  %v194 = vunpack.c.l.b16 %v18
  %v195 = vunpack.c.l.b16 %v19
  %v196 = vunpack.c.l.b16 %v20
  %v197 = vunpack.c.l.b16 %v21
  %v198 = vunpack.c.l.b16 %v22
  %v199 = vunpack.c.l.b16 %v23
  %v200 = vunpack.c.l.b16 %v24
  %v201 = vunpack.c.l.b16 %v25
  %v202 = vunpack.c.l.b16 %v26
  %v203 = vunpack.c.l.b16 %v27
  %v204 = vunpack.c.l.b16 %v28
  %v205 = vunpack.c.l.b16 %v29
  %v206 = vunpack.c.l.b16 %v30
  %v207 = vunpack.c.l.b16 %v31
  %v208 = vunpack.c.l.b16 %v32
  %v209 = vunpack.c.l.b16 %v33
  %v210 = vunpack.c.l.b16 %v34
  %v211 = vunpack.c.l.b16 %v35
  %v212 = vunpack.c.l.b16 %v36
  %v213 = vunpack.c.l.b16 %v37
  %v214 = vunpack.c.l.b16 %v38
  %v215 = vunpack.c.l.b16 %v39
  %v216 = vunpack.c.l.b16 %v40
  %v217 = vunpack.c.l.b16 %v41
  %v218 = vunpack.c.l.b16 %v42
  %v219 = vunpack.c.l.b16 %v43
  %v220 = vunpack.c.l.b16 %v44
  %v221 = vunpack.c.l.b16 %v45
  %v222 = vunpack.c.l.b16 %v46
  %v223 = vunpack.c.l.b16 %v47
  %v224 = vunpack.c.l.b16 %v48
  %v225 = vunpack.c.l.b16 %v49
  %v226 = vunpack.c.l.b16 %v50
  %v227 = vunpack.c.l.b16 %v51
  %v228 = vunpack.c.l.b16 %v52
  %v229 = vunpack.c.l.b16 %v53
  %v230 = vunpack.c.l.b16 %v54
  %v231 = vunpack.c.l.b16 %v55
  %v232 = vunpack.c.l.b16 %v56
  %v233 = vunpack.c.l.b16 %v57
  %v234 = vunpack.c.l.b16 %v58
  %v235 = vunpack.c.l.b16 %v59
  %v236 = vunpack.c.l.b16 %v60
  %v237 = vunpack.c.l.b16 %v61
  %v238 = vunpack.c.l.b16 %v62
  %v239 = vunpack.c.l.b16 %v63
  %v240 = vunpack.c.l.b16 %v64
  %v241 = vunpack.c.l.b16 %v65
  %v242 = vunpack.c.l.b16 %v66
  %v243 = vunpack.c.l.b16 %v67
  %v244 = vunpack.c.l.b16 %v68
  %v245 = vunpack.c.l.b16 %v69
  %v246 = vunpack.c.l.b16 %v70
  %v247 = vunpack.c.l.b16 %v71
  %v248 = vunpack.c.l.b16 %v72
  %v249 = vunpack.c.l.b16 %v73
  %v250 = vunpack.c.l.b16 %v74
  %v251 = vunpack.c.l.b16 %v75
  %v252 = vunpack.c.l.b16 %v76
  %v253 = vunpack.c.l.b16 %v77
  %v254 = vunpack.c.l.b16 %v78
  %v255 = vunpack.c.l.b16 %v79
  %v256 = vunpack.c.l.b16 %v80
  %v257 = vunpack.c.l.b16 %v81
  %v258 = vunpack.c.l.b16 %v82
  %v259 = vunpack.c.l.b16 %v83
  %v260 = vunpack.c.l.b16 %v84
  %v261 = vunpack.c.l.b16 %v85
  %v262 = vunpack.c.l.b16 %v86
  %v263 = vunpack.c.l.b16 %v87
  %v264 = vunpack.c.l.b16 %v88
  %v265 = vunpack.c.l.b16 %v89
  %v266 = vunpack.c.l.b16 %v90
  %v267 = vunpack.c.l.b16 %v91
  %v268 = vunpack.c.l.b16 %v92
  %v269 = vunpack.c.l.b16 %v93
  %v270 = vpack.c.b16 %v195, %v194
  %v271 = vpack.c.b16 %v197, %v196
  %v272 = vpack.c.b16 %v199, %v198
  %v273 = vpack.c.b16 %v201, %v200
  %v274 = vpack.c.b16 %v203, %v202
  %v275 = vpack.c.b16 %v205, %v204
  %v276 = vpack.c.b16 %v207, %v206
  %v277 = vpack.c.b16 %v209, %v208
  %v278 = vpack.c.b16 %v211, %v210
  %v279 = vpack.c.b16 %v213, %v212
  %v280 = vpack.c.b16 %v215, %v214
  %v281 = vpack.c.b16 %v217, %v216
  %v282 = vpack.c.b16 %v219, %v218
  %v283 = vpack.c.b16 %v221, %v220
  %v284 = vpack.c.b16 %v223, %v222
  %v285 = vpack.c.b16 %v225, %v224
  %v286 = vpack.c.b16 %v227, %v226
  %v287 = vpack.c.b16 %v229, %v228
  %v288 = vpack.c.b16 %v231, %v230
  %v289 = vpack.c.b16 %v233, %v232
  %v290 = vpack.c.b16 %v235, %v234
  %v291 = vpack.c.b16 %v237, %v236
  %v292 = vpack.c.b16 %v239, %v238
  %v293 = vpack.c.b16 %v241, %v240
  %v294 = vpack.c.b16 %v243, %v242
  %v295 = vpack.c.b16 %v245, %v244
  %v296 = vpack.c.b16 %v247, %v246
  %v297 = vpack.c.b16 %v249, %v248
  %v298 = vpack.c.b16 %v251, %v250
  %v299 = vpack.c.b16 %v253, %v252
  %v300 = vpack.c.b16 %v255, %v254
  %v301 = vpack.c.b16 %v257, %v256
  %v302 = vpack.c.b16 %v259, %v258
  %v303 = vpack.c.b16 %v261, %v260
  %v304 = vpack.c.b16 %v263, %v262
  %v305 = vpack.c.b16 %v265, %v264
  %v306 = vpack.c.b16 %v267, %v266
  %v307 = vpack.c.b16 %v269, %v268
  %vm346 = vcmask 785408
  %v348 = vsel %vm346, %v113, 0
  %350 = vmatprep.subr.bf16.mxu0 0
  %351 = vmatpush1.bf16.msra.mxu0 %v270
  %352 = vmatprep.subr.bf16.mxu0 0
  %353 = vmatpush1.bf16.msra.mxu0 %v271
  %354 = vmatprep.subr.bf16.mxu0 0
  %355 = vmatpush1.bf16.msra.mxu0 %v272
  %356 = vmatprep.subr.bf16.mxu0 0
  %357 = vmatpush1.bf16.msra.mxu0 %v273
  %358 = vmatprep.subr.bf16.mxu0 0
  %359 = vmatpush1.bf16.msra.mxu0 %v274
  %360 = vmatprep.subr.bf16.mxu0 0
  %361 = vmatpush1.bf16.msra.mxu0 %v275
  %362 = vmatprep.subr.bf16.mxu0 0
  %363 = vmatpush1.bf16.msra.mxu0 %v276
  %364 = vmatprep.subr.bf16.mxu0 0
  %365 = vmatpush1.bf16.msra.mxu0 %v277
  %366 = vmatprep.subr.bf16.mxu0 0
  %367 = vmatpush1.bf16.msra.mxu0 %v278
  %368 = vmatprep.subr.bf16.mxu0 0
  %369 = vmatpush1.bf16.msra.mxu0 %v279
  %370 = vmatprep.subr.bf16.mxu0 0
  %371 = vmatpush1.bf16.msra.mxu0 %v280
  %372 = vmatprep.subr.bf16.mxu0 0
  %373 = vmatpush1.bf16.msra.mxu0 %v281
  %374 = vmatprep.subr.bf16.mxu0 0
  %375 = vmatpush1.bf16.msra.mxu0 %v282
  %376 = vmatprep.subr.bf16.mxu0 0
  %377 = vmatpush1.bf16.msra.mxu0 %v283
  %378 = vmatprep.subr.bf16.mxu0 0
  %379 = vmatpush1.bf16.msra.mxu0 %v284
  %380 = vmatprep.subr.bf16.mxu0 0
  %381 = vmatpush1.bf16.msra.mxu0 %v285
  %382 = vmatprep.mubr.bf16.mxu0 %v110
  %383 = vmatmul.mubr.bf16.gmra.mrb[0].mxu0 %v109
  %v384 = vpop.f32.mrb[0].mxu0
  %v385 = vadd.f32 %v99, %v384
  %v386 = vpop.f32.mrb[0].mxu0
  %v387 = vpop.f32.mrb[0].mxu0
  %v388 = vpop.f32.mrb[0].mxu0
  %389 = vdwg.mxu0
  %390 = vmatprep.subr.bf16.mxu0 0
  %391 = vmatpush1.bf16.msra.mxu0 %v286
  %392 = vmatprep.subr.bf16.mxu0 0
  %393 = vmatpush1.bf16.msra.mxu0 %v287
  %394 = vmatprep.subr.bf16.mxu0 0
  %395 = vmatpush1.bf16.msra.mxu0 %v288
  %396 = vmatprep.subr.bf16.mxu0 0
  %397 = vmatpush1.bf16.msra.mxu0 %v289
  %398 = vmatprep.subr.bf16.mxu0 0
  %399 = vmatpush1.bf16.msra.mxu0 %v290
  %400 = vmatprep.subr.bf16.mxu0 0
  %401 = vmatpush1.bf16.msra.mxu0 %v291
  %402 = vmatprep.subr.bf16.mxu0 0
  %403 = vmatpush1.bf16.msra.mxu0 %v292
  %404 = vmatprep.subr.bf16.mxu0 0
  %405 = vmatpush1.bf16.msra.mxu0 %v293
  %406 = vmatprep.subr.bf16.mxu0 0
  %407 = vmatpush1.bf16.msra.mxu0 %v294
  %408 = vmatprep.subr.bf16.mxu0 0
  %409 = vmatpush1.bf16.msra.mxu0 %v295
  %410 = vmatprep.subr.bf16.mxu0 0
  %411 = vmatpush1.bf16.msra.mxu0 %v296
  %412 = vmatprep.subr.bf16.mxu0 0
  %413 = vmatpush1.bf16.msra.mxu0 %v297
  %414 = vmatprep.subr.bf16.mxu0 0
  %415 = vmatpush1.bf16.msra.mxu0 %v298
  %416 = vmatprep.subr.bf16.mxu0 0
  %417 = vmatpush1.bf16.msra.mxu0 %v299
  %418 = vmatprep.subr.bf16.mxu0 0
  %419 = vmatpush1.bf16.msra.mxu0 %v300
  %420 = vmatprep.subr.bf16.mxu0 0
  %421 = vmatpush1.bf16.msra.mxu0 %v301
  %422 = vmatprep.mubr.bf16.mxu0 %v112
  %423 = vmatmul.mubr.bf16.gmra.mrb[0].mxu0 %v111
  %v424 = vpop.f32.mrb[0].mxu0
  %v425 = vadd.f32 %v385, %v424
  %v426 = vpop.f32.mrb[0].mxu0
  %v427 = vpop.f32.mrb[0].mxu0
  %v428 = vpop.f32.mrb[0].mxu0
  %429 = vdwg.mxu0
  %430 = vmatprep.subr.bf16.mxu0 0
  %431 = vmatpush1.bf16.msra.mxu0 %v302
  %432 = vmatprep.subr.bf16.mxu0 0
  %433 = vmatpush1.bf16.msra.mxu0 %v303
  %434 = vmatprep.subr.bf16.mxu0 0
  %435 = vmatpush1.bf16.msra.mxu0 %v304
  %436 = vmatprep.subr.bf16.mxu0 0
  %437 = vmatpush1.bf16.msra.mxu0 %v305
  %438 = vmatprep.subr.bf16.mxu0 0
  %439 = vmatpush1.bf16.msra.mxu0 %v306
  %440 = vmatprep.subr.bf16.mxu0 0
  %441 = vmatpush1.bf16.msra.mxu0 %v307
  %442 = vmatprep.subr.bf16.mxu0 0
  %443 = vmatpush1.bf16.msra.mxu0 0
  %444 = vmatprep.subr.bf16.mxu0 0
  %445 = vmatpush1.bf16.msra.mxu0 0
  %446 = vmatprep.subr.bf16.mxu0 0
  %447 = vmatpush1.bf16.msra.mxu0 0
  %448 = vmatprep.subr.bf16.mxu0 0
  %449 = vmatpush1.bf16.msra.mxu0 0
  %450 = vmatprep.subr.bf16.mxu0 0
  %451 = vmatpush1.bf16.msra.mxu0 0
  %452 = vmatprep.subr.bf16.mxu0 0
  %453 = vmatpush1.bf16.msra.mxu0 0
  %454 = vmatprep.subr.bf16.mxu0 0
  %455 = vmatpush1.bf16.msra.mxu0 0
  %456 = vmatprep.subr.bf16.mxu0 0
  %457 = vmatpush1.bf16.msra.mxu0 0
  %458 = vmatprep.subr.bf16.mxu0 0
  %459 = vmatpush1.bf16.msra.mxu0 0
  %460 = vmatprep.subr.bf16.mxu0 0
  %461 = vmatpush1.bf16.msra.mxu0 0
  %462 = vmatprep.mubr.bf16.mxu0 0
  %463 = vmatmul.mubr.bf16.gmra.mrb[0].mxu0 %v348
  %v464 = vpop.f32.mrb[0].mxu0
  %v465 = vadd.f32 %v425, %v464
  %v466 = vpop.f32.mrb[0].mxu0
  %v467 = vpop.f32.mrb[0].mxu0
  %v468 = vpop.f32.mrb[0].mxu0
  %469 = vdwg.mxu0
  %vm470 = vcmp.gt.f32.partialorder %v465, 0.0
  %v471 = vmul.f32 %v465, 0.2
  %v472 = vsel %vm470, %v465, %v471
  %v473 = vpack.c.bf16 %v472, %v472
  %vm474 = vcmask 519168
  %475 = vst.msk [vmem:[%s3] sm:$0xf] %vm474, %v473
  // Predicated region
  $region14: #{object_encoder_v4_forward.20} parent=0 // pred_check
    _
  $region15: #{object_encoder_v4_forward.20} parent=0 // pred_check_branch
    %477 = sbr.rel (0) target = $region17
  $region16: #{object_encoder_v4_forward.20} parent=0 // pred_region
    _
  $region17: #{object_encoder_v4_forward.20} parent=0 // pred_fallthru
    _
  // Predicated region
  $region18: #{object_encoder_v4_forward.20} parent=0 // pred_check
    _
  $region19: #{object_encoder_v4_forward.20} parent=0 // pred_check_branch
    %479 = sbr.rel (0) target = $region21
  $region20: #{object_encoder_v4_forward.20} parent=0 // pred_region
    _
  $region21: #{object_encoder_v4_forward.20} parent=0 // pred_fallthru
    _

// kernel: object_encoder_v4_forward.21
$region0: #{object_encoder_v4_forward.21}
  #allocation0 [shape = 'u32[]', space=smem, size = 0x4, offset = 0x4, fixed_abs, tag = 'smem constant byte address 0x4 - core index']
  #allocation1 [shape = 'u32[144,128]{1,0:T(1,128)}', space=vmem, size = 0x12000, scoped, tag = 'internal scratch']
  %s0 = inlined_call_operand.vmem [shape: bf16[8,576], index: 0, kind: input, shape index: {}]
  %s1 = inlined_call_operand.vmem [shape: bf16[576,64], index: 1, kind: input, shape index: {}]
  %s2 = inlined_call_operand.vmem [shape: f32[1,64], index: 2, kind: input, shape index: {}]
  %s3 = inlined_call_operand.vmem [shape: bf16[8,64], index: 3, kind: output, shape index: {}]
  %s4 = sld [smem:[#allocation0]]
  $region22: #{object_encoder_v4_forward.21} parent=0
    _
  %s6 = ssub.s32 1, %s4
  %s7 = scalar_select 0, %s6, %s4
  // Predicated region
  $region2: #{object_encoder_v4_forward.21} parent=0 // pred_check
    _
  $region3: #{object_encoder_v4_forward.21} parent=0 // pred_check_branch
    %9 = sbr.rel (0) target = $region5
  $region4: #{object_encoder_v4_forward.21} parent=0 // pred_region
    _
  $region5: #{object_encoder_v4_forward.21} parent=0 // pred_fallthru
    _
  // Predicated region
  $region6: #{object_encoder_v4_forward.21} parent=0 // pred_check
    _
  $region7: #{object_encoder_v4_forward.21} parent=0 // pred_check_branch
    %11 = sbr.rel (0) target = $region9
  $region8: #{object_encoder_v4_forward.21} parent=0 // pred_region
    _
  $region9: #{object_encoder_v4_forward.21} parent=0 // pred_fallthru
    _
  // Predicated region
  $region10: #{object_encoder_v4_forward.21} parent=0 // pred_check
    _
  $region11: #{object_encoder_v4_forward.21} parent=0 // pred_check_branch
    %13 = sbr.rel (0) target = $region13
  $region12: #{object_encoder_v4_forward.21} parent=0 // pred_region
    _
  $region13: #{object_encoder_v4_forward.21} parent=0 // pred_fallthru
    _
  %v15 = vld [vmem:[%s0] sm:$0xff]
  %v16 = vld [vmem:[%s0 + $0x8] sm:$0xff]
  %v17 = vld [vmem:[%s0 + $0x10] sm:$0xf]
  %v18 = vld [vmem:[%s1] sm:$0xf]
  %v19 = vld [vmem:[%s1 + $0x4] sm:$0xf]
  %v20 = vld [vmem:[%s1 + $0x8] sm:$0xf]
  %v21 = vld [vmem:[%s1 + $0xc] sm:$0xf]
  %v22 = vld [vmem:[%s1 + $0x10] sm:$0xf]
  %v23 = vld [vmem:[%s1 + $0x14] sm:$0xf]
  %v24 = vld [vmem:[%s1 + $0x18] sm:$0xf]
  %v25 = vld [vmem:[%s1 + $0x1c] sm:$0xf]
  %v26 = vld [vmem:[%s1 + $0x20] sm:$0xf]
  %v27 = vld [vmem:[%s1 + $0x24] sm:$0xf]
  %v28 = vld [vmem:[%s1 + $0x28] sm:$0xf]
  %v29 = vld [vmem:[%s1 + $0x2c] sm:$0xf]
  %v30 = vld [vmem:[%s1 + $0x30] sm:$0xf]
  %v31 = vld [vmem:[%s1 + $0x34] sm:$0xf]
  %v32 = vld [vmem:[%s1 + $0x38] sm:$0xf]
  %v33 = vld [vmem:[%s1 + $0x3c] sm:$0xf]
  %v34 = vld [vmem:[%s1 + $0x40] sm:$0xf]
  %v35 = vld [vmem:[%s1 + $0x44] sm:$0xf]
  %v36 = vld [vmem:[%s1 + $0x48] sm:$0xf]
  %v37 = vld [vmem:[%s1 + $0x4c] sm:$0xf]
  %v38 = vld [vmem:[%s1 + $0x50] sm:$0xf]
  %v39 = vld [vmem:[%s1 + $0x54] sm:$0xf]
  %v40 = vld [vmem:[%s1 + $0x58] sm:$0xf]
  %v41 = vld [vmem:[%s1 + $0x5c] sm:$0xf]
  %v42 = vld [vmem:[%s1 + $0x60] sm:$0xf]
  %v43 = vld [vmem:[%s1 + $0x64] sm:$0xf]
  %v44 = vld [vmem:[%s1 + $0x68] sm:$0xf]
  %v45 = vld [vmem:[%s1 + $0x6c] sm:$0xf]
  %v46 = vld [vmem:[%s1 + $0x70] sm:$0xf]
  %v47 = vld [vmem:[%s1 + $0x74] sm:$0xf]
  %v48 = vld [vmem:[%s1 + $0x78] sm:$0xf]
  %v49 = vld [vmem:[%s1 + $0x7c] sm:$0xf]
  %v50 = vld [vmem:[%s1 + $0x80] sm:$0xf]
  %v51 = vld [vmem:[%s1 + $0x84] sm:$0xf]
  %v52 = vld [vmem:[%s1 + $0x88] sm:$0xf]
  %v53 = vld [vmem:[%s1 + $0x8c] sm:$0xf]
  %v54 = vld [vmem:[%s1 + $0x90] sm:$0xf]
  %v55 = vld [vmem:[%s1 + $0x94] sm:$0xf]
  %v56 = vld [vmem:[%s1 + $0x98] sm:$0xf]
  %v57 = vld [vmem:[%s1 + $0x9c] sm:$0xf]
  %v58 = vld [vmem:[%s1 + $0xa0] sm:$0xf]
  %v59 = vld [vmem:[%s1 + $0xa4] sm:$0xf]
  %v60 = vld [vmem:[%s1 + $0xa8] sm:$0xf]
  %v61 = vld [vmem:[%s1 + $0xac] sm:$0xf]
  %v62 = vld [vmem:[%s1 + $0xb0] sm:$0xf]
  %v63 = vld [vmem:[%s1 + $0xb4] sm:$0xf]
  %v64 = vld [vmem:[%s1 + $0xb8] sm:$0xf]
  %v65 = vld [vmem:[%s1 + $0xbc] sm:$0xf]
  %v66 = vld [vmem:[%s1 + $0xc0] sm:$0xf]
  %v67 = vld [vmem:[%s1 + $0xc4] sm:$0xf]
  %v68 = vld [vmem:[%s1 + $0xc8] sm:$0xf]
  %v69 = vld [vmem:[%s1 + $0xcc] sm:$0xf]
  %v70 = vld [vmem:[%s1 + $0xd0] sm:$0xf]
  %v71 = vld [vmem:[%s1 + $0xd4] sm:$0xf]
  %v72 = vld [vmem:[%s1 + $0xd8] sm:$0xf]
  %v73 = vld [vmem:[%s1 + $0xdc] sm:$0xf]
  %v74 = vld [vmem:[%s1 + $0xe0] sm:$0xf]
  %v75 = vld [vmem:[%s1 + $0xe4] sm:$0xf]
  %v76 = vld [vmem:[%s1 + $0xe8] sm:$0xf]
  %v77 = vld [vmem:[%s1 + $0xec] sm:$0xf]
  %v78 = vld [vmem:[%s1 + $0xf0] sm:$0xf]
  %v79 = vld [vmem:[%s1 + $0xf4] sm:$0xf]
  %v80 = vld [vmem:[%s1 + $0xf8] sm:$0xf]
  %v81 = vld [vmem:[%s1 + $0xfc] sm:$0xf]
  %v82 = vld [vmem:[%s1 + $0x100] sm:$0xf]
  %v83 = vld [vmem:[%s1 + $0x104] sm:$0xf]
  %v84 = vld [vmem:[%s1 + $0x108] sm:$0xf]
  %v85 = vld [vmem:[%s1 + $0x10c] sm:$0xf]
  %v86 = vld [vmem:[%s1 + $0x110] sm:$0xf]
  %v87 = vld [vmem:[%s1 + $0x114] sm:$0xf]
  %v88 = vld [vmem:[%s1 + $0x118] sm:$0xf]
  %v89 = vld [vmem:[%s1 + $0x11c] sm:$0xf]
  %v90 = vld [vmem:[%s2] sm:$0x1]
  %v92 = vlaneseq
  %v93 = vshrl.u32 %v92, 7
  %v94 = vsub.s32 0, %v93
  %v95 = vrot.slane %v90, %v94
  %v100 = vunpack.c.l.b16 %v15
  %v101 = vunpack.c.h.b16 %v15
  %v102 = vunpack.c.l.b16 %v16
  %v103 = vunpack.c.h.b16 %v16
  %v104 = vunpack.c.l.b16 %v17
  %v105 = vpack.c.b16 %v100, %v100
  %v106 = vpack.c.b16 %v101, %v101
  %v107 = vpack.c.b16 %v102, %v102
  %v108 = vpack.c.b16 %v103, %v103
  %v109 = vpack.c.b16 %v104, %v104
  %v186 = vunpack.c.l.b16 %v18
  %v187 = vunpack.c.l.b16 %v19
  %v188 = vunpack.c.l.b16 %v20
  %v189 = vunpack.c.l.b16 %v21
  %v190 = vunpack.c.l.b16 %v22
  %v191 = vunpack.c.l.b16 %v23
  %v192 = vunpack.c.l.b16 %v24
  %v193 = vunpack.c.l.b16 %v25
  %v194 = vunpack.c.l.b16 %v26
  %v195 = vunpack.c.l.b16 %v27
  %v196 = vunpack.c.l.b16 %v28
  %v197 = vunpack.c.l.b16 %v29
  %v198 = vunpack.c.l.b16 %v30
  %v199 = vunpack.c.l.b16 %v31
  %v200 = vunpack.c.l.b16 %v32
  %v201 = vunpack.c.l.b16 %v33
  %v202 = vunpack.c.l.b16 %v34
  %v203 = vunpack.c.l.b16 %v35
  %v204 = vunpack.c.l.b16 %v36
  %v205 = vunpack.c.l.b16 %v37
  %v206 = vunpack.c.l.b16 %v38
  %v207 = vunpack.c.l.b16 %v39
  %v208 = vunpack.c.l.b16 %v40
  %v209 = vunpack.c.l.b16 %v41
  %v210 = vunpack.c.l.b16 %v42
  %v211 = vunpack.c.l.b16 %v43
  %v212 = vunpack.c.l.b16 %v44
  %v213 = vunpack.c.l.b16 %v45
  %v214 = vunpack.c.l.b16 %v46
  %v215 = vunpack.c.l.b16 %v47
  %v216 = vunpack.c.l.b16 %v48
  %v217 = vunpack.c.l.b16 %v49
  %v218 = vunpack.c.l.b16 %v50
  %v219 = vunpack.c.l.b16 %v51
  %v220 = vunpack.c.l.b16 %v52
  %v221 = vunpack.c.l.b16 %v53
  %v222 = vunpack.c.l.b16 %v54
  %v223 = vunpack.c.l.b16 %v55
  %v224 = vunpack.c.l.b16 %v56
  %v225 = vunpack.c.l.b16 %v57
  %v226 = vunpack.c.l.b16 %v58
  %v227 = vunpack.c.l.b16 %v59
  %v228 = vunpack.c.l.b16 %v60
  %v229 = vunpack.c.l.b16 %v61
  %v230 = vunpack.c.l.b16 %v62
  %v231 = vunpack.c.l.b16 %v63
  %v232 = vunpack.c.l.b16 %v64
  %v233 = vunpack.c.l.b16 %v65
  %v234 = vunpack.c.l.b16 %v66
  %v235 = vunpack.c.l.b16 %v67
  %v236 = vunpack.c.l.b16 %v68
  %v237 = vunpack.c.l.b16 %v69
  %v238 = vunpack.c.l.b16 %v70
  %v239 = vunpack.c.l.b16 %v71
  %v240 = vunpack.c.l.b16 %v72
  %v241 = vunpack.c.l.b16 %v73
  %v242 = vunpack.c.l.b16 %v74
  %v243 = vunpack.c.l.b16 %v75
  %v244 = vunpack.c.l.b16 %v76
  %v245 = vunpack.c.l.b16 %v77
  %v246 = vunpack.c.l.b16 %v78
  %v247 = vunpack.c.l.b16 %v79
  %v248 = vunpack.c.l.b16 %v80
  %v249 = vunpack.c.l.b16 %v81
  %v250 = vunpack.c.l.b16 %v82
  %v251 = vunpack.c.l.b16 %v83
  %v252 = vunpack.c.l.b16 %v84
  %v253 = vunpack.c.l.b16 %v85
  %v254 = vunpack.c.l.b16 %v86
  %v255 = vunpack.c.l.b16 %v87
  %v256 = vunpack.c.l.b16 %v88
  %v257 = vunpack.c.l.b16 %v89
  %v258 = vpack.c.b16 %v187, %v186
  %v259 = vpack.c.b16 %v189, %v188
  %v260 = vpack.c.b16 %v191, %v190
  %v261 = vpack.c.b16 %v193, %v192
  %v262 = vpack.c.b16 %v195, %v194
  %v263 = vpack.c.b16 %v197, %v196
  %v264 = vpack.c.b16 %v199, %v198
  %v265 = vpack.c.b16 %v201, %v200
  %v266 = vpack.c.b16 %v203, %v202
  %v267 = vpack.c.b16 %v205, %v204
  %v268 = vpack.c.b16 %v207, %v206
  %v269 = vpack.c.b16 %v209, %v208
  %v270 = vpack.c.b16 %v211, %v210
  %v271 = vpack.c.b16 %v213, %v212
  %v272 = vpack.c.b16 %v215, %v214
  %v273 = vpack.c.b16 %v217, %v216
  %v274 = vpack.c.b16 %v219, %v218
  %v275 = vpack.c.b16 %v221, %v220
  %v276 = vpack.c.b16 %v223, %v222
  %v277 = vpack.c.b16 %v225, %v224
  %v278 = vpack.c.b16 %v227, %v226
  %v279 = vpack.c.b16 %v229, %v228
  %v280 = vpack.c.b16 %v231, %v230
  %v281 = vpack.c.b16 %v233, %v232
  %v282 = vpack.c.b16 %v235, %v234
  %v283 = vpack.c.b16 %v237, %v236
  %v284 = vpack.c.b16 %v239, %v238
  %v285 = vpack.c.b16 %v241, %v240
  %v286 = vpack.c.b16 %v243, %v242
  %v287 = vpack.c.b16 %v245, %v244
  %v288 = vpack.c.b16 %v247, %v246
  %v289 = vpack.c.b16 %v249, %v248
  %v290 = vpack.c.b16 %v251, %v250
  %v291 = vpack.c.b16 %v253, %v252
  %v292 = vpack.c.b16 %v255, %v254
  %v293 = vpack.c.b16 %v257, %v256
  %vm330 = vcmask 523264
  %v332 = vsel %vm330, %v109, 0
  %334 = vmatprep.subr.bf16.mxu0 0
  %335 = vmatpush1.bf16.msra.mxu0 %v258
  %336 = vmatprep.subr.bf16.mxu0 0
  %337 = vmatpush1.bf16.msra.mxu0 %v259
  %338 = vmatprep.subr.bf16.mxu0 0
  %339 = vmatpush1.bf16.msra.mxu0 %v260
  %340 = vmatprep.subr.bf16.mxu0 0
  %341 = vmatpush1.bf16.msra.mxu0 %v261
  %342 = vmatprep.subr.bf16.mxu0 0
  %343 = vmatpush1.bf16.msra.mxu0 %v262
  %344 = vmatprep.subr.bf16.mxu0 0
  %345 = vmatpush1.bf16.msra.mxu0 %v263
  %346 = vmatprep.subr.bf16.mxu0 0
  %347 = vmatpush1.bf16.msra.mxu0 %v264
  %348 = vmatprep.subr.bf16.mxu0 0
  %349 = vmatpush1.bf16.msra.mxu0 %v265
  %350 = vmatprep.subr.bf16.mxu0 0
  %351 = vmatpush1.bf16.msra.mxu0 %v266
  %352 = vmatprep.subr.bf16.mxu0 0
  %353 = vmatpush1.bf16.msra.mxu0 %v267
  %354 = vmatprep.subr.bf16.mxu0 0
  %355 = vmatpush1.bf16.msra.mxu0 %v268
  %356 = vmatprep.subr.bf16.mxu0 0
  %357 = vmatpush1.bf16.msra.mxu0 %v269
  %358 = vmatprep.subr.bf16.mxu0 0
  %359 = vmatpush1.bf16.msra.mxu0 %v270
  %360 = vmatprep.subr.bf16.mxu0 0
  %361 = vmatpush1.bf16.msra.mxu0 %v271
  %362 = vmatprep.subr.bf16.mxu0 0
  %363 = vmatpush1.bf16.msra.mxu0 %v272
  %364 = vmatprep.subr.bf16.mxu0 0
  %365 = vmatpush1.bf16.msra.mxu0 %v273
  %366 = vmatprep.mubr.bf16.mxu0 %v106
  %367 = vmatmul.mubr.bf16.gmra.mrb[0].mxu0 %v105
  %v368 = vpop.f32.mrb[0].mxu0
  %v369 = vadd.f32 %v95, %v368
  %v370 = vpop.f32.mrb[0].mxu0
  %v371 = vpop.f32.mrb[0].mxu0
  %v372 = vpop.f32.mrb[0].mxu0
  %373 = vdwg.mxu0
  %374 = vmatprep.subr.bf16.mxu0 0
  %375 = vmatpush1.bf16.msra.mxu0 %v274
  %376 = vmatprep.subr.bf16.mxu0 0
  %377 = vmatpush1.bf16.msra.mxu0 %v275
  %378 = vmatprep.subr.bf16.mxu0 0
  %379 = vmatpush1.bf16.msra.mxu0 %v276
  %380 = vmatprep.subr.bf16.mxu0 0
  %381 = vmatpush1.bf16.msra.mxu0 %v277
  %382 = vmatprep.subr.bf16.mxu0 0
  %383 = vmatpush1.bf16.msra.mxu0 %v278
  %384 = vmatprep.subr.bf16.mxu0 0
  %385 = vmatpush1.bf16.msra.mxu0 %v279
  %386 = vmatprep.subr.bf16.mxu0 0
  %387 = vmatpush1.bf16.msra.mxu0 %v280
  %388 = vmatprep.subr.bf16.mxu0 0
  %389 = vmatpush1.bf16.msra.mxu0 %v281
  %390 = vmatprep.subr.bf16.mxu0 0
  %391 = vmatpush1.bf16.msra.mxu0 %v282
  %392 = vmatprep.subr.bf16.mxu0 0
  %393 = vmatpush1.bf16.msra.mxu0 %v283
  %394 = vmatprep.subr.bf16.mxu0 0
  %395 = vmatpush1.bf16.msra.mxu0 %v284
  %396 = vmatprep.subr.bf16.mxu0 0
  %397 = vmatpush1.bf16.msra.mxu0 %v285
  %398 = vmatprep.subr.bf16.mxu0 0
  %399 = vmatpush1.bf16.msra.mxu0 %v286
  %400 = vmatprep.subr.bf16.mxu0 0
  %401 = vmatpush1.bf16.msra.mxu0 %v287
  %402 = vmatprep.subr.bf16.mxu0 0
  %403 = vmatpush1.bf16.msra.mxu0 %v288
  %404 = vmatprep.subr.bf16.mxu0 0
  %405 = vmatpush1.bf16.msra.mxu0 %v289
  %406 = vmatprep.mubr.bf16.mxu0 %v108
  %407 = vmatmul.mubr.bf16.gmra.mrb[0].mxu0 %v107
  %v408 = vpop.f32.mrb[0].mxu0
  %v409 = vadd.f32 %v369, %v408
  %v410 = vpop.f32.mrb[0].mxu0
  %v411 = vpop.f32.mrb[0].mxu0
  %v412 = vpop.f32.mrb[0].mxu0
  %413 = vdwg.mxu0
  %414 = vmatprep.subr.bf16.mxu0 0
  %415 = vmatpush1.bf16.msra.mxu0 %v290
  %416 = vmatprep.subr.bf16.mxu0 0
  %417 = vmatpush1.bf16.msra.mxu0 %v291
  %418 = vmatprep.subr.bf16.mxu0 0
  %419 = vmatpush1.bf16.msra.mxu0 %v292
  %420 = vmatprep.subr.bf16.mxu0 0
  %421 = vmatpush1.bf16.msra.mxu0 %v293
  %422 = vmatprep.subr.bf16.mxu0 0
  %423 = vmatpush1.bf16.msra.mxu0 0
  %424 = vmatprep.subr.bf16.mxu0 0
  %425 = vmatpush1.bf16.msra.mxu0 0
  %426 = vmatprep.subr.bf16.mxu0 0
  %427 = vmatpush1.bf16.msra.mxu0 0
  %428 = vmatprep.subr.bf16.mxu0 0
  %429 = vmatpush1.bf16.msra.mxu0 0
  %430 = vmatprep.subr.bf16.mxu0 0
  %431 = vmatpush1.bf16.msra.mxu0 0
  %432 = vmatprep.subr.bf16.mxu0 0
  %433 = vmatpush1.bf16.msra.mxu0 0
  %434 = vmatprep.subr.bf16.mxu0 0
  %435 = vmatpush1.bf16.msra.mxu0 0
  %436 = vmatprep.subr.bf16.mxu0 0
  %437 = vmatpush1.bf16.msra.mxu0 0
  %438 = vmatprep.subr.bf16.mxu0 0
  %439 = vmatpush1.bf16.msra.mxu0 0
  %440 = vmatprep.subr.bf16.mxu0 0
  %441 = vmatpush1.bf16.msra.mxu0 0
  %442 = vmatprep.subr.bf16.mxu0 0
  %443 = vmatpush1.bf16.msra.mxu0 0
  %444 = vmatprep.subr.bf16.mxu0 0
  %445 = vmatpush1.bf16.msra.mxu0 0
  %446 = vmatprep.mubr.bf16.mxu0 0
  %447 = vmatmul.mubr.bf16.gmra.mrb[0].mxu0 %v332
  %v448 = vpop.f32.mrb[0].mxu0
  %v449 = vadd.f32 %v409, %v448
  %v450 = vpop.f32.mrb[0].mxu0
  %v451 = vpop.f32.mrb[0].mxu0
  %v452 = vpop.f32.mrb[0].mxu0
  %453 = vdwg.mxu0
  %vm454 = vcmp.gt.f32.partialorder %v449, 0.0
  %v455 = vmul.f32 %v449, 0.2
  %v456 = vsel %vm454, %v449, %v455
  %v457 = vpack.c.bf16 %v456, %v456
  %vm458 = vcmask 519168
  %459 = vst.msk [vmem:[%s3] sm:$0xf] %vm458, %v457
  // Predicated region
  $region14: #{object_encoder_v4_forward.21} parent=0 // pred_check
    _
  $region15: #{object_encoder_v4_forward.21} parent=0 // pred_check_branch
    %461 = sbr.rel (0) target = $region17
  $region16: #{object_encoder_v4_forward.21} parent=0 // pred_region
    _
  $region17: #{object_encoder_v4_forward.21} parent=0 // pred_fallthru
    _
  // Predicated region
  $region18: #{object_encoder_v4_forward.21} parent=0 // pred_check
    _
  $region19: #{object_encoder_v4_forward.21} parent=0 // pred_check_branch
    %463 = sbr.rel (0) target = $region21
  $region20: #{object_encoder_v4_forward.21} parent=0 // pred_region
    _
  $region21: #{object_encoder_v4_forward.21} parent=0 // pred_fallthru
    _

// kernel: object_encoder_v4_forward.23
$region0: #{object_encoder_v4_forward.23}
  #allocation0 [shape = 'u32[]', space=smem, size = 0x4, offset = 0x4, fixed_abs, tag = 'smem constant byte address 0x4 - core index']
  #allocation1 [shape = 'u32[144,128]{1,0:T(1,128)}', space=vmem, size = 0x12000, scoped, tag = 'internal scratch']
  %s0 = inlined_call_operand.vmem [shape: bf16[2,64], index: 0, kind: input, shape index: {}]
  %s1 = inlined_call_operand.vmem [shape: bf16[64,12], index: 1, kind: input, shape index: {}]
  %s2 = inlined_call_operand.vmem [shape: f32[1,12], index: 2, kind: input, shape index: {}]
  %s3 = inlined_call_operand.vmem [shape: f32[2,12], index: 3, kind: output, shape index: {}]
  %s4 = sld [smem:[#allocation0]]
  $region22: #{object_encoder_v4_forward.23} parent=0
    _
  %s6 = ssub.s32 1, %s4
  %s7 = scalar_select 0, %s6, %s4
  // Predicated region
  $region2: #{object_encoder_v4_forward.23} parent=0 // pred_check
    _
  $region3: #{object_encoder_v4_forward.23} parent=0 // pred_check_branch
    %9 = sbr.rel (0) target = $region5
  $region4: #{object_encoder_v4_forward.23} parent=0 // pred_region
    _
  $region5: #{object_encoder_v4_forward.23} parent=0 // pred_fallthru
    _
  // Predicated region
  $region6: #{object_encoder_v4_forward.23} parent=0 // pred_check
    _
  $region7: #{object_encoder_v4_forward.23} parent=0 // pred_check_branch
    %11 = sbr.rel (0) target = $region9
  $region8: #{object_encoder_v4_forward.23} parent=0 // pred_region
    _
  $region9: #{object_encoder_v4_forward.23} parent=0 // pred_fallthru
    _
  // Predicated region
  $region10: #{object_encoder_v4_forward.23} parent=0 // pred_check
    _
  $region11: #{object_encoder_v4_forward.23} parent=0 // pred_check_branch
    %13 = sbr.rel (0) target = $region13
  $region12: #{object_encoder_v4_forward.23} parent=0 // pred_region
    _
  $region13: #{object_encoder_v4_forward.23} parent=0 // pred_fallthru
    _
  %v15 = vld [vmem:[%s0] sm:$0x1]
  %v16 = vld [vmem:[%s1] sm:$0xf]
  %v17 = vld [vmem:[%s1 + $0x4] sm:$0xf]
  %v18 = vld [vmem:[%s1 + $0x8] sm:$0xf]
  %v19 = vld [vmem:[%s1 + $0xc] sm:$0xf]
  %v20 = vld [vmem:[%s1 + $0x10] sm:$0xf]
  %v21 = vld [vmem:[%s1 + $0x14] sm:$0xf]
  %v22 = vld [vmem:[%s1 + $0x18] sm:$0xf]
  %v23 = vld [vmem:[%s1 + $0x1c] sm:$0xf]
  %v24 = vld [vmem:[%s2] sm:$0x1]
  %v26 = vlaneseq
  %v27 = vshrl.u32 %v26, 7
  %v28 = vsub.s32 0, %v27
  %v29 = vrot.slane %v24, %v28
  %v39 = vunpack.c.l.b16 %v16
  %v40 = vunpack.c.l.b16 %v17
  %v41 = vunpack.c.l.b16 %v18
  %v42 = vunpack.c.l.b16 %v19
  %v43 = vunpack.c.l.b16 %v20
  %v44 = vunpack.c.l.b16 %v21
  %v45 = vunpack.c.l.b16 %v22
  %v46 = vunpack.c.l.b16 %v23
  %v47 = vpack.c.b16 %v40, %v39
  %v48 = vpack.c.b16 %v42, %v41
  %v49 = vpack.c.b16 %v44, %v43
  %v50 = vpack.c.b16 %v46, %v45
  %vm55 = vcmask 523264
  %v57 = vsel %vm55, %v15, 0
  %59 = vmatprep.subr.bf16.mxu0 0
  %60 = vmatpush1.bf16.msra.mxu0 %v47
  %61 = vmatprep.subr.bf16.mxu0 0
  %62 = vmatpush1.bf16.msra.mxu0 %v48
  %63 = vmatprep.subr.bf16.mxu0 0
  %64 = vmatpush1.bf16.msra.mxu0 %v49
  %65 = vmatprep.subr.bf16.mxu0 0
  %66 = vmatpush1.bf16.msra.mxu0 %v50
  %67 = vmatprep.subr.bf16.mxu0 0
  %68 = vmatpush1.bf16.msra.mxu0 0
  %69 = vmatprep.subr.bf16.mxu0 0
  %70 = vmatpush1.bf16.msra.mxu0 0
  %71 = vmatprep.subr.bf16.mxu0 0
  %72 = vmatpush1.bf16.msra.mxu0 0
  %73 = vmatprep.subr.bf16.mxu0 0
  %74 = vmatpush1.bf16.msra.mxu0 0
  %75 = vmatprep.subr.bf16.mxu0 0
  %76 = vmatpush1.bf16.msra.mxu0 0
  %77 = vmatprep.subr.bf16.mxu0 0
  %78 = vmatpush1.bf16.msra.mxu0 0
  %79 = vmatprep.subr.bf16.mxu0 0
  %80 = vmatpush1.bf16.msra.mxu0 0
  %81 = vmatprep.subr.bf16.mxu0 0
  %82 = vmatpush1.bf16.msra.mxu0 0
  %83 = vmatprep.subr.bf16.mxu0 0
  %84 = vmatpush1.bf16.msra.mxu0 0
  %85 = vmatprep.subr.bf16.mxu0 0
  %86 = vmatpush1.bf16.msra.mxu0 0
  %87 = vmatprep.subr.bf16.mxu0 0
  %88 = vmatpush1.bf16.msra.mxu0 0
  %89 = vmatprep.subr.bf16.mxu0 0
  %90 = vmatpush1.bf16.msra.mxu0 0
  %91 = vmatprep.mubr.bf16.mxu0 0
  %92 = vmatmul.mubr.bf16.gmra.mrb[0].mxu0 %v57
  %v93 = vpop.f32.mrb[0].mxu0
  %v94 = vadd.f32 %v29, %v93
  %v95 = vpop.f32.mrb[0].mxu0
  %v96 = vpop.f32.mrb[0].mxu0
  %v97 = vpop.f32.mrb[0].mxu0
  %98 = vdwg.mxu0
  %vm99 = vcmask 91136
  %100 = vst.msk [vmem:[%s3] sm:$0x3] %vm99, %v94
  // Predicated region
  $region14: #{object_encoder_v4_forward.23} parent=0 // pred_check
    _
  $region15: #{object_encoder_v4_forward.23} parent=0 // pred_check_branch
    %102 = sbr.rel (0) target = $region17
  $region16: #{object_encoder_v4_forward.23} parent=0 // pred_region
    _
  $region17: #{object_encoder_v4_forward.23} parent=0 // pred_fallthru
    _
  // Predicated region
  $region18: #{object_encoder_v4_forward.23} parent=0 // pred_check
    _
  $region19: #{object_encoder_v4_forward.23} parent=0 // pred_check_branch
    %104 = sbr.rel (0) target = $region21
  $region20: #{object_encoder_v4_forward.23} parent=0 // pred_region
    _
  $region21: #{object_encoder_v4_forward.23} parent=0 // pred_fallthru
    _

</llo_original>
